<compile_context>
chip_gen: v7x
topology: tpu7x:2x2x1
jax: 0.10.0
libtpu: 0.0.40
codegen_flags: <defaults>
</compile_context>

<pallas_src>
import functools
import math

import jax
import jax.numpy as jnp
from jax.experimental import pallas as pl
from jax.experimental.pallas import tpu as pltpu

STABLE_SOFTMAX_2D = False   # cfg.MODEL.DYHEAD.FUSE_CONFIG.STABLE_SOFTMAX_2D
CLAMP_MIN = True            # cfg.MODEL.DYHEAD.FUSE_CONFIG.CLAMP_MIN_FOR_UNDERFLOW
CLAMP_MAX = True            # cfg.MODEL.DYHEAD.FUSE_CONFIG.CLAMP_MAX_FOR_OVERFLOW
LN_EPS = 1e-5
# finite "running max" / row-mask value; safe because aw is clamped to +/-5e4
# (and is finite even without the clamp), so exp(NEG_INF - m) underflows to 0.
NEG_INF = -1e30


def _round_up(x, m):
    return (x + m - 1) // m * m


def _layer_norm(x, g, b):
    mu = jnp.mean(x, axis=-1, keepdims=True)
    var = jnp.mean((x - mu) * (x - mu), axis=-1, keepdims=True)
    return (x - mu) * jax.lax.rsqrt(var + LN_EPS) * g + b


def _bi_attn_kernel(
    # blocked per-batch inputs
    v_ref, l_ref, mask_ref,
    # small params (f32, full-spec, negligible double-buffer cost)
    ln_v_g, ln_v_b, ln_l_g, ln_l_b,
    b_q, b_k, b_vv, b_vl, b_ov, b_ol,
    gamma_v_ref, gamma_l_ref,
    # big projection weights, left in HBM (memory_space=pl.ANY)
    w_q_hbm, w_k_hbm, w_vv_hbm, w_vl_hbm, w_ov_hbm, w_ol_hbm,
    # outputs
    out_v_ref, out_l_ref,
    # VMEM scratch (persists across the Tv grid axis)
    w_q, w_k, w_vv, w_vl, w_ov, w_ol,   # single-buffered weight residency (bf16, head-major)
    w_sem,                              # DMA semaphores for the weight fetch
    l_n_s,                              # (Tl, Ld)   f32  LayerNorm(l)
    k_s,                                # (H, Tl, hd) bf16 K projection
    vl_s,                               # (H, Tl, hd) bf16 values_l projection
    m_s,                                # (H, 1, Tl) f32  running max
    s_s,                                # (H, 1, Tl) f32  running sum
    acc_s,                              # (H, hd, Tl) f32 out_l accumulator (transposed)
    dv_acc,                             # (tv_tile, Vd) f32 delta_v accumulator
    dl_acc,                             # (Tl, Ld)   f32  delta_l accumulator
    *, num_heads, tv_valid,
):
    i = pl.program_id(1)
    n_tiles = pl.num_programs(1)
    H = num_heads
    tv_rows = v_ref.shape[1]

    # -------- once per batch element (first Tv tile) --------
    @pl.when(i == 0)
    def _prep():
        # Pull the projection matrices into VMEM once (overlapped DMAs, single copy;
        # repeated per batch element so it also works when B is megacore-sharded).
        hbm = (w_q_hbm, w_k_hbm, w_vv_hbm, w_vl_hbm, w_ov_hbm, w_ol_hbm)
        vmem = (w_q, w_k, w_vv, w_vl, w_ov, w_ol)
        for j in range(6):
            pltpu.make_async_copy(hbm[j], vmem[j], w_sem.at[j]).start()
        for j in range(6):
            pltpu.make_async_copy(hbm[j], vmem[j], w_sem.at[j]).wait()

        lx = l_ref[0].astype(jnp.float32)                        # (Tl, Ld)
        l_n = _layer_norm(lx, ln_l_g[...], ln_l_b[...])
        l_n_s[...] = l_n
        l_nb = l_n.astype(jnp.bfloat16)

        def proj_l(h, carry):
            k_h = jnp.dot(l_nb, w_k[h], preferred_element_type=jnp.float32) + b_k[h]
            vl_h = jnp.dot(l_nb, w_vl[h], preferred_element_type=jnp.float32) + b_vl[h]
            k_s[h] = k_h.astype(jnp.bfloat16)
            vl_s[h] = vl_h.astype(jnp.bfloat16)
            return carry
        jax.lax.fori_loop(0, H, proj_l, 0)

        m_s[...] = jnp.full_like(m_s, NEG_INF)
        s_s[...] = jnp.zeros_like(s_s)
        acc_s[...] = jnp.zeros_like(acc_s)

    # -------- per-Tv-tile work --------
    v = v_ref[0].astype(jnp.float32)                             # (tv, Vd)
    v_n = _layer_norm(v, ln_v_g[...], ln_v_b[...])
    v_nb = v_n.astype(jnp.bfloat16)

    mask = mask_ref[0].astype(jnp.float32)                       # (1, Tl)
    mask_add = jnp.where(mask == 0.0, -9.0e15, mask)             # torch masked_fill + add

    if tv_valid is not None:
        # Tv was padded: exclude padded rows from the l-side online softmax.
        rows = jax.lax.broadcasted_iota(jnp.int32, (tv_rows, 1), 0)
        row_valid = (i * tv_rows + rows) < tv_valid              # (tv, 1)
    else:
        row_valid = None

    dv_acc[...] = jnp.zeros_like(dv_acc)

    # TODO(synk): STABLE_SOFTMAX_2D=True (global max across all heads/batches) needs
    # an extra pass; only the False path is implemented.
    def head_body(h, carry):
        # per-head projections (scale pre-folded into w_q/b_q)
        q_h = (jnp.dot(v_nb, w_q[h], preferred_element_type=jnp.float32)
               + b_q[h]).astype(jnp.bfloat16)                    # (tv, hd)
        vv_h = (jnp.dot(v_nb, w_vv[h], preferred_element_type=jnp.float32)
                + b_vv[h]).astype(jnp.bfloat16)                  # (tv, hd)

        # logits (tv, Tl): contract on head_dim, no explicit transpose
        aw = jax.lax.dot_general(q_h, k_s[h], (((1,), (1,)), ((), ())),
                                 preferred_element_type=jnp.float32)
        if CLAMP_MIN:
            aw = jnp.maximum(aw, -50000.0)
        if CLAMP_MAX:
            aw = jnp.minimum(aw, 50000.0)

        # ---- v-side: masked softmax over Tl (row-independent -> tiles trivially) ----
        a_v = aw + mask_add
        a_v = a_v - jnp.max(a_v, axis=-1, keepdims=True)
        p_v = jnp.exp(a_v)                                       # TODO(synk): bf16 exp if EUP-bound (v6e/v7x)
        denom = jnp.sum(p_v, axis=-1, keepdims=True)             # (tv, 1)
        ov = jnp.dot(p_v.astype(jnp.bfloat16), vl_s[h],
                     preferred_element_type=jnp.float32)         # (tv, hd)
        ov = ov * pl.reciprocal(denom, approx=True)
        # fold the per-head output projection into the loop (no (tv, E) concat slab)
        dv_acc[...] += jnp.dot(ov.astype(jnp.bfloat16), w_ov[h],
                               preferred_element_type=jnp.float32)   # (tv, Vd)

        # ---- l-side: online softmax over Tv (columns of aw) ----
        # (reference's post-max clamps are numerical no-ops through exp in f32)
        aw_l = aw if row_valid is None else jnp.where(row_valid, aw, NEG_INF)
        col_max = jnp.max(aw_l, axis=0, keepdims=True)           # (1, Tl)
        m_old = m_s[h]
        m_new = jnp.maximum(m_old, col_max)
        alpha = jnp.exp(m_old - m_new)                           # (1, Tl)
        p_l = jnp.exp(aw_l - m_new)                              # (tv, Tl)
        s_s[h] = alpha * s_s[h] + jnp.sum(p_l, axis=0, keepdims=True)
        # upd[d, j] = sum_i vv[i, d] * p_l[i, j]   -> (hd, Tl), transposed layout
        upd = jax.lax.dot_general(vv_h, p_l.astype(jnp.bfloat16),
                                  (((0,), (0,)), ((), ())),
                                  preferred_element_type=jnp.float32)
        acc_s[h] = alpha * acc_s[h] + upd
        m_s[h] = m_new
        return carry

    jax.lax.fori_loop(0, H, head_body, 0)

    # ---- visual output for this Tv tile ----
    delta_v = dv_acc[...] + b_ov[...]
    out_v_ref[0] = (v_n + gamma_v_ref[...] * delta_v).astype(out_v_ref.dtype)

    # ---- finalize language output on the last Tv tile ----
    @pl.when(i == n_tiles - 1)
    def _finalize():
        dl_acc[...] = jnp.zeros_like(dl_acc)

        def fin_body(h, carry):
            inv_s = pl.reciprocal(s_s[h], approx=True)           # (1, Tl)
            acc_h = (acc_s[h] * inv_s).astype(jnp.bfloat16)      # (hd, Tl)
            # delta_l[j, d] += sum_e acc[e, j] * w_ol[h, e, d]
            dl_acc[...] += jax.lax.dot_general(
                acc_h, w_ol[h], (((0,), (0,)), ((), ())),
                preferred_element_type=jnp.float32)              # (Tl, Ld)
            return carry
        jax.lax.fori_loop(0, H, fin_body, 0)

        delta_l = dl_acc[...] + b_ol[...]
        out_l_ref[0] = (l_n_s[...] + gamma_l_ref[...] * delta_l).astype(out_l_ref.dtype)


def bi_attention_block(v, l, mask, params, *, num_heads,
                       tv_tile=512, vmem_limit_bytes=56 * 1024 * 1024):
    """v: (B, Tv, Vd), l: (B, Tl, Ld), mask: (B, Tl) (0 == padding) or None.

    tv_tile default (512) and vmem_limit (56 MiB) are v7x-safe; on v5e/v6e a larger
    tv_tile (1024) / vmem_limit can be passed for better per-step amortization.
    """
    B, Tv, Vd = v.shape
    _, Tl, Ld = l.shape
    E = params["w_q"].shape[1]
    assert E % num_heads == 0, "embed_dim must be divisible by num_heads"
    H = num_heads
    hd = E // H
    scale = hd ** (-0.5)

    if mask is None:
        mask = jnp.ones((B, Tl), jnp.float32)
    mask = mask.astype(jnp.float32)

    # ---- lane-friendly padding ----
    # Tl is the lane dim of the whole attention inner loop -> pad to a multiple of 128.
    Tl_pad = _round_up(max(Tl, 128), 128)
    # Tv is padded up to a multiple of the tile (padded rows masked out of l-side).
    tv_tile = _round_up(max(8, min(tv_tile, _round_up(Tv, 8))), 8)
    Tv_pad = _round_up(Tv, tv_tile)
    n_tiles = Tv_pad // tv_tile
    tv_valid = Tv if Tv_pad != Tv else None

    if Tv_pad != Tv:
        v = jnp.pad(v, ((0, 0), (0, Tv_pad - Tv), (0, 0)))
    if Tl_pad != Tl:
        l = jnp.pad(l, ((0, 0), (0, Tl_pad - Tl), (0, 0)))
        mask = jnp.pad(mask, ((0, 0), (0, Tl_pad - Tl)))   # padded tokens -> mask 0
    mask3 = mask.reshape(B, 1, Tl_pad)

    f32, bf16 = jnp.float32, jnp.bfloat16

    # head-major weight layouts (static reshapes in the wrapper, no kernel transposes)
    def hm_in(w):    # (Din, E) -> (H, Din, hd)
        return jnp.transpose(w.reshape(w.shape[0], H, hd), (1, 0, 2)).astype(bf16)

    def hm_out(w):   # (E, Dout) -> (H, hd, Dout)
        return w.reshape(H, hd, w.shape[1]).astype(bf16)

    def hm_b(b):     # (1, E) -> (H, 1, hd)
        return b.reshape(H, 1, hd).astype(f32)

    small = [
        params["ln_v_g"].astype(f32), params["ln_v_b"].astype(f32),
        params["ln_l_g"].astype(f32), params["ln_l_b"].astype(f32),
        hm_b(params["b_q"] * scale), hm_b(params["b_k"]),
        hm_b(params["b_vv"]), hm_b(params["b_vl"]),
        params["b_ov"].astype(f32), params["b_ol"].astype(f32),
        params["gamma_v"].astype(f32), params["gamma_l"].astype(f32),
    ]
    big = [
        hm_in(params["w_q"] * scale), hm_in(params["w_k"]),
        hm_in(params["w_vv"]), hm_in(params["w_vl"]),
        hm_out(params["w_ov"]), hm_out(params["w_ol"]),
    ]

    def full_spec(a):
        nd = a.ndim
        return pl.BlockSpec(a.shape, lambda b, i, _nd=nd: (0,) * _nd)

    in_specs = (
        [pl.BlockSpec((1, tv_tile, Vd), lambda b, i: (b, i, 0)),   # v (tiled over Tv)
         pl.BlockSpec((1, Tl_pad, Ld), lambda b, i: (b, 0, 0)),    # l (resident per b)
         pl.BlockSpec((1, 1, Tl_pad), lambda b, i: (b, 0, 0))]     # attention_mask_l
        + [full_spec(a) for a in small]
        + [pl.BlockSpec(memory_space=pl.ANY)] * len(big)           # weights stay in HBM
    )

    out_specs = [
        pl.BlockSpec((1, tv_tile, Vd), lambda b, i: (b, i, 0)),    # v output per tile
        pl.BlockSpec((1, Tl_pad, Ld), lambda b, i: (b, 0, 0)),     # l output (resident)
    ]

    scratch_shapes = (
        [pltpu.VMEM(w.shape, bf16) for w in big]       # single-buffered weight residency
        + [pltpu.SemaphoreType.DMA((len(big),)),
           pltpu.VMEM((Tl_pad, Ld), f32),              # l_n
           pltpu.VMEM((H, Tl_pad, hd), bf16),          # k (head-major)
           pltpu.VMEM((H, Tl_pad, hd), bf16),          # val_l (head-major)
           pltpu.VMEM((H, 1, Tl_pad), f32),            # running max
           pltpu.VMEM((H, 1, Tl_pad), f32),            # running sum
           pltpu.VMEM((H, hd, Tl_pad), f32),           # out_l accumulator (transposed)
           pltpu.VMEM((tv_tile, Vd), f32),             # delta_v accumulator
           pltpu.VMEM((Tl_pad, Ld), f32)]              # delta_l accumulator
    )

    kernel = functools.partial(_bi_attn_kernel, num_heads=H, tv_valid=tv_valid)

    out_v, out_l = pl.pallas_call(
        kernel,
        grid=(B, n_tiles),
        in_specs=in_specs,
        out_specs=out_specs,
        out_shape=(
            jax.ShapeDtypeStruct((B, Tv_pad, Vd), v.dtype),
            jax.ShapeDtypeStruct((B, Tl_pad, Ld), l.dtype),
        ),
        scratch_shapes=scratch_shapes,
        compiler_params=pltpu.CompilerParams(
            # B is parallel (megacore-shardable); Tv is the out_l reduction axis.
            dimension_semantics=("parallel", "arbitrary"),
            vmem_limit_bytes=vmem_limit_bytes),
    )(v, l, mask3, *small, *big)

    return out_v[:, :Tv, :], out_l[:, :Tl, :]


# ----------------------------- parameter init -----------------------------
def _xavier_uniform(key, in_dim, out_dim):
    bound = math.sqrt(6.0 / (in_dim + out_dim))
    # stored as (in, out): y = x @ W + b  (== torch x @ W_torch.T + b)
    return jax.random.uniform(key, (in_dim, out_dim), jnp.float32, -bound, bound)


def init_params(key, v_dim, l_dim, embed_dim, init_values=1e-4):
    ks = jax.random.split(key, 6)
    row = lambda d: jnp.zeros((1, d), jnp.float32)
    return {
        "ln_v_g": jnp.ones((1, v_dim), jnp.float32), "ln_v_b": row(v_dim),
        "ln_l_g": jnp.ones((1, l_dim), jnp.float32), "ln_l_b": row(l_dim),
        "w_q":  _xavier_uniform(ks[0], v_dim, embed_dim), "b_q":  row(embed_dim),
        "w_k":  _xavier_uniform(ks[1], l_dim, embed_dim), "b_k":  row(embed_dim),
        "w_vv": _xavier_uniform(ks[2], v_dim, embed_dim), "b_vv": row(embed_dim),
        "w_vl": _xavier_uniform(ks[3], l_dim, embed_dim), "b_vl": row(embed_dim),
        "w_ov": _xavier_uniform(ks[4], embed_dim, v_dim), "b_ov": row(v_dim),
        "w_ol": _xavier_uniform(ks[5], embed_dim, l_dim), "b_ol": row(l_dim),
        "gamma_v": jnp.full((1, v_dim), init_values, jnp.float32),
        "gamma_l": jnp.full((1, l_dim), init_values, jnp.float32),
    }


# ----------------------------- pure-JAX reference -----------------------------
def reference(v, l, mask, p, *, num_heads):
    B, Tv, Vd = v.shape
    _, Tl, Ld = l.shape
    E = p["w_q"].shape[1]
    hd = E // num_heads
    scale = hd ** (-0.5)

    def ln(x, g, b):
        mu = x.mean(-1, keepdims=True)
        var = ((x - mu) ** 2).mean(-1, keepdims=True)
        return (x - mu) / jnp.sqrt(var + LN_EPS) * g + b

    v_n = ln(v, p["ln_v_g"], p["ln_v_b"])
    l_n = ln(l, p["ln_l_g"], p["ln_l_b"])

    q = (v_n @ p["w_q"] + p["b_q"]) * scale
    k = l_n @ p["w_k"] + p["b_k"]
    vv = v_n @ p["w_vv"] + p["b_vv"]
    vl = l_n @ p["w_vl"] + p["b_vl"]

    def split(x, T):
        return x.reshape(B, T, num_heads, hd).transpose(0, 2, 1, 3)

    qh, kh, vvh, vlh = split(q, Tv), split(k, Tl), split(vv, Tv), split(vl, Tl)
    aw = jnp.einsum("bhqd,bhkd->bhqk", qh, kh)
    aw = jnp.clip(aw, -50000.0, 50000.0)

    aw_t = jnp.swapaxes(aw, -1, -2)
    aw_l = aw_t - aw_t.max(-1, keepdims=True)
    aw_l = jnp.clip(aw_l, -50000.0, 50000.0)
    p_l = jax.nn.softmax(aw_l, -1)

    mask_add = jnp.where(mask == 0.0, -9.0e15, mask)[:, None, None, :]
    p_v = jax.nn.softmax(aw + mask_add, -1)

    ov = jnp.einsum("bhqk,bhkd->bhqd", p_v, vlh).transpose(0, 2, 1, 3).reshape(B, Tv, E)
    ol = jnp.einsum("bhkq,bhqd->bhkd", p_l, vvh).transpose(0, 2, 1, 3).reshape(B, Tl, E)

    dv = ov @ p["w_ov"] + p["b_ov"]
    dl = ol @ p["w_ol"] + p["b_ol"]
    return v_n + p["gamma_v"] * dv, l_n + p["gamma_l"] * dl


if __name__ == "__main__":
    # Small shapes; Tv=12 is deliberately not a multiple of the tile so the Tv-padding
    # row-mask path is exercised, and Tl=7 exercises the Tl->128 lane padding.
    B, Tv, Tl = 2, 12, 7
    V_DIM, L_DIM, EMBED, HEADS = 32, 32, 32, 4
    INIT_VALUES = 0.03   # large enough that attention errors are visible in the output

    key = jax.random.PRNGKey(0)
    kv, kl, kp = jax.random.split(key, 3)
    v = jax.random.normal(kv, (B, Tv, V_DIM), jnp.float32)
    l = jax.random.normal(kl, (B, Tl, L_DIM), jnp.float32)
    # language attention mask: last 2 tokens of batch 1 are padding (0)
    mask = jnp.ones((B, Tl), jnp.float32).at[1, -2:].set(0.0)

    params = init_params(kp, V_DIM, L_DIM, EMBED, init_values=INIT_VALUES)

    # tv_tile=8 -> 2 Tv tiles per batch element, exercising the online-softmax path.
    out_v, out_l = bi_attention_block(v, l, mask, params, num_heads=HEADS, tv_tile=8)
    jax.block_until_ready((out_v, out_l))

    ref_v, ref_l = reference(v, l, mask, params, num_heads=HEADS)
    assert out_v.shape == ref_v.shape and out_l.shape == ref_l.shape
    # tolerance vs pure-f32 reference: matmuls run with bf16 operands (f32 accumulate)
    # and softmax denominators use the approximate EUP reciprocal.
    assert jnp.allclose(out_v, ref_v, atol=5e-3, rtol=5e-3), (
        "v mismatch, max abs err=%g" % float(jnp.max(jnp.abs(out_v - ref_v))))
    assert jnp.allclose(out_l, ref_l, atol=5e-3, rtol=5e-3), (
        "l mismatch, max abs err=%g" % float(jnp.max(jnp.abs(out_l - ref_l))))
    print("KERNEL_OK")
</pallas_src>

<mosaic_0001>
module attributes {stable_mosaic.version = 11 : i64} {
  func.func @_bi_attn_kernel(%arg0: i32, %arg1: i32, %arg2: memref<1x8x32xf32, #tpu.memory_space<vmem>>, %arg3: memref<1x128x32xf32, #tpu.memory_space<vmem>>, %arg4: memref<1x1x128xf32, #tpu.memory_space<vmem>>, %arg5: memref<1x32xf32, #tpu.memory_space<vmem>>, %arg6: memref<1x32xf32, #tpu.memory_space<vmem>>, %arg7: memref<1x32xf32, #tpu.memory_space<vmem>>, %arg8: memref<1x32xf32, #tpu.memory_space<vmem>>, %arg9: memref<4x1x8xf32, #tpu.memory_space<vmem>>, %arg10: memref<4x1x8xf32, #tpu.memory_space<vmem>>, %arg11: memref<4x1x8xf32, #tpu.memory_space<vmem>>, %arg12: memref<4x1x8xf32, #tpu.memory_space<vmem>>, %arg13: memref<1x32xf32, #tpu.memory_space<vmem>>, %arg14: memref<1x32xf32, #tpu.memory_space<vmem>>, %arg15: memref<1x32xf32, #tpu.memory_space<vmem>>, %arg16: memref<1x32xf32, #tpu.memory_space<vmem>>, %arg17: memref<4x32x8xbf16, #tpu.memory_space<any>>, %arg18: memref<4x32x8xbf16, #tpu.memory_space<any>>, %arg19: memref<4x32x8xbf16, #tpu.memory_space<any>>, %arg20: memref<4x32x8xbf16, #tpu.memory_space<any>>, %arg21: memref<4x8x32xbf16, #tpu.memory_space<any>>, %arg22: memref<4x8x32xbf16, #tpu.memory_space<any>>, %arg23: memref<1x8x32xf32, #tpu.memory_space<vmem>>, %arg24: memref<1x128x32xf32, #tpu.memory_space<vmem>>, %arg25: memref<4x32x8xbf16, #tpu.memory_space<vmem>>, %arg26: memref<4x32x8xbf16, #tpu.memory_space<vmem>>, %arg27: memref<4x32x8xbf16, #tpu.memory_space<vmem>>, %arg28: memref<4x32x8xbf16, #tpu.memory_space<vmem>>, %arg29: memref<4x8x32xbf16, #tpu.memory_space<vmem>>, %arg30: memref<4x8x32xbf16, #tpu.memory_space<vmem>>, %arg31: memref<6x!tpu.dma_semaphore, #tpu.memory_space<semaphore_mem>>, %arg32: memref<128x32xf32, #tpu.memory_space<vmem>>, %arg33: memref<4x128x8xbf16, #tpu.memory_space<vmem>>, %arg34: memref<4x128x8xbf16, #tpu.memory_space<vmem>>, %arg35: memref<4x1x128xf32, #tpu.memory_space<vmem>>, %arg36: memref<4x1x128xf32, #tpu.memory_space<vmem>>, %arg37: memref<4x8x128xf32, #tpu.memory_space<vmem>>, %arg38: memref<8x32xf32, #tpu.memory_space<vmem>>, %arg39: memref<128x32xf32, #tpu.memory_space<vmem>>) attributes {dimension_semantics = [#tpu.dimension_semantics<parallel>, #tpu.dimension_semantics<arbitrary>], iteration_bounds = array<i64: 2, 2>, scalar_prefetch = 0 : i64, scratch_operands = 15 : i64, tpu.core_type = #tpu.core_type<tc>, window_params = [{transform_indices = @transform_0, window_bounds = array<i64: 1, 8, 32>}, {transform_indices = @transform_1, window_bounds = array<i64: 1, 128, 32>}, {transform_indices = @transform_2, window_bounds = array<i64: 1, 1, 128>}, {pipeline_mode = #tpu.pipeline_mode<synchronous>, transform_indices = @transform_3, window_bounds = array<i64: 1, 32>}, {pipeline_mode = #tpu.pipeline_mode<synchronous>, transform_indices = @transform_4, window_bounds = array<i64: 1, 32>}, {pipeline_mode = #tpu.pipeline_mode<synchronous>, transform_indices = @transform_5, window_bounds = array<i64: 1, 32>}, {pipeline_mode = #tpu.pipeline_mode<synchronous>, transform_indices = @transform_6, window_bounds = array<i64: 1, 32>}, {pipeline_mode = #tpu.pipeline_mode<synchronous>, transform_indices = @transform_7, window_bounds = array<i64: 4, 1, 8>}, {pipeline_mode = #tpu.pipeline_mode<synchronous>, transform_indices = @transform_8, window_bounds = array<i64: 4, 1, 8>}, {pipeline_mode = #tpu.pipeline_mode<synchronous>, transform_indices = @transform_9, window_bounds = array<i64: 4, 1, 8>}, {pipeline_mode = #tpu.pipeline_mode<synchronous>, transform_indices = @transform_10, window_bounds = array<i64: 4, 1, 8>}, {pipeline_mode = #tpu.pipeline_mode<synchronous>, transform_indices = @transform_11, window_bounds = array<i64: 1, 32>}, {pipeline_mode = #tpu.pipeline_mode<synchronous>, transform_indices = @transform_12, window_bounds = array<i64: 1, 32>}, {pipeline_mode = #tpu.pipeline_mode<synchronous>, transform_indices = @transform_13, window_bounds = array<i64: 1, 32>}, {pipeline_mode = #tpu.pipeline_mode<synchronous>, transform_indices = @transform_14, window_bounds = array<i64: 1, 32>}, {}, {}, {}, {}, {}, {}, {transform_indices = @transform_21, window_bounds = array<i64: 1, 8, 32>}, {transform_indices = @transform_22, window_bounds = array<i64: 1, 128, 32>}]} {
    %c0_i32 = arith.constant 0 : i32
    %0 = arith.cmpi eq, %arg1, %c0_i32 : i32
    %1 = arith.extui %0 : i1 to i32
    %c0_i32_0 = arith.constant 0 : i32
    %2 = arith.cmpi ne, %1, %c0_i32_0 : i32
    scf.if %2 {
      %c0_i32_32 = arith.constant 0 : i32
      %61 = tpu.memref_slice %arg31[%c0_i32_32] : memref<6x!tpu.dma_semaphore, #tpu.memory_space<semaphore_mem>> -> memref<1x!tpu.dma_semaphore, #tpu.memory_space<semaphore_mem>>
      %62 = tpu.memref_squeeze %61 : memref<1x!tpu.dma_semaphore, #tpu.memory_space<semaphore_mem>> -> memref<!tpu.dma_semaphore, #tpu.memory_space<semaphore_mem>>
      tpu.enqueue_dma source(%arg17 : memref<4x32x8xbf16, #tpu.memory_space<any>>) target(%arg25 : memref<4x32x8xbf16, #tpu.memory_space<vmem>>) target_semaphore(%62 : memref<!tpu.dma_semaphore, #tpu.memory_space<semaphore_mem>>)
      %c1_i32_33 = arith.constant 1 : i32
      %63 = tpu.memref_slice %arg31[%c1_i32_33] : memref<6x!tpu.dma_semaphore, #tpu.memory_space<semaphore_mem>> -> memref<1x!tpu.dma_semaphore, #tpu.memory_space<semaphore_mem>>
      %64 = tpu.memref_squeeze %63 : memref<1x!tpu.dma_semaphore, #tpu.memory_space<semaphore_mem>> -> memref<!tpu.dma_semaphore, #tpu.memory_space<semaphore_mem>>
      tpu.enqueue_dma source(%arg18 : memref<4x32x8xbf16, #tpu.memory_space<any>>) target(%arg26 : memref<4x32x8xbf16, #tpu.memory_space<vmem>>) target_semaphore(%64 : memref<!tpu.dma_semaphore, #tpu.memory_space<semaphore_mem>>)
      %c2_i32 = arith.constant 2 : i32
      %65 = tpu.memref_slice %arg31[%c2_i32] : memref<6x!tpu.dma_semaphore, #tpu.memory_space<semaphore_mem>> -> memref<1x!tpu.dma_semaphore, #tpu.memory_space<semaphore_mem>>
      %66 = tpu.memref_squeeze %65 : memref<1x!tpu.dma_semaphore, #tpu.memory_space<semaphore_mem>> -> memref<!tpu.dma_semaphore, #tpu.memory_space<semaphore_mem>>
      tpu.enqueue_dma source(%arg19 : memref<4x32x8xbf16, #tpu.memory_space<any>>) target(%arg27 : memref<4x32x8xbf16, #tpu.memory_space<vmem>>) target_semaphore(%66 : memref<!tpu.dma_semaphore, #tpu.memory_space<semaphore_mem>>)
      %c3_i32 = arith.constant 3 : i32
      %67 = tpu.memref_slice %arg31[%c3_i32] : memref<6x!tpu.dma_semaphore, #tpu.memory_space<semaphore_mem>> -> memref<1x!tpu.dma_semaphore, #tpu.memory_space<semaphore_mem>>
      %68 = tpu.memref_squeeze %67 : memref<1x!tpu.dma_semaphore, #tpu.memory_space<semaphore_mem>> -> memref<!tpu.dma_semaphore, #tpu.memory_space<semaphore_mem>>
      tpu.enqueue_dma source(%arg20 : memref<4x32x8xbf16, #tpu.memory_space<any>>) target(%arg28 : memref<4x32x8xbf16, #tpu.memory_space<vmem>>) target_semaphore(%68 : memref<!tpu.dma_semaphore, #tpu.memory_space<semaphore_mem>>)
      %c4_i32_34 = arith.constant 4 : i32
      %69 = tpu.memref_slice %arg31[%c4_i32_34] : memref<6x!tpu.dma_semaphore, #tpu.memory_space<semaphore_mem>> -> memref<1x!tpu.dma_semaphore, #tpu.memory_space<semaphore_mem>>
      %70 = tpu.memref_squeeze %69 : memref<1x!tpu.dma_semaphore, #tpu.memory_space<semaphore_mem>> -> memref<!tpu.dma_semaphore, #tpu.memory_space<semaphore_mem>>
      tpu.enqueue_dma source(%arg21 : memref<4x8x32xbf16, #tpu.memory_space<any>>) target(%arg29 : memref<4x8x32xbf16, #tpu.memory_space<vmem>>) target_semaphore(%70 : memref<!tpu.dma_semaphore, #tpu.memory_space<semaphore_mem>>)
      %c5_i32 = arith.constant 5 : i32
      %71 = tpu.memref_slice %arg31[%c5_i32] : memref<6x!tpu.dma_semaphore, #tpu.memory_space<semaphore_mem>> -> memref<1x!tpu.dma_semaphore, #tpu.memory_space<semaphore_mem>>
      %72 = tpu.memref_squeeze %71 : memref<1x!tpu.dma_semaphore, #tpu.memory_space<semaphore_mem>> -> memref<!tpu.dma_semaphore, #tpu.memory_space<semaphore_mem>>
      tpu.enqueue_dma source(%arg22 : memref<4x8x32xbf16, #tpu.memory_space<any>>) target(%arg30 : memref<4x8x32xbf16, #tpu.memory_space<vmem>>) target_semaphore(%72 : memref<!tpu.dma_semaphore, #tpu.memory_space<semaphore_mem>>)
      %c0_i32_35 = arith.constant 0 : i32
      %73 = tpu.memref_slice %arg31[%c0_i32_35] : memref<6x!tpu.dma_semaphore, #tpu.memory_space<semaphore_mem>> -> memref<1x!tpu.dma_semaphore, #tpu.memory_space<semaphore_mem>>
      %74 = tpu.memref_squeeze %73 : memref<1x!tpu.dma_semaphore, #tpu.memory_space<semaphore_mem>> -> memref<!tpu.dma_semaphore, #tpu.memory_space<semaphore_mem>>
      tpu.wait_dma2 semaphore(%74 : memref<!tpu.dma_semaphore, #tpu.memory_space<semaphore_mem>>) src(%arg17 : memref<4x32x8xbf16, #tpu.memory_space<any>>) dst(%arg25 : memref<4x32x8xbf16, #tpu.memory_space<vmem>>)
      %c1_i32_36 = arith.constant 1 : i32
      %75 = tpu.memref_slice %arg31[%c1_i32_36] : memref<6x!tpu.dma_semaphore, #tpu.memory_space<semaphore_mem>> -> memref<1x!tpu.dma_semaphore, #tpu.memory_space<semaphore_mem>>
      %76 = tpu.memref_squeeze %75 : memref<1x!tpu.dma_semaphore, #tpu.memory_space<semaphore_mem>> -> memref<!tpu.dma_semaphore, #tpu.memory_space<semaphore_mem>>
      tpu.wait_dma2 semaphore(%76 : memref<!tpu.dma_semaphore, #tpu.memory_space<semaphore_mem>>) src(%arg18 : memref<4x32x8xbf16, #tpu.memory_space<any>>) dst(%arg26 : memref<4x32x8xbf16, #tpu.memory_space<vmem>>)
      %c2_i32_37 = arith.constant 2 : i32
      %77 = tpu.memref_slice %arg31[%c2_i32_37] : memref<6x!tpu.dma_semaphore, #tpu.memory_space<semaphore_mem>> -> memref<1x!tpu.dma_semaphore, #tpu.memory_space<semaphore_mem>>
      %78 = tpu.memref_squeeze %77 : memref<1x!tpu.dma_semaphore, #tpu.memory_space<semaphore_mem>> -> memref<!tpu.dma_semaphore, #tpu.memory_space<semaphore_mem>>
      tpu.wait_dma2 semaphore(%78 : memref<!tpu.dma_semaphore, #tpu.memory_space<semaphore_mem>>) src(%arg19 : memref<4x32x8xbf16, #tpu.memory_space<any>>) dst(%arg27 : memref<4x32x8xbf16, #tpu.memory_space<vmem>>)
      %c3_i32_38 = arith.constant 3 : i32
      %79 = tpu.memref_slice %arg31[%c3_i32_38] : memref<6x!tpu.dma_semaphore, #tpu.memory_space<semaphore_mem>> -> memref<1x!tpu.dma_semaphore, #tpu.memory_space<semaphore_mem>>
      %80 = tpu.memref_squeeze %79 : memref<1x!tpu.dma_semaphore, #tpu.memory_space<semaphore_mem>> -> memref<!tpu.dma_semaphore, #tpu.memory_space<semaphore_mem>>
      tpu.wait_dma2 semaphore(%80 : memref<!tpu.dma_semaphore, #tpu.memory_space<semaphore_mem>>) src(%arg20 : memref<4x32x8xbf16, #tpu.memory_space<any>>) dst(%arg28 : memref<4x32x8xbf16, #tpu.memory_space<vmem>>)
      %c4_i32_39 = arith.constant 4 : i32
      %81 = tpu.memref_slice %arg31[%c4_i32_39] : memref<6x!tpu.dma_semaphore, #tpu.memory_space<semaphore_mem>> -> memref<1x!tpu.dma_semaphore, #tpu.memory_space<semaphore_mem>>
      %82 = tpu.memref_squeeze %81 : memref<1x!tpu.dma_semaphore, #tpu.memory_space<semaphore_mem>> -> memref<!tpu.dma_semaphore, #tpu.memory_space<semaphore_mem>>
      tpu.wait_dma2 semaphore(%82 : memref<!tpu.dma_semaphore, #tpu.memory_space<semaphore_mem>>) src(%arg21 : memref<4x8x32xbf16, #tpu.memory_space<any>>) dst(%arg29 : memref<4x8x32xbf16, #tpu.memory_space<vmem>>)
      %c5_i32_40 = arith.constant 5 : i32
      %83 = tpu.memref_slice %arg31[%c5_i32_40] : memref<6x!tpu.dma_semaphore, #tpu.memory_space<semaphore_mem>> -> memref<1x!tpu.dma_semaphore, #tpu.memory_space<semaphore_mem>>
      %84 = tpu.memref_squeeze %83 : memref<1x!tpu.dma_semaphore, #tpu.memory_space<semaphore_mem>> -> memref<!tpu.dma_semaphore, #tpu.memory_space<semaphore_mem>>
      tpu.wait_dma2 semaphore(%84 : memref<!tpu.dma_semaphore, #tpu.memory_space<semaphore_mem>>) src(%arg22 : memref<4x8x32xbf16, #tpu.memory_space<any>>) dst(%arg30 : memref<4x8x32xbf16, #tpu.memory_space<vmem>>)
      %c0_41 = arith.constant 0 : index
      %c0_42 = arith.constant 0 : index
      %c0_43 = arith.constant 0 : index
      %85 = vector.load %arg3[%c0_41, %c0_42, %c0_43] : memref<1x128x32xf32, #tpu.memory_space<vmem>>, vector<1x128x32xf32>
      %86 = vector.shape_cast %85 : vector<1x128x32xf32> to vector<128x32xf32>
      %c0_44 = arith.constant 0 : index
      %c0_45 = arith.constant 0 : index
      %87 = vector.load %arg7[%c0_44, %c0_45] : memref<1x32xf32, #tpu.memory_space<vmem>>, vector<1x32xf32>
      %c0_46 = arith.constant 0 : index
      %c0_47 = arith.constant 0 : index
      %88 = vector.load %arg8[%c0_46, %c0_47] : memref<1x32xf32, #tpu.memory_space<vmem>>, vector<1x32xf32>
      %cst_48 = arith.constant dense<0.000000e+00> : vector<128xf32>
      %89 = vector.multi_reduction <add>, %86, %cst_48 [1] : vector<128x32xf32> to vector<128xf32>
      %90 = vector.shape_cast %89 : vector<128xf32> to vector<128x1xf32>
      %cst_49 = arith.constant 3.200000e+01 : f32
      %91 = vector.broadcast %cst_49 : f32 to vector<128x1xf32>
      %92 = arith.divf %90, %91 : vector<128x1xf32>
      %93 = vector.broadcast %92 : vector<128x1xf32> to vector<128x32xf32>
      %94 = arith.subf %86, %93 : vector<128x32xf32>
      %95 = vector.broadcast %92 : vector<128x1xf32> to vector<128x32xf32>
      %96 = arith.subf %86, %95 : vector<128x32xf32>
      %97 = arith.mulf %94, %96 : vector<128x32xf32>
      %cst_50 = arith.constant dense<0.000000e+00> : vector<128xf32>
      %98 = vector.multi_reduction <add>, %97, %cst_50 [1] : vector<128x32xf32> to vector<128xf32>
      %99 = vector.shape_cast %98 : vector<128xf32> to vector<128x1xf32>
      %cst_51 = arith.constant 3.200000e+01 : f32
      %100 = vector.broadcast %cst_51 : f32 to vector<128x1xf32>
      %101 = arith.divf %99, %100 : vector<128x1xf32>
      %102 = vector.broadcast %92 : vector<128x1xf32> to vector<128x32xf32>
      %103 = arith.subf %86, %102 : vector<128x32xf32>
      %cst_52 = arith.constant 9.99999974E-6 : f32
      %104 = vector.broadcast %cst_52 : f32 to vector<128x1xf32>
      %105 = arith.addf %101, %104 : vector<128x1xf32>
      %106 = math.rsqrt %105 : vector<128x1xf32>
      %107 = vector.broadcast %106 : vector<128x1xf32> to vector<128x32xf32>
      %108 = arith.mulf %103, %107 : vector<128x32xf32>
      %109 = vector.broadcast %87 : vector<1x32xf32> to vector<128x32xf32>
      %110 = arith.mulf %108, %109 : vector<128x32xf32>
      %111 = vector.broadcast %88 : vector<1x32xf32> to vector<128x32xf32>
      %112 = arith.addf %110, %111 : vector<128x32xf32>
      %c0_53 = arith.constant 0 : index
      %c0_54 = arith.constant 0 : index
      %113 = vector.load %arg32[%c0_53, %c0_54] : memref<128x32xf32, #tpu.memory_space<vmem>>, vector<128x32xf32>
      tpu.vector_store %arg32[%c0_53, %c0_54], %112 {strides = array<i32>} : memref<128x32xf32, #tpu.memory_space<vmem>>, vector<128x32xf32>,
      %114 = arith.truncf %112 : vector<128x32xf32> to vector<128x32xbf16>
      %c0_i32_55 = arith.constant 0 : i32
      %c4_i32_56 = arith.constant 4 : i32
      %115 = arith.addi %c0_i32_55, %c4_i32_56 : i32
      %c1_i32_57 = arith.constant 1 : i32
      scf.for %arg40 = %c0_i32_55 to %115 step %c1_i32_57  : i32 {
        %122 = arith.index_cast %arg40 : i32 to index
        %c0_71 = arith.constant 0 : index
        %c0_72 = arith.constant 0 : index
        %123 = vector.load %arg26[%122, %c0_71, %c0_72] : memref<4x32x8xbf16, #tpu.memory_space<vmem>>, vector<1x32x8xbf16>
        %124 = vector.shape_cast %123 : vector<1x32x8xbf16> to vector<32x8xbf16>
        %cst_73 = arith.constant dense<0.000000e+00> : vector<128x8xf32>
        %125 = tpu.matmul %114, %124, %cst_73 {dimension_numbers = #tpu.dot_dimension_numbers<[1], [0], [0], [1], [0, 0, 1, 1], [], []>} : vector<128x32xbf16>, vector<32x8xbf16>, vector<128x8xf32> -> vector<128x8xf32>
        %126 = arith.index_cast %arg40 : i32 to index
        %c0_74 = arith.constant 0 : index
        %c0_75 = arith.constant 0 : index
        %127 = vector.load %arg10[%126, %c0_74, %c0_75] : memref<4x1x8xf32, #tpu.memory_space<vmem>>, vector<1x1x8xf32>
        %128 = vector.shape_cast %127 : vector<1x1x8xf32> to vector<1x8xf32>
        %129 = vector.broadcast %128 : vector<1x8xf32> to vector<128x8xf32>
        %130 = arith.addf %125, %129 : vector<128x8xf32>
        %131 = arith.index_cast %arg40 : i32 to index
        %c0_76 = arith.constant 0 : index
        %c0_77 = arith.constant 0 : index
        %132 = vector.load %arg28[%131, %c0_76, %c0_77] : memref<4x32x8xbf16, #tpu.memory_space<vmem>>, vector<1x32x8xbf16>
        %133 = vector.shape_cast %132 : vector<1x32x8xbf16> to vector<32x8xbf16>
        %cst_78 = arith.constant dense<0.000000e+00> : vector<128x8xf32>
        %134 = tpu.matmul %114, %133, %cst_78 {dimension_numbers = #tpu.dot_dimension_numbers<[1], [0], [0], [1], [0, 0, 1, 1], [], []>} : vector<128x32xbf16>, vector<32x8xbf16>, vector<128x8xf32> -> vector<128x8xf32>
        %135 = arith.index_cast %arg40 : i32 to index
        %c0_79 = arith.constant 0 : index
        %c0_80 = arith.constant 0 : index
        %136 = vector.load %arg12[%135, %c0_79, %c0_80] : memref<4x1x8xf32, #tpu.memory_space<vmem>>, vector<1x1x8xf32>
        %137 = vector.shape_cast %136 : vector<1x1x8xf32> to vector<1x8xf32>
        %138 = vector.broadcast %137 : vector<1x8xf32> to vector<128x8xf32>
        %139 = arith.addf %134, %138 : vector<128x8xf32>
        %140 = arith.truncf %130 : vector<128x8xf32> to vector<128x8xbf16>
        %141 = arith.index_cast %arg40 : i32 to index
        %c0_81 = arith.constant 0 : index
        %c0_82 = arith.constant 0 : index
        %142 = vector.load %arg33[%141, %c0_81, %c0_82] : memref<4x128x8xbf16, #tpu.memory_space<vmem>>, vector<1x128x8xbf16>
        %143 = vector.shape_cast %142 : vector<1x128x8xbf16> to vector<128x8xbf16>
        %144 = vector.shape_cast %140 : vector<128x8xbf16> to vector<1x128x8xbf16>
        tpu.vector_store %arg33[%141, %c0_81, %c0_82], %144 {strides = array<i32>} : memref<4x128x8xbf16, #tpu.memory_space<vmem>>, vector<1x128x8xbf16>,
        %145 = arith.truncf %139 : vector<128x8xf32> to vector<128x8xbf16>
        %146 = arith.index_cast %arg40 : i32 to index
        %c0_83 = arith.constant 0 : index
        %c0_84 = arith.constant 0 : index
        %147 = vector.load %arg34[%146, %c0_83, %c0_84] : memref<4x128x8xbf16, #tpu.memory_space<vmem>>, vector<1x128x8xbf16>
        %148 = vector.shape_cast %147 : vector<1x128x8xbf16> to vector<128x8xbf16>
        %149 = vector.shape_cast %145 : vector<128x8xbf16> to vector<1x128x8xbf16>
        tpu.vector_store %arg34[%146, %c0_83, %c0_84], %149 {strides = array<i32>} : memref<4x128x8xbf16, #tpu.memory_space<vmem>>, vector<1x128x8xbf16>,
      }
      %c4_i32_58 = arith.constant 4 : i32
      %cst_59 = arith.constant -1.000000e+30 : f32
      %116 = vector.broadcast %cst_59 : f32 to vector<4x1x128xf32>
      %c0_60 = arith.constant 0 : index
      %c0_61 = arith.constant 0 : index
      %c0_62 = arith.constant 0 : index
      %117 = vector.load %arg35[%c0_60, %c0_61, %c0_62] : memref<4x1x128xf32, #tpu.memory_space<vmem>>, vector<4x1x128xf32>
      tpu.vector_store %arg35[%c0_60, %c0_61, %c0_62], %116 {strides = array<i32>} : memref<4x1x128xf32, #tpu.memory_space<vmem>>, vector<4x1x128xf32>,
      %cst_63 = arith.constant 0.000000e+00 : f32
      %118 = vector.broadcast %cst_63 : f32 to vector<4x1x128xf32>
      %c0_64 = arith.constant 0 : index
      %c0_65 = arith.constant 0 : index
      %c0_66 = arith.constant 0 : index
      %119 = vector.load %arg36[%c0_64, %c0_65, %c0_66] : memref<4x1x128xf32, #tpu.memory_space<vmem>>, vector<4x1x128xf32>
      tpu.vector_store %arg36[%c0_64, %c0_65, %c0_66], %118 {strides = array<i32>} : memref<4x1x128xf32, #tpu.memory_space<vmem>>, vector<4x1x128xf32>,
      %cst_67 = arith.constant 0.000000e+00 : f32
      %120 = vector.broadcast %cst_67 : f32 to vector<4x8x128xf32>
      %c0_68 = arith.constant 0 : index
      %c0_69 = arith.constant 0 : index
      %c0_70 = arith.constant 0 : index
      %121 = vector.load %arg37[%c0_68, %c0_69, %c0_70] : memref<4x8x128xf32, #tpu.memory_space<vmem>>, vector<4x8x128xf32>
      tpu.vector_store %arg37[%c0_68, %c0_69, %c0_70], %120 {strides = array<i32>} : memref<4x8x128xf32, #tpu.memory_space<vmem>>, vector<4x8x128xf32>,
    } else {
    }
    %c0 = arith.constant 0 : index
    %c0_1 = arith.constant 0 : index
    %c0_2 = arith.constant 0 : index
    %3 = vector.load %arg2[%c0, %c0_1, %c0_2] : memref<1x8x32xf32, #tpu.memory_space<vmem>>, vector<1x8x32xf32>
    %4 = vector.shape_cast %3 : vector<1x8x32xf32> to vector<8x32xf32>
    %c0_3 = arith.constant 0 : index
    %c0_4 = arith.constant 0 : index
    %5 = vector.load %arg5[%c0_3, %c0_4] : memref<1x32xf32, #tpu.memory_space<vmem>>, vector<1x32xf32>
    %c0_5 = arith.constant 0 : index
    %c0_6 = arith.constant 0 : index
    %6 = vector.load %arg6[%c0_5, %c0_6] : memref<1x32xf32, #tpu.memory_space<vmem>>, vector<1x32xf32>
    %cst = arith.constant dense<0.000000e+00> : vector<8xf32>
    %7 = vector.multi_reduction <add>, %4, %cst [1] : vector<8x32xf32> to vector<8xf32>
    %8 = vector.shape_cast %7 : vector<8xf32> to vector<8x1xf32>
    %cst_7 = arith.constant 3.200000e+01 : f32
    %9 = vector.broadcast %cst_7 : f32 to vector<8x1xf32>
    %10 = arith.divf %8, %9 : vector<8x1xf32>
    %11 = vector.broadcast %10 : vector<8x1xf32> to vector<8x32xf32>
    %12 = arith.subf %4, %11 : vector<8x32xf32>
    %13 = vector.broadcast %10 : vector<8x1xf32> to vector<8x32xf32>
    %14 = arith.subf %4, %13 : vector<8x32xf32>
    %15 = arith.mulf %12, %14 : vector<8x32xf32>
    %cst_8 = arith.constant dense<0.000000e+00> : vector<8xf32>
    %16 = vector.multi_reduction <add>, %15, %cst_8 [1] : vector<8x32xf32> to vector<8xf32>
    %17 = vector.shape_cast %16 : vector<8xf32> to vector<8x1xf32>
    %cst_9 = arith.constant 3.200000e+01 : f32
    %18 = vector.broadcast %cst_9 : f32 to vector<8x1xf32>
    %19 = arith.divf %17, %18 : vector<8x1xf32>
    %20 = vector.broadcast %10 : vector<8x1xf32> to vector<8x32xf32>
    %21 = arith.subf %4, %20 : vector<8x32xf32>
    %cst_10 = arith.constant 9.99999974E-6 : f32
    %22 = vector.broadcast %cst_10 : f32 to vector<8x1xf32>
    %23 = arith.addf %19, %22 : vector<8x1xf32>
    %24 = math.rsqrt %23 : vector<8x1xf32>
    %25 = vector.broadcast %24 : vector<8x1xf32> to vector<8x32xf32>
    %26 = arith.mulf %21, %25 : vector<8x32xf32>
    %27 = vector.broadcast %5 : vector<1x32xf32> to vector<8x32xf32>
    %28 = arith.mulf %26, %27 : vector<8x32xf32>
    %29 = vector.broadcast %6 : vector<1x32xf32> to vector<8x32xf32>
    %30 = arith.addf %28, %29 : vector<8x32xf32>
    %31 = arith.truncf %30 : vector<8x32xf32> to vector<8x32xbf16>
    %c0_11 = arith.constant 0 : index
    %c0_12 = arith.constant 0 : index
    %c0_13 = arith.constant 0 : index
    %32 = vector.load %arg4[%c0_11, %c0_12, %c0_13] : memref<1x1x128xf32, #tpu.memory_space<vmem>>, vector<1x1x128xf32>
    %33 = vector.shape_cast %32 : vector<1x1x128xf32> to vector<1x128xf32>
    %cst_14 = arith.constant 0.000000e+00 : f32
    %34 = vector.broadcast %cst_14 : f32 to vector<1x128xf32>
    %35 = arith.cmpf oeq, %33, %34 : vector<1x128xf32>
    %cst_15 = arith.constant -9.000000e+15 : f32
    %36 = vector.broadcast %cst_15 : f32 to vector<1x128xf32>
    %37 = arith.select %35, %36, %33 : vector<1x128xi1>, vector<1x128xf32>
    %38 = tpu.iota {dimensions = array<i32: 0>} : vector<8x1xi32>
    %c8_i32 = arith.constant 8 : i32
    %39 = arith.muli %arg1, %c8_i32 : i32
    %40 = vector.broadcast %39 : i32 to vector<8x1xi32>
    %41 = arith.addi %40, %38 : vector<8x1xi32>
    %c12_i32 = arith.constant 12 : i32
    %42 = vector.broadcast %c12_i32 : i32 to vector<8x1xi32>
    %43 = arith.cmpi slt, %41, %42 : vector<8x1xi32>
    %cst_16 = arith.constant 0.000000e+00 : f32
    %44 = vector.broadcast %cst_16 : f32 to vector<8x32xf32>
    %c0_17 = arith.constant 0 : index
    %c0_18 = arith.constant 0 : index
    %45 = vector.load %arg38[%c0_17, %c0_18] : memref<8x32xf32, #tpu.memory_space<vmem>>, vector<8x32xf32>
    tpu.vector_store %arg38[%c0_17, %c0_18], %44 {strides = array<i32>} : memref<8x32xf32, #tpu.memory_space<vmem>>, vector<8x32xf32>,
    %c0_i32_19 = arith.constant 0 : i32
    %c4_i32 = arith.constant 4 : i32
    %46 = arith.addi %c0_i32_19, %c4_i32 : i32
    %c1_i32 = arith.constant 1 : i32
    scf.for %arg40 = %c0_i32_19 to %46 step %c1_i32  : i32 {
      %61 = arith.index_cast %arg40 : i32 to index
      %c0_32 = arith.constant 0 : index
      %c0_33 = arith.constant 0 : index
      %62 = vector.load %arg25[%61, %c0_32, %c0_33] : memref<4x32x8xbf16, #tpu.memory_space<vmem>>, vector<1x32x8xbf16>
      %63 = vector.shape_cast %62 : vector<1x32x8xbf16> to vector<32x8xbf16>
      %cst_34 = arith.constant dense<0.000000e+00> : vector<8x8xf32>
      %64 = tpu.matmul %31, %63, %cst_34 {dimension_numbers = #tpu.dot_dimension_numbers<[1], [0], [0], [1], [0, 0, 1, 1], [], []>} : vector<8x32xbf16>, vector<32x8xbf16>, vector<8x8xf32> -> vector<8x8xf32>
      %65 = arith.index_cast %arg40 : i32 to index
      %c0_35 = arith.constant 0 : index
      %c0_36 = arith.constant 0 : index
      %66 = vector.load %arg9[%65, %c0_35, %c0_36] : memref<4x1x8xf32, #tpu.memory_space<vmem>>, vector<1x1x8xf32>
      %67 = vector.shape_cast %66 : vector<1x1x8xf32> to vector<1x8xf32>
      %68 = vector.broadcast %67 : vector<1x8xf32> to vector<8x8xf32>
      %69 = arith.addf %64, %68 : vector<8x8xf32>
      %70 = arith.truncf %69 : vector<8x8xf32> to vector<8x8xbf16>
      %71 = arith.index_cast %arg40 : i32 to index
      %c0_37 = arith.constant 0 : index
      %c0_38 = arith.constant 0 : index
      %72 = vector.load %arg27[%71, %c0_37, %c0_38] : memref<4x32x8xbf16, #tpu.memory_space<vmem>>, vector<1x32x8xbf16>
      %73 = vector.shape_cast %72 : vector<1x32x8xbf16> to vector<32x8xbf16>
      %cst_39 = arith.constant dense<0.000000e+00> : vector<8x8xf32>
      %74 = tpu.matmul %31, %73, %cst_39 {dimension_numbers = #tpu.dot_dimension_numbers<[1], [0], [0], [1], [0, 0, 1, 1], [], []>} : vector<8x32xbf16>, vector<32x8xbf16>, vector<8x8xf32> -> vector<8x8xf32>
      %75 = arith.index_cast %arg40 : i32 to index
      %c0_40 = arith.constant 0 : index
      %c0_41 = arith.constant 0 : index
      %76 = vector.load %arg11[%75, %c0_40, %c0_41] : memref<4x1x8xf32, #tpu.memory_space<vmem>>, vector<1x1x8xf32>
      %77 = vector.shape_cast %76 : vector<1x1x8xf32> to vector<1x8xf32>
      %78 = vector.broadcast %77 : vector<1x8xf32> to vector<8x8xf32>
      %79 = arith.addf %74, %78 : vector<8x8xf32>
      %80 = arith.truncf %79 : vector<8x8xf32> to vector<8x8xbf16>
      %81 = arith.index_cast %arg40 : i32 to index
      %c0_42 = arith.constant 0 : index
      %c0_43 = arith.constant 0 : index
      %82 = vector.load %arg33[%81, %c0_42, %c0_43] : memref<4x128x8xbf16, #tpu.memory_space<vmem>>, vector<1x128x8xbf16>
      %83 = vector.shape_cast %82 : vector<1x128x8xbf16> to vector<128x8xbf16>
      %cst_44 = arith.constant dense<0.000000e+00> : vector<8x128xf32>
      %84 = tpu.matmul %70, %83, %cst_44 {dimension_numbers = #tpu.dot_dimension_numbers<[1], [1], [0], [0], [0, 0, 1, 0], [], []>} : vector<8x8xbf16>, vector<128x8xbf16>, vector<8x128xf32> -> vector<8x128xf32>
      %cst_45 = arith.constant -5.000000e+04 : f32
      %85 = vector.broadcast %cst_45 : f32 to vector<8x128xf32>
      %86 = arith.maximumf %84, %85 : vector<8x128xf32>
      %cst_46 = arith.constant 5.000000e+04 : f32
      %87 = vector.broadcast %cst_46 : f32 to vector<8x128xf32>
      %88 = arith.minimumf %86, %87 : vector<8x128xf32>
      %89 = vector.broadcast %37 : vector<1x128xf32> to vector<8x128xf32>
      %90 = arith.addf %88, %89 : vector<8x128xf32>
      %cst_47 = arith.constant dense<0xFF800000> : vector<8xf32>
      %91 = vector.multi_reduction <maximumf>, %90, %cst_47 [1] : vector<8x128xf32> to vector<8xf32>
      %92 = vector.shape_cast %91 : vector<8xf32> to vector<8x1xf32>
      %93 = vector.broadcast %92 : vector<8x1xf32> to vector<8x128xf32>
      %94 = arith.subf %90, %93 : vector<8x128xf32>
      %95 = math.exp %94 : vector<8x128xf32>
      %cst_48 = arith.constant dense<0.000000e+00> : vector<8xf32>
      %96 = vector.multi_reduction <add>, %95, %cst_48 [1] : vector<8x128xf32> to vector<8xf32>
      %97 = vector.shape_cast %96 : vector<8xf32> to vector<8x1xf32>
      %98 = arith.truncf %95 : vector<8x128xf32> to vector<8x128xbf16>
      %99 = arith.index_cast %arg40 : i32 to index
      %c0_49 = arith.constant 0 : index
      %c0_50 = arith.constant 0 : index
      %100 = vector.load %arg34[%99, %c0_49, %c0_50] : memref<4x128x8xbf16, #tpu.memory_space<vmem>>, vector<1x128x8xbf16>
      %101 = vector.shape_cast %100 : vector<1x128x8xbf16> to vector<128x8xbf16>
      %cst_51 = arith.constant dense<0.000000e+00> : vector<8x8xf32>
      %102 = tpu.matmul %98, %101, %cst_51 {dimension_numbers = #tpu.dot_dimension_numbers<[1], [0], [0], [1], [0, 0, 1, 1], [], []>} : vector<8x128xbf16>, vector<128x8xbf16>, vector<8x8xf32> -> vector<8x8xf32>
      %103 = tpu.reciprocal %97 {approx = true} : vector<8x1xf32> -> vector<8x1xf32>
      %104 = vector.broadcast %103 : vector<8x1xf32> to vector<8x8xf32>
      %105 = arith.mulf %102, %104 : vector<8x8xf32>
      %c0_52 = arith.constant 0 : index
      %c0_53 = arith.constant 0 : index
      %106 = vector.load %arg38[%c0_52, %c0_53] : memref<8x32xf32, #tpu.memory_space<vmem>>, vector<8x32xf32>
      %107 = arith.truncf %105 : vector<8x8xf32> to vector<8x8xbf16>
      %108 = arith.index_cast %arg40 : i32 to index
      %c0_54 = arith.constant 0 : index
      %c0_55 = arith.constant 0 : index
      %109 = vector.load %arg29[%108, %c0_54, %c0_55] : memref<4x8x32xbf16, #tpu.memory_space<vmem>>, vector<1x8x32xbf16>
      %110 = vector.shape_cast %109 : vector<1x8x32xbf16> to vector<8x32xbf16>
      %cst_56 = arith.constant dense<0.000000e+00> : vector<8x32xf32>
      %111 = tpu.matmul %107, %110, %cst_56 {dimension_numbers = #tpu.dot_dimension_numbers<[1], [0], [0], [1], [0, 0, 1, 1], [], []>} : vector<8x8xbf16>, vector<8x32xbf16>, vector<8x32xf32> -> vector<8x32xf32>
      %112 = arith.addf %106, %111 : vector<8x32xf32>
      %c0_57 = arith.constant 0 : index
      %c0_58 = arith.constant 0 : index
      %113 = vector.load %arg38[%c0_57, %c0_58] : memref<8x32xf32, #tpu.memory_space<vmem>>, vector<8x32xf32>
      tpu.vector_store %arg38[%c0_57, %c0_58], %112 {strides = array<i32>} : memref<8x32xf32, #tpu.memory_space<vmem>>, vector<8x32xf32>,
      %cst_59 = arith.constant -1.000000e+30 : f32
      %114 = vector.shape_cast %43 : vector<8x1xi1> to vector<8x1xi1>
      %115 = vector.broadcast %114 : vector<8x1xi1> to vector<8x128xi1>
      %116 = vector.broadcast %cst_59 : f32 to vector<8x128xf32>
      %117 = arith.select %115, %88, %116 : vector<8x128xi1>, vector<8x128xf32>
      %cst_60 = arith.constant dense<0xFF800000> : vector<128xf32>
      %118 = vector.multi_reduction <maximumf>, %117, %cst_60 [0] : vector<8x128xf32> to vector<128xf32>
      %119 = vector.shape_cast %118 : vector<128xf32> to vector<1x128xf32>
      %120 = arith.index_cast %arg40 : i32 to index
      %c0_61 = arith.constant 0 : index
      %c0_62 = arith.constant 0 : index
      %121 = vector.load %arg35[%120, %c0_61, %c0_62] : memref<4x1x128xf32, #tpu.memory_space<vmem>>, vector<1x1x128xf32>
      %122 = vector.shape_cast %121 : vector<1x1x128xf32> to vector<1x128xf32>
      %123 = arith.maximumf %122, %119 : vector<1x128xf32>
      %124 = arith.subf %122, %123 : vector<1x128xf32>
      %125 = math.exp %124 : vector<1x128xf32>
      %126 = vector.broadcast %123 : vector<1x128xf32> to vector<8x128xf32>
      %127 = arith.subf %117, %126 : vector<8x128xf32>
      %128 = math.exp %127 : vector<8x128xf32>
      %129 = arith.index_cast %arg40 : i32 to index
      %c0_63 = arith.constant 0 : index
      %c0_64 = arith.constant 0 : index
      %130 = vector.load %arg36[%129, %c0_63, %c0_64] : memref<4x1x128xf32, #tpu.memory_space<vmem>>, vector<1x1x128xf32>
      %131 = vector.shape_cast %130 : vector<1x1x128xf32> to vector<1x128xf32>
      %132 = arith.mulf %125, %131 : vector<1x128xf32>
      %cst_65 = arith.constant dense<0.000000e+00> : vector<128xf32>
      %133 = vector.multi_reduction <add>, %128, %cst_65 [0] : vector<8x128xf32> to vector<128xf32>
      %134 = vector.shape_cast %133 : vector<128xf32> to vector<1x128xf32>
      %135 = arith.addf %132, %134 : vector<1x128xf32>
      %136 = arith.index_cast %arg40 : i32 to index
      %c0_66 = arith.constant 0 : index
      %c0_67 = arith.constant 0 : index
      %137 = vector.load %arg36[%136, %c0_66, %c0_67] : memref<4x1x128xf32, #tpu.memory_space<vmem>>, vector<1x1x128xf32>
      %138 = vector.shape_cast %137 : vector<1x1x128xf32> to vector<1x128xf32>
      %139 = vector.shape_cast %135 : vector<1x128xf32> to vector<1x1x128xf32>
      tpu.vector_store %arg36[%136, %c0_66, %c0_67], %139 {strides = array<i32>} : memref<4x1x128xf32, #tpu.memory_space<vmem>>, vector<1x1x128xf32>,
      %140 = arith.truncf %128 : vector<8x128xf32> to vector<8x128xbf16>
      %cst_68 = arith.constant dense<0.000000e+00> : vector<8x128xf32>
      %141 = tpu.matmul %80, %140, %cst_68 {dimension_numbers = #tpu.dot_dimension_numbers<[0], [0], [1], [1], [0, 1, 1, 1], [], []>} : vector<8x8xbf16>, vector<8x128xbf16>, vector<8x128xf32> -> vector<8x128xf32>
      %142 = arith.index_cast %arg40 : i32 to index
      %c0_69 = arith.constant 0 : index
      %c0_70 = arith.constant 0 : index
      %143 = vector.load %arg37[%142, %c0_69, %c0_70] : memref<4x8x128xf32, #tpu.memory_space<vmem>>, vector<1x8x128xf32>
      %144 = vector.shape_cast %143 : vector<1x8x128xf32> to vector<8x128xf32>
      %145 = vector.broadcast %125 : vector<1x128xf32> to vector<8x128xf32>
      %146 = arith.mulf %145, %144 : vector<8x128xf32>
      %147 = arith.addf %146, %141 : vector<8x128xf32>
      %148 = arith.index_cast %arg40 : i32 to index
      %c0_71 = arith.constant 0 : index
      %c0_72 = arith.constant 0 : index
      %149 = vector.load %arg37[%148, %c0_71, %c0_72] : memref<4x8x128xf32, #tpu.memory_space<vmem>>, vector<1x8x128xf32>
      %150 = vector.shape_cast %149 : vector<1x8x128xf32> to vector<8x128xf32>
      %151 = vector.shape_cast %147 : vector<8x128xf32> to vector<1x8x128xf32>
      tpu.vector_store %arg37[%148, %c0_71, %c0_72], %151 {strides = array<i32>} : memref<4x8x128xf32, #tpu.memory_space<vmem>>, vector<1x8x128xf32>,
      %152 = arith.index_cast %arg40 : i32 to index
      %c0_73 = arith.constant 0 : index
      %c0_74 = arith.constant 0 : index
      %153 = vector.load %arg35[%152, %c0_73, %c0_74] : memref<4x1x128xf32, #tpu.memory_space<vmem>>, vector<1x1x128xf32>
      %154 = vector.shape_cast %153 : vector<1x1x128xf32> to vector<1x128xf32>
      %155 = vector.shape_cast %123 : vector<1x128xf32> to vector<1x1x128xf32>
      tpu.vector_store %arg35[%152, %c0_73, %c0_74], %155 {strides = array<i32>} : memref<4x1x128xf32, #tpu.memory_space<vmem>>, vector<1x1x128xf32>,
    }
    %c4_i32_20 = arith.constant 4 : i32
    %c0_21 = arith.constant 0 : index
    %c0_22 = arith.constant 0 : index
    %47 = vector.load %arg38[%c0_21, %c0_22] : memref<8x32xf32, #tpu.memory_space<vmem>>, vector<8x32xf32>
    %c0_23 = arith.constant 0 : index
    %c0_24 = arith.constant 0 : index
    %48 = vector.load %arg13[%c0_23, %c0_24] : memref<1x32xf32, #tpu.memory_space<vmem>>, vector<1x32xf32>
    %49 = vector.broadcast %48 : vector<1x32xf32> to vector<8x32xf32>
    %50 = arith.addf %47, %49 : vector<8x32xf32>
    %c0_25 = arith.constant 0 : index
    %c0_26 = arith.constant 0 : index
    %51 = vector.load %arg15[%c0_25, %c0_26] : memref<1x32xf32, #tpu.memory_space<vmem>>, vector<1x32xf32>
    %52 = vector.broadcast %51 : vector<1x32xf32> to vector<8x32xf32>
    %53 = arith.mulf %52, %50 : vector<8x32xf32>
    %54 = arith.addf %30, %53 : vector<8x32xf32>
    %c0_27 = arith.constant 0 : index
    %c0_28 = arith.constant 0 : index
    %c0_29 = arith.constant 0 : index
    %55 = vector.load %arg23[%c0_27, %c0_28, %c0_29] : memref<1x8x32xf32, #tpu.memory_space<vmem>>, vector<1x8x32xf32>
    %56 = vector.shape_cast %55 : vector<1x8x32xf32> to vector<8x32xf32>
    %57 = vector.shape_cast %54 : vector<8x32xf32> to vector<1x8x32xf32>
    tpu.vector_store %arg23[%c0_27, %c0_28, %c0_29], %57 {strides = array<i32>} : memref<1x8x32xf32, #tpu.memory_space<vmem>>, vector<1x8x32xf32>,
    %c1_i32_30 = arith.constant 1 : i32
    %58 = arith.cmpi eq, %arg1, %c1_i32_30 : i32
    %59 = arith.extui %58 : i1 to i32
    %c0_i32_31 = arith.constant 0 : i32
    %60 = arith.cmpi ne, %59, %c0_i32_31 : i32
    scf.if %60 {
      %cst_32 = arith.constant 0.000000e+00 : f32
      %61 = vector.broadcast %cst_32 : f32 to vector<128x32xf32>
      %c0_33 = arith.constant 0 : index
      %c0_34 = arith.constant 0 : index
      %62 = vector.load %arg39[%c0_33, %c0_34] : memref<128x32xf32, #tpu.memory_space<vmem>>, vector<128x32xf32>
      tpu.vector_store %arg39[%c0_33, %c0_34], %61 {strides = array<i32>} : memref<128x32xf32, #tpu.memory_space<vmem>>, vector<128x32xf32>,
      %c0_i32_35 = arith.constant 0 : i32
      %c4_i32_36 = arith.constant 4 : i32
      %63 = arith.addi %c0_i32_35, %c4_i32_36 : i32
      %c1_i32_37 = arith.constant 1 : i32
      scf.for %arg40 = %c0_i32_35 to %63 step %c1_i32_37  : i32 {
        %76 = arith.index_cast %arg40 : i32 to index
        %c0_50 = arith.constant 0 : index
        %c0_51 = arith.constant 0 : index
        %77 = vector.load %arg36[%76, %c0_50, %c0_51] : memref<4x1x128xf32, #tpu.memory_space<vmem>>, vector<1x1x128xf32>
        %78 = vector.shape_cast %77 : vector<1x1x128xf32> to vector<1x128xf32>
        %79 = tpu.reciprocal %78 {approx = true} : vector<1x128xf32> -> vector<1x128xf32>
        %80 = arith.index_cast %arg40 : i32 to index
        %c0_52 = arith.constant 0 : index
        %c0_53 = arith.constant 0 : index
        %81 = vector.load %arg37[%80, %c0_52, %c0_53] : memref<4x8x128xf32, #tpu.memory_space<vmem>>, vector<1x8x128xf32>
        %82 = vector.shape_cast %81 : vector<1x8x128xf32> to vector<8x128xf32>
        %83 = vector.broadcast %79 : vector<1x128xf32> to vector<8x128xf32>
        %84 = arith.mulf %82, %83 : vector<8x128xf32>
        %85 = arith.truncf %84 : vector<8x128xf32> to vector<8x128xbf16>
        %c0_54 = arith.constant 0 : index
        %c0_55 = arith.constant 0 : index
        %86 = vector.load %arg39[%c0_54, %c0_55] : memref<128x32xf32, #tpu.memory_space<vmem>>, vector<128x32xf32>
        %87 = arith.index_cast %arg40 : i32 to index
        %c0_56 = arith.constant 0 : index
        %c0_57 = arith.constant 0 : index
        %88 = vector.load %arg30[%87, %c0_56, %c0_57] : memref<4x8x32xbf16, #tpu.memory_space<vmem>>, vector<1x8x32xbf16>
        %89 = vector.shape_cast %88 : vector<1x8x32xbf16> to vector<8x32xbf16>
        %cst_58 = arith.constant dense<0.000000e+00> : vector<128x32xf32>
        %90 = tpu.matmul %85, %89, %cst_58 {dimension_numbers = #tpu.dot_dimension_numbers<[0], [0], [1], [1], [0, 1, 1, 1], [], []>} : vector<8x128xbf16>, vector<8x32xbf16>, vector<128x32xf32> -> vector<128x32xf32>
        %91 = arith.addf %86, %90 : vector<128x32xf32>
        %c0_59 = arith.constant 0 : index
        %c0_60 = arith.constant 0 : index
        %92 = vector.load %arg39[%c0_59, %c0_60] : memref<128x32xf32, #tpu.memory_space<vmem>>, vector<128x32xf32>
        tpu.vector_store %arg39[%c0_59, %c0_60], %91 {strides = array<i32>} : memref<128x32xf32, #tpu.memory_space<vmem>>, vector<128x32xf32>,
      }
      %c4_i32_38 = arith.constant 4 : i32
      %c0_39 = arith.constant 0 : index
      %c0_40 = arith.constant 0 : index
      %64 = vector.load %arg39[%c0_39, %c0_40] : memref<128x32xf32, #tpu.memory_space<vmem>>, vector<128x32xf32>
      %c0_41 = arith.constant 0 : index
      %c0_42 = arith.constant 0 : index
      %65 = vector.load %arg14[%c0_41, %c0_42] : memref<1x32xf32, #tpu.memory_space<vmem>>, vector<1x32xf32>
      %66 = vector.broadcast %65 : vector<1x32xf32> to vector<128x32xf32>
      %67 = arith.addf %64, %66 : vector<128x32xf32>
      %c0_43 = arith.constant 0 : index
      %c0_44 = arith.constant 0 : index
      %68 = vector.load %arg32[%c0_43, %c0_44] : memref<128x32xf32, #tpu.memory_space<vmem>>, vector<128x32xf32>
      %c0_45 = arith.constant 0 : index
      %c0_46 = arith.constant 0 : index
      %69 = vector.load %arg16[%c0_45, %c0_46] : memref<1x32xf32, #tpu.memory_space<vmem>>, vector<1x32xf32>
      %70 = vector.broadcast %69 : vector<1x32xf32> to vector<128x32xf32>
      %71 = arith.mulf %70, %67 : vector<128x32xf32>
      %72 = arith.addf %68, %71 : vector<128x32xf32>
      %c0_47 = arith.constant 0 : index
      %c0_48 = arith.constant 0 : index
      %c0_49 = arith.constant 0 : index
      %73 = vector.load %arg24[%c0_47, %c0_48, %c0_49] : memref<1x128x32xf32, #tpu.memory_space<vmem>>, vector<1x128x32xf32>
      %74 = vector.shape_cast %73 : vector<1x128x32xf32> to vector<128x32xf32>
      %75 = vector.shape_cast %72 : vector<128x32xf32> to vector<1x128x32xf32>
      tpu.vector_store %arg24[%c0_47, %c0_48, %c0_49], %75 {strides = array<i32>} : memref<1x128x32xf32, #tpu.memory_space<vmem>>, vector<1x128x32xf32>,
    } else {
    }
    return
  }
  func.func @transform_0(%arg0: i32, %arg1: i32) -> (i32, i32, i32) {
    %c0_i32 = arith.constant 0 : i32
    %c0_i32_0 = arith.constant 0 : i32
    return %arg0, %arg1, %c0_i32 : i32, i32, i32
  }
  func.func @transform_1(%arg0: i32, %arg1: i32) -> (i32, i32, i32) {
    %c0_i32 = arith.constant 0 : i32
    %c0_i32_0 = arith.constant 0 : i32
    %c0_i32_1 = arith.constant 0 : i32
    return %arg0, %c0_i32, %c0_i32_0 : i32, i32, i32
  }
  func.func @transform_2(%arg0: i32, %arg1: i32) -> (i32, i32, i32) {
    %c0_i32 = arith.constant 0 : i32
    %c0_i32_0 = arith.constant 0 : i32
    %c0_i32_1 = arith.constant 0 : i32
    return %arg0, %c0_i32, %c0_i32_0 : i32, i32, i32
  }
  func.func @transform_3(%arg0: i32, %arg1: i32) -> (i32, i32) {
    %c0_i32 = arith.constant 0 : i32
    %c0_i32_0 = arith.constant 0 : i32
    %c0_i32_1 = arith.constant 0 : i32
    return %c0_i32, %c0_i32_0 : i32, i32
  }
  func.func @transform_4(%arg0: i32, %arg1: i32) -> (i32, i32) {
    %c0_i32 = arith.constant 0 : i32
    %c0_i32_0 = arith.constant 0 : i32
    %c0_i32_1 = arith.constant 0 : i32
    return %c0_i32, %c0_i32_0 : i32, i32
  }
  func.func @transform_5(%arg0: i32, %arg1: i32) -> (i32, i32) {
    %c0_i32 = arith.constant 0 : i32
    %c0_i32_0 = arith.constant 0 : i32
    %c0_i32_1 = arith.constant 0 : i32
    return %c0_i32, %c0_i32_0 : i32, i32
  }
  func.func @transform_6(%arg0: i32, %arg1: i32) -> (i32, i32) {
    %c0_i32 = arith.constant 0 : i32
    %c0_i32_0 = arith.constant 0 : i32
    %c0_i32_1 = arith.constant 0 : i32
    return %c0_i32, %c0_i32_0 : i32, i32
  }
  func.func @transform_7(%arg0: i32, %arg1: i32) -> (i32, i32, i32) {
    %c0_i32 = arith.constant 0 : i32
    %c0_i32_0 = arith.constant 0 : i32
    %c0_i32_1 = arith.constant 0 : i32
    %c0_i32_2 = arith.constant 0 : i32
    return %c0_i32, %c0_i32_0, %c0_i32_1 : i32, i32, i32
  }
  func.func @transform_8(%arg0: i32, %arg1: i32) -> (i32, i32, i32) {
    %c0_i32 = arith.constant 0 : i32
    %c0_i32_0 = arith.constant 0 : i32
    %c0_i32_1 = arith.constant 0 : i32
    %c0_i32_2 = arith.constant 0 : i32
    return %c0_i32, %c0_i32_0, %c0_i32_1 : i32, i32, i32
  }
  func.func @transform_9(%arg0: i32, %arg1: i32) -> (i32, i32, i32) {
    %c0_i32 = arith.constant 0 : i32
    %c0_i32_0 = arith.constant 0 : i32
    %c0_i32_1 = arith.constant 0 : i32
    %c0_i32_2 = arith.constant 0 : i32
    return %c0_i32, %c0_i32_0, %c0_i32_1 : i32, i32, i32
  }
  func.func @transform_10(%arg0: i32, %arg1: i32) -> (i32, i32, i32) {
    %c0_i32 = arith.constant 0 : i32
    %c0_i32_0 = arith.constant 0 : i32
    %c0_i32_1 = arith.constant 0 : i32
    %c0_i32_2 = arith.constant 0 : i32
    return %c0_i32, %c0_i32_0, %c0_i32_1 : i32, i32, i32
  }
  func.func @transform_11(%arg0: i32, %arg1: i32) -> (i32, i32) {
    %c0_i32 = arith.constant 0 : i32
    %c0_i32_0 = arith.constant 0 : i32
    %c0_i32_1 = arith.constant 0 : i32
    return %c0_i32, %c0_i32_0 : i32, i32
  }
  func.func @transform_12(%arg0: i32, %arg1: i32) -> (i32, i32) {
    %c0_i32 = arith.constant 0 : i32
    %c0_i32_0 = arith.constant 0 : i32
    %c0_i32_1 = arith.constant 0 : i32
    return %c0_i32, %c0_i32_0 : i32, i32
  }
  func.func @transform_13(%arg0: i32, %arg1: i32) -> (i32, i32) {
    %c0_i32 = arith.constant 0 : i32
    %c0_i32_0 = arith.constant 0 : i32
    %c0_i32_1 = arith.constant 0 : i32
    return %c0_i32, %c0_i32_0 : i32, i32
  }
  func.func @transform_14(%arg0: i32, %arg1: i32) -> (i32, i32) {
    %c0_i32 = arith.constant 0 : i32
    %c0_i32_0 = arith.constant 0 : i32
    %c0_i32_1 = arith.constant 0 : i32
    return %c0_i32, %c0_i32_0 : i32, i32
  }
  func.func @transform_21(%arg0: i32, %arg1: i32) -> (i32, i32, i32) {
    %c0_i32 = arith.constant 0 : i32
    %c0_i32_0 = arith.constant 0 : i32
    return %arg0, %arg1, %c0_i32 : i32, i32, i32
  }
  func.func @transform_22(%arg0: i32, %arg1: i32) -> (i32, i32, i32) {
    %c0_i32 = arith.constant 0 : i32
    %c0_i32_0 = arith.constant 0 : i32
    %c0_i32_1 = arith.constant 0 : i32
    return %arg0, %c0_i32, %c0_i32_0 : i32, i32, i32
  }
}

</mosaic_0001>

<llo_original>
// kernel: tpu_custom_call.1
$region0: #{tpu_custom_call.1}
  #allocation0 [shape = 'u32[]', space=smem, size = 0x4, offset = 0x4, fixed_abs, tag = 'smem constant byte address 0x4 - core index']
  #allocation1 [shape = 'u32[144,128]{1,0:T(1,128)}', space=vmem, size = 0x12000, scoped, tag = 'internal scratch']
  #allocation2 [shape = 'bf16[4,32,8]{2,1,0:T(16,128)(2,1)}', space=vmem, size = 0x8000, scoped, tag = 'scratch operand']
  #allocation3 [shape = 'bf16[4,32,8]{2,1,0:T(16,128)(2,1)}', space=vmem, size = 0x8000, scoped, tag = 'scratch operand']
  #allocation4 [shape = 'bf16[4,32,8]{2,1,0:T(16,128)(2,1)}', space=vmem, size = 0x8000, scoped, tag = 'scratch operand']
  #allocation5 [shape = 'bf16[4,32,8]{2,1,0:T(16,128)(2,1)}', space=vmem, size = 0x8000, scoped, tag = 'scratch operand']
  #allocation6 [shape = 'bf16[4,8,32]{2,1,0:T(8,128)(2,1)}', space=vmem, size = 0x2000, scoped, tag = 'scratch operand']
  #allocation7 [shape = 'bf16[4,8,32]{2,1,0:T(8,128)(2,1)}', space=vmem, size = 0x2000, scoped, tag = 'scratch operand']
  #allocation8 [shape = 's32[6]{0}', space=sflag, size = 0x18, scoped, tag = 'scratch operand']
  #allocation9 [shape = 'f32[128,32]{1,0:T(8,128)}', space=vmem, size = 0x10000, scoped, tag = 'scratch operand']
  #allocation10 [shape = 'bf16[4,128,8]{2,1,0:T(16,128)(2,1)}', space=vmem, size = 0x20000, scoped, tag = 'scratch operand']
  #allocation11 [shape = 'bf16[4,128,8]{2,1,0:T(16,128)(2,1)}', space=vmem, size = 0x20000, scoped, tag = 'scratch operand']
  #allocation12 [shape = 'f32[4,1,128]{2,1,0:T(1,128)}', space=vmem, size = 0x800, scoped, tag = 'scratch operand']
  #allocation13 [shape = 'f32[4,1,128]{2,1,0:T(1,128)}', space=vmem, size = 0x800, scoped, tag = 'scratch operand']
  #allocation14 [shape = 'f32[4,8,128]{2,1,0:T(8,128)}', space=vmem, size = 0x4000, scoped, tag = 'scratch operand']
  #allocation15 [shape = 'f32[8,32]{1,0:T(8,128)}', space=vmem, size = 0x1000, scoped, tag = 'scratch operand']
  #allocation16 [shape = 'f32[128,32]{1,0:T(8,128)}', space=vmem, size = 0x10000, scoped, tag = 'scratch operand']
  #allocation19 [shape = 's32[]', space=sflag, size = 0x4, offset = 0, fixed_abs, tag = 'sflag constant byte address 0x0 - dummy sync flag']
  #allocation20 [shape = 's32[]', space=sflag, size = 0x4, offset = 0, fixed_abs, tag = 'sflag constant byte address 0x0 - dummy sync flag']
  #allocation21 [shape = 's32[]', space=sflag, size = 0x4, offset = 0, fixed_abs, tag = 'sflag constant byte address 0x0 - dummy sync flag']
  #allocation22 [shape = 's32[]', space=sflag, size = 0x4, offset = 0, fixed_abs, tag = 'sflag constant byte address 0x0 - dummy sync flag']
  #allocation23 [shape = 's32[]', space=sflag, size = 0x4, offset = 0, fixed_abs, tag = 'sflag constant byte address 0x0 - dummy sync flag']
  #allocation24 [shape = 's32[]', space=sflag, size = 0x4, offset = 0, fixed_abs, tag = 'sflag constant byte address 0x0 - dummy sync flag']
  %s0 = inlined_call_operand.vmem [shape: f32[2,16,32], index: 0, kind: input, shape index: {}]
  %s1 = inlined_call_operand.vmem [shape: f32[2,128,32], index: 1, kind: input, shape index: {}]
  %s2 = inlined_call_operand.vmem [shape: f32[2,1,128], index: 2, kind: input, shape index: {}]
  %s3 = inlined_call_operand.vmem [shape: f32[1,32], index: 3, kind: input, shape index: {}]
  %s4 = inlined_call_operand.vmem [shape: f32[1,32], index: 4, kind: input, shape index: {}]
  %s5 = inlined_call_operand.vmem [shape: f32[1,32], index: 5, kind: input, shape index: {}]
  %s6 = inlined_call_operand.vmem [shape: f32[1,32], index: 6, kind: input, shape index: {}]
  %s7 = inlined_call_operand.vmem [shape: f32[4,1,8], index: 7, kind: input, shape index: {}]
  %s8 = inlined_call_operand.vmem [shape: f32[4,1,8], index: 8, kind: input, shape index: {}]
  %s9 = inlined_call_operand.vmem [shape: f32[4,1,8], index: 9, kind: input, shape index: {}]
  %s10 = inlined_call_operand.vmem [shape: f32[4,1,8], index: 10, kind: input, shape index: {}]
  %s11 = inlined_call_operand.vmem [shape: f32[1,32], index: 11, kind: input, shape index: {}]
  %s12 = inlined_call_operand.vmem [shape: f32[1,32], index: 12, kind: input, shape index: {}]
  %s13 = inlined_call_operand.vmem [shape: f32[1,32], index: 13, kind: input, shape index: {}]
  %s14 = inlined_call_operand.vmem [shape: f32[1,32], index: 14, kind: input, shape index: {}]
  %s15 = inlined_call_operand.vmem [shape: bf16[4,32,8], index: 15, kind: input, shape index: {}]
  %s16 = inlined_call_operand.vmem [shape: bf16[4,32,8], index: 16, kind: input, shape index: {}]
  %s17 = inlined_call_operand.vmem [shape: bf16[4,32,8], index: 17, kind: input, shape index: {}]
  %s18 = inlined_call_operand.vmem [shape: bf16[4,32,8], index: 18, kind: input, shape index: {}]
  %s19 = inlined_call_operand.vmem [shape: bf16[4,8,32], index: 19, kind: input, shape index: {}]
  %s20 = inlined_call_operand.vmem [shape: bf16[4,8,32], index: 20, kind: input, shape index: {}]
  %s21 = inlined_call_operand.hbm [shape: f32[2,16,32], index: 21, kind: output, shape index: {0}]
  %s22 = inlined_call_operand.vmem [shape: f32[2,128,32], index: 22, kind: output, shape index: {1}]
  %23 = xla_tuple %s21, %s22
  %s24 = sld [smem:[#allocation0]]
  $region334: #{tpu_custom_call.1} parent=0
    _
  %s26 = ssub.s32 1, %s24
  %s27 = scalar_select 0, %s26, %s24
  $region1: #{tpu_custom_call.1} parent=0
    #allocation17 [shape = 'u8[8192]{0}', space=vmem, size = 0x2000, scoped, tag = 'output window, operand 0']
    #allocation18 [shape = 's32[2]{0}', space=sflag, size = 0x8, scoped, tag = 'scoped memory for tpu_custom_call.1']
    %28 = vsyncpa [#allocation18], 0
    %s29 = scalar_lea.sflag [#allocation18], 1
    %30 = vsyncpa %s29, 0
    loop: start=0, step=1, limit=6
    $region2: #{tpu_custom_call.1} parent=1 // loop_pre_header
      _
    $region3: #{tpu_custom_call.1} parent=1 // loop_header
      %s32 = sphi 0, %s36
      %p33 = scmp.ge.s32.totalorder %s32, 6
      %s39 = sphi 0, %s51
      %s40 = sphi 0, %s47
      %s41 = sphi 0, %s39
      %s42 = sphi 0, %s40
      %s43 = sphi 0, %s41
      %s44 = sphi 0, %s42
      %s56 = sphi 0, %s58
      %s59 = sphi 0, %s56
      %s60 = sphi 0, %s59
      %s76 = sphi 0, %s60
      %s82 = sphi 0, %s84
      %s85 = sphi 0, %s82
      %s86 = sphi 0, %s85
      %s102 = sphi 0, %s86
      %s108 = sphi 0, %s110
      %s111 = sphi 0, %s108
      %s112 = sphi 0, %s111
      %s128 = sphi 0, %s112
      %s132 = sphi 0, %s132
      %s134 = sphi 0, %s132
      %s135 = sphi 0, %s134
      %s149 = sphi 0, %s135
      %s153 = sphi 0, %s153
      %s155 = sphi 0, %s153
      %s156 = sphi 0, %s155
      %s170 = sphi 0, %s156
      %s174 = sphi 0, %s174
      %s176 = sphi 0, %s174
      %s177 = sphi 0, %s176
      %s191 = sphi 0, %s177
      %s195 = sphi 0, %s195
      %s197 = sphi 0, %s195
      %s198 = sphi 0, %s197
      %s212 = sphi 0, %s198
      %s216 = sphi 0, %s216
      %s218 = sphi 0, %s216
      %s219 = sphi 0, %s218
      %s233 = sphi 0, %s219
      %s237 = sphi 0, %s237
      %s239 = sphi 0, %s237
      %s240 = sphi 0, %s239
      %s254 = sphi 0, %s240
      %s258 = sphi 0, %s258
      %s260 = sphi 0, %s258
      %s261 = sphi 0, %s260
      %s275 = sphi 0, %s261
      %s279 = sphi 0, %s279
      %s281 = sphi 0, %s279
      %s282 = sphi 0, %s281
      %s296 = sphi 0, %s282
      %s300 = sphi 0, %s300
      %s302 = sphi 0, %s300
      %s303 = sphi 0, %s302
      %s317 = sphi 0, %s303
      %s321 = sphi 0, %s321
      %s323 = sphi 0, %s321
      %s324 = sphi 0, %s323
      %s338 = sphi 0, %s324
      %s342 = sphi 0, %s342
      %s344 = sphi 0, %s342
      %s345 = sphi 0, %s344
      %s359 = sphi 0, %s345
      %s363 = sphi 0, %s363
      %s365 = sphi 0, %s363
      %s366 = sphi 0, %s365
      %s380 = sphi 0, %s366
      %s388 = sphi 0, %s390
      %s391 = sphi 0, %s388
      %s392 = sphi 0, %s391
      %s408 = sphi 0, %s392
      %s414 = sphi 0, %s416
      %s417 = sphi 0, %s414
      %s418 = sphi 0, %s417
      %s434 = sphi 0, %s418
    $region4: #{tpu_custom_call.1} parent=1 // loop_header_branch
      %35 = sbr.rel (%p33) target = $region8
    $region5: #{tpu_custom_call.1} parent=1 // loop_body
      %s37 = ssub.s32 %s32, 1
      %s38 = ssub.s32 %s32, 2
      %s45 = sadd.s32 1, %s40
      %p46 = scmp.ge.s32.totalorder %s45, 2
      %s47 = scalar_select %p46, 0, %s45
      %s48 = sadd.s32 1, %s39
      %s49 = scalar_select %p46, %s48, %s39
      %p50 = scmp.ge.s32.totalorder %s49, 2
      %s51 = scalar_select %p50, 0, %s49
      %s52 = ssub.s32 %s39, %s51
      %s53 = ssub.s32 %s40, %s47
      %s54 = sor.u32 %s52, %s53
      %p55 = scmp.eq.s32.totalorder %s54, 0
      %s57 = sadd.s32 %s56, 1
      %s58 = scalar_select %p55, %s56, %s57
      %p61 = pneg %p55
      %p62 = scmp.eq.s32.totalorder %s32, 3
      %p63 = por %p61, %p62
      %p64 = scmp.ne.s32.totalorder %s56, %s59
      %p65 = scmp.eq.s32.totalorder %s32, 0
      %p66 = por %p64, %p65
      %p67 = scmp.ne.s32.totalorder %s56, %s59
      %p68 = scmp.eq.s32.totalorder %s37, 3
      %p69 = por %p67, %p68
      %p70 = scmp.ne.s32.totalorder %s59, %s60
      %p71 = scmp.eq.s32.totalorder %s37, 0
      %p72 = por %p70, %p71
      %p73 = scmp.ne.s32.totalorder %s59, %s60
      %p74 = scmp.eq.s32.totalorder %s38, 3
      %p75 = por %p73, %p74
      %p77 = scmp.ne.s32.totalorder %s60, %s76
      %p78 = scmp.eq.s32.totalorder %s38, 0
      %p79 = por %p77, %p78
      %s80 = ssub.s32 %s39, %s51
      %p81 = scmp.eq.s32.totalorder %s80, 0
      %s83 = sadd.s32 %s82, 1
      %s84 = scalar_select %p81, %s82, %s83
      %p87 = pneg %p81
      %p88 = scmp.eq.s32.totalorder %s32, 3
      %p89 = por %p87, %p88
      %p90 = scmp.ne.s32.totalorder %s82, %s85
      %p91 = scmp.eq.s32.totalorder %s32, 0
      %p92 = por %p90, %p91
      %p93 = scmp.ne.s32.totalorder %s82, %s85
      %p94 = scmp.eq.s32.totalorder %s37, 3
      %p95 = por %p93, %p94
      %p96 = scmp.ne.s32.totalorder %s85, %s86
      %p97 = scmp.eq.s32.totalorder %s37, 0
      %p98 = por %p96, %p97
      %p99 = scmp.ne.s32.totalorder %s85, %s86
      %p100 = scmp.eq.s32.totalorder %s38, 3
      %p101 = por %p99, %p100
      %p103 = scmp.ne.s32.totalorder %s86, %s102
      %p104 = scmp.eq.s32.totalorder %s38, 0
      %p105 = por %p103, %p104
      %s106 = ssub.s32 %s39, %s51
      %p107 = scmp.eq.s32.totalorder %s106, 0
      %s109 = sadd.s32 %s108, 1
      %s110 = scalar_select %p107, %s108, %s109
      %p113 = pneg %p107
      %p114 = scmp.eq.s32.totalorder %s32, 3
      %p115 = por %p113, %p114
      %p116 = scmp.ne.s32.totalorder %s108, %s111
      %p117 = scmp.eq.s32.totalorder %s32, 0
      %p118 = por %p116, %p117
      %p119 = scmp.ne.s32.totalorder %s108, %s111
      %p120 = scmp.eq.s32.totalorder %s37, 3
      %p121 = por %p119, %p120
      %p122 = scmp.ne.s32.totalorder %s111, %s112
      %p123 = scmp.eq.s32.totalorder %s37, 0
      %p124 = por %p122, %p123
      %p125 = scmp.ne.s32.totalorder %s111, %s112
      %p126 = scmp.eq.s32.totalorder %s38, 3
      %p127 = por %p125, %p126
      %p129 = scmp.ne.s32.totalorder %s112, %s128
      %p130 = scmp.eq.s32.totalorder %s38, 0
      %p131 = por %p129, %p130
      %s133 = sadd.s32 %s132, 1
      %p136 = scmp.eq.s32.totalorder %s32, 3
      %p137 = scmp.ne.s32.totalorder %s132, %s134
      %p138 = scmp.eq.s32.totalorder %s32, 0
      %p139 = por %p137, %p138
      %p140 = scmp.ne.s32.totalorder %s132, %s134
      %p141 = scmp.eq.s32.totalorder %s37, 3
      %p142 = por %p140, %p141
      %p143 = scmp.ne.s32.totalorder %s134, %s135
      %p144 = scmp.eq.s32.totalorder %s37, 0
      %p145 = por %p143, %p144
      %p146 = scmp.ne.s32.totalorder %s134, %s135
      %p147 = scmp.eq.s32.totalorder %s38, 3
      %p148 = por %p146, %p147
      %p150 = scmp.ne.s32.totalorder %s135, %s149
      %p151 = scmp.eq.s32.totalorder %s38, 0
      %p152 = por %p150, %p151
      %s154 = sadd.s32 %s153, 1
      %p157 = scmp.eq.s32.totalorder %s32, 3
      %p158 = scmp.ne.s32.totalorder %s153, %s155
      %p159 = scmp.eq.s32.totalorder %s32, 0
      %p160 = por %p158, %p159
      %p161 = scmp.ne.s32.totalorder %s153, %s155
      %p162 = scmp.eq.s32.totalorder %s37, 3
      %p163 = por %p161, %p162
      %p164 = scmp.ne.s32.totalorder %s155, %s156
      %p165 = scmp.eq.s32.totalorder %s37, 0
      %p166 = por %p164, %p165
      %p167 = scmp.ne.s32.totalorder %s155, %s156
      %p168 = scmp.eq.s32.totalorder %s38, 3
      %p169 = por %p167, %p168
      %p171 = scmp.ne.s32.totalorder %s156, %s170
      %p172 = scmp.eq.s32.totalorder %s38, 0
      %p173 = por %p171, %p172
      %s175 = sadd.s32 %s174, 1
      %p178 = scmp.eq.s32.totalorder %s32, 3
      %p179 = scmp.ne.s32.totalorder %s174, %s176
      %p180 = scmp.eq.s32.totalorder %s32, 0
      %p181 = por %p179, %p180
      %p182 = scmp.ne.s32.totalorder %s174, %s176
      %p183 = scmp.eq.s32.totalorder %s37, 3
      %p184 = por %p182, %p183
      %p185 = scmp.ne.s32.totalorder %s176, %s177
      %p186 = scmp.eq.s32.totalorder %s37, 0
      %p187 = por %p185, %p186
      %p188 = scmp.ne.s32.totalorder %s176, %s177
      %p189 = scmp.eq.s32.totalorder %s38, 3
      %p190 = por %p188, %p189
      %p192 = scmp.ne.s32.totalorder %s177, %s191
      %p193 = scmp.eq.s32.totalorder %s38, 0
      %p194 = por %p192, %p193
      %s196 = sadd.s32 %s195, 1
      %p199 = scmp.eq.s32.totalorder %s32, 3
      %p200 = scmp.ne.s32.totalorder %s195, %s197
      %p201 = scmp.eq.s32.totalorder %s32, 0
      %p202 = por %p200, %p201
      %p203 = scmp.ne.s32.totalorder %s195, %s197
      %p204 = scmp.eq.s32.totalorder %s37, 3
      %p205 = por %p203, %p204
      %p206 = scmp.ne.s32.totalorder %s197, %s198
      %p207 = scmp.eq.s32.totalorder %s37, 0
      %p208 = por %p206, %p207
      %p209 = scmp.ne.s32.totalorder %s197, %s198
      %p210 = scmp.eq.s32.totalorder %s38, 3
      %p211 = por %p209, %p210
      %p213 = scmp.ne.s32.totalorder %s198, %s212
      %p214 = scmp.eq.s32.totalorder %s38, 0
      %p215 = por %p213, %p214
      %s217 = sadd.s32 %s216, 1
      %p220 = scmp.eq.s32.totalorder %s32, 3
      %p221 = scmp.ne.s32.totalorder %s216, %s218
      %p222 = scmp.eq.s32.totalorder %s32, 0
      %p223 = por %p221, %p222
      %p224 = scmp.ne.s32.totalorder %s216, %s218
      %p225 = scmp.eq.s32.totalorder %s37, 3
      %p226 = por %p224, %p225
      %p227 = scmp.ne.s32.totalorder %s218, %s219
      %p228 = scmp.eq.s32.totalorder %s37, 0
      %p229 = por %p227, %p228
      %p230 = scmp.ne.s32.totalorder %s218, %s219
      %p231 = scmp.eq.s32.totalorder %s38, 3
      %p232 = por %p230, %p231
      %p234 = scmp.ne.s32.totalorder %s219, %s233
      %p235 = scmp.eq.s32.totalorder %s38, 0
      %p236 = por %p234, %p235
      %s238 = sadd.s32 %s237, 1
      %p241 = scmp.eq.s32.totalorder %s32, 3
      %p242 = scmp.ne.s32.totalorder %s237, %s239
      %p243 = scmp.eq.s32.totalorder %s32, 0
      %p244 = por %p242, %p243
      %p245 = scmp.ne.s32.totalorder %s237, %s239
      %p246 = scmp.eq.s32.totalorder %s37, 3
      %p247 = por %p245, %p246
      %p248 = scmp.ne.s32.totalorder %s239, %s240
      %p249 = scmp.eq.s32.totalorder %s37, 0
      %p250 = por %p248, %p249
      %p251 = scmp.ne.s32.totalorder %s239, %s240
      %p252 = scmp.eq.s32.totalorder %s38, 3
      %p253 = por %p251, %p252
      %p255 = scmp.ne.s32.totalorder %s240, %s254
      %p256 = scmp.eq.s32.totalorder %s38, 0
      %p257 = por %p255, %p256
      %s259 = sadd.s32 %s258, 1
      %p262 = scmp.eq.s32.totalorder %s32, 3
      %p263 = scmp.ne.s32.totalorder %s258, %s260
      %p264 = scmp.eq.s32.totalorder %s32, 0
      %p265 = por %p263, %p264
      %p266 = scmp.ne.s32.totalorder %s258, %s260
      %p267 = scmp.eq.s32.totalorder %s37, 3
      %p268 = por %p266, %p267
      %p269 = scmp.ne.s32.totalorder %s260, %s261
      %p270 = scmp.eq.s32.totalorder %s37, 0
      %p271 = por %p269, %p270
      %p272 = scmp.ne.s32.totalorder %s260, %s261
      %p273 = scmp.eq.s32.totalorder %s38, 3
      %p274 = por %p272, %p273
      %p276 = scmp.ne.s32.totalorder %s261, %s275
      %p277 = scmp.eq.s32.totalorder %s38, 0
      %p278 = por %p276, %p277
      %s280 = sadd.s32 %s279, 1
      %p283 = scmp.eq.s32.totalorder %s32, 3
      %p284 = scmp.ne.s32.totalorder %s279, %s281
      %p285 = scmp.eq.s32.totalorder %s32, 0
      %p286 = por %p284, %p285
      %p287 = scmp.ne.s32.totalorder %s279, %s281
      %p288 = scmp.eq.s32.totalorder %s37, 3
      %p289 = por %p287, %p288
      %p290 = scmp.ne.s32.totalorder %s281, %s282
      %p291 = scmp.eq.s32.totalorder %s37, 0
      %p292 = por %p290, %p291
      %p293 = scmp.ne.s32.totalorder %s281, %s282
      %p294 = scmp.eq.s32.totalorder %s38, 3
      %p295 = por %p293, %p294
      %p297 = scmp.ne.s32.totalorder %s282, %s296
      %p298 = scmp.eq.s32.totalorder %s38, 0
      %p299 = por %p297, %p298
      %s301 = sadd.s32 %s300, 1
      %p304 = scmp.eq.s32.totalorder %s32, 3
      %p305 = scmp.ne.s32.totalorder %s300, %s302
      %p306 = scmp.eq.s32.totalorder %s32, 0
      %p307 = por %p305, %p306
      %p308 = scmp.ne.s32.totalorder %s300, %s302
      %p309 = scmp.eq.s32.totalorder %s37, 3
      %p310 = por %p308, %p309
      %p311 = scmp.ne.s32.totalorder %s302, %s303
      %p312 = scmp.eq.s32.totalorder %s37, 0
      %p313 = por %p311, %p312
      %p314 = scmp.ne.s32.totalorder %s302, %s303
      %p315 = scmp.eq.s32.totalorder %s38, 3
      %p316 = por %p314, %p315
      %p318 = scmp.ne.s32.totalorder %s303, %s317
      %p319 = scmp.eq.s32.totalorder %s38, 0
      %p320 = por %p318, %p319
      %s322 = sadd.s32 %s321, 1
      %p325 = scmp.eq.s32.totalorder %s32, 3
      %p326 = scmp.ne.s32.totalorder %s321, %s323
      %p327 = scmp.eq.s32.totalorder %s32, 0
      %p328 = por %p326, %p327
      %p329 = scmp.ne.s32.totalorder %s321, %s323
      %p330 = scmp.eq.s32.totalorder %s37, 3
      %p331 = por %p329, %p330
      %p332 = scmp.ne.s32.totalorder %s323, %s324
      %p333 = scmp.eq.s32.totalorder %s37, 0
      %p334 = por %p332, %p333
      %p335 = scmp.ne.s32.totalorder %s323, %s324
      %p336 = scmp.eq.s32.totalorder %s38, 3
      %p337 = por %p335, %p336
      %p339 = scmp.ne.s32.totalorder %s324, %s338
      %p340 = scmp.eq.s32.totalorder %s38, 0
      %p341 = por %p339, %p340
      %s343 = sadd.s32 %s342, 1
      %p346 = scmp.eq.s32.totalorder %s32, 3
      %p347 = scmp.ne.s32.totalorder %s342, %s344
      %p348 = scmp.eq.s32.totalorder %s32, 0
      %p349 = por %p347, %p348
      %p350 = scmp.ne.s32.totalorder %s342, %s344
      %p351 = scmp.eq.s32.totalorder %s37, 3
      %p352 = por %p350, %p351
      %p353 = scmp.ne.s32.totalorder %s344, %s345
      %p354 = scmp.eq.s32.totalorder %s37, 0
      %p355 = por %p353, %p354
      %p356 = scmp.ne.s32.totalorder %s344, %s345
      %p357 = scmp.eq.s32.totalorder %s38, 3
      %p358 = por %p356, %p357
      %p360 = scmp.ne.s32.totalorder %s345, %s359
      %p361 = scmp.eq.s32.totalorder %s38, 0
      %p362 = por %p360, %p361
      %s364 = sadd.s32 %s363, 1
      %p367 = scmp.eq.s32.totalorder %s32, 3
      %p368 = scmp.ne.s32.totalorder %s363, %s365
      %p369 = scmp.eq.s32.totalorder %s32, 0
      %p370 = por %p368, %p369
      %p371 = scmp.ne.s32.totalorder %s363, %s365
      %p372 = scmp.eq.s32.totalorder %s37, 3
      %p373 = por %p371, %p372
      %p374 = scmp.ne.s32.totalorder %s365, %s366
      %p375 = scmp.eq.s32.totalorder %s37, 0
      %p376 = por %p374, %p375
      %p377 = scmp.ne.s32.totalorder %s365, %s366
      %p378 = scmp.eq.s32.totalorder %s38, 3
      %p379 = por %p377, %p378
      %p381 = scmp.ne.s32.totalorder %s366, %s380
      %p382 = scmp.eq.s32.totalorder %s38, 0
      %p383 = por %p381, %p382
      %s384 = ssub.s32 %s39, %s51
      %s385 = ssub.s32 %s40, %s47
      %s386 = sor.u32 %s384, %s385
      %p387 = scmp.eq.s32.totalorder %s386, 0
      %s389 = sadd.s32 %s388, 1
      %s390 = scalar_select %p387, %s388, %s389
      %p393 = pneg %p387
      %p394 = scmp.eq.s32.totalorder %s32, 3
      %p395 = por %p393, %p394
      %p396 = scmp.ne.s32.totalorder %s388, %s391
      %p397 = scmp.eq.s32.totalorder %s32, 0
      %p398 = por %p396, %p397
      %p399 = scmp.ne.s32.totalorder %s388, %s391
      %p400 = scmp.eq.s32.totalorder %s37, 3
      %p401 = por %p399, %p400
      %p402 = scmp.ne.s32.totalorder %s391, %s392
      %p403 = scmp.eq.s32.totalorder %s37, 0
      %p404 = por %p402, %p403
      %p405 = scmp.ne.s32.totalorder %s391, %s392
      %p406 = scmp.eq.s32.totalorder %s38, 3
      %p407 = por %p405, %p406
      %p409 = scmp.ne.s32.totalorder %s392, %s408
      %p410 = scmp.eq.s32.totalorder %s38, 0
      %p411 = por %p409, %p410
      %s412 = ssub.s32 %s39, %s51
      %p413 = scmp.eq.s32.totalorder %s412, 0
      %s415 = sadd.s32 %s414, 1
      %s416 = scalar_select %p413, %s414, %s415
      %p419 = pneg %p413
      %p420 = scmp.eq.s32.totalorder %s32, 3
      %p421 = por %p419, %p420
      %p422 = scmp.ne.s32.totalorder %s414, %s417
      %p423 = scmp.eq.s32.totalorder %s32, 0
      %p424 = por %p422, %p423
      %p425 = scmp.ne.s32.totalorder %s414, %s417
      %p426 = scmp.eq.s32.totalorder %s37, 3
      %p427 = por %p425, %p426
      %p428 = scmp.ne.s32.totalorder %s417, %s418
      %p429 = scmp.eq.s32.totalorder %s37, 0
      %p430 = por %p428, %p429
      %p431 = scmp.ne.s32.totalorder %s417, %s418
      %p432 = scmp.eq.s32.totalorder %s38, 3
      %p433 = por %p431, %p432
      %p435 = scmp.ne.s32.totalorder %s418, %s434
      %p436 = scmp.eq.s32.totalorder %s38, 0
      %p437 = por %p435, %p436
      %p438 = scmp.le.s32.totalorder 1, %s32
      %p439 = scmp.lt.s32.totalorder %s32, 5
      %p440 = pnand %p438, %p439
      %p441 = pneg %p440
      // Predicated region
      $region9: #{tpu_custom_call.1} parent=5 // pred_check
        _
      $region10: #{tpu_custom_call.1} parent=5 // pred_check_branch
        %443 = sbr.rel (%p440) target = $region12
      $region11: #{tpu_custom_call.1} parent=5 // pred_region
        %s444 = ssub.s32 %s32, 1
        // Predicated region
        $region13: #{tpu_custom_call.1} parent=11 // pred_check
          %p445 = pneg %p145
        $region14: #{tpu_custom_call.1} parent=11 // pred_check_branch
          %447 = sbr.rel (%p445) target = $region16
        $region15: #{tpu_custom_call.1} parent=11 // pred_region
          _
        $region16: #{tpu_custom_call.1} parent=11 // pred_fallthru
          _
        // Predicated region
        $region17: #{tpu_custom_call.1} parent=11 // pred_check
          %p448 = pneg %p166
        $region18: #{tpu_custom_call.1} parent=11 // pred_check_branch
          %450 = sbr.rel (%p448) target = $region20
        $region19: #{tpu_custom_call.1} parent=11 // pred_region
          _
        $region20: #{tpu_custom_call.1} parent=11 // pred_fallthru
          _
        // Predicated region
        $region21: #{tpu_custom_call.1} parent=11 // pred_check
          %p451 = pneg %p187
        $region22: #{tpu_custom_call.1} parent=11 // pred_check_branch
          %453 = sbr.rel (%p451) target = $region24
        $region23: #{tpu_custom_call.1} parent=11 // pred_region
          _
        $region24: #{tpu_custom_call.1} parent=11 // pred_fallthru
          _
        // Predicated region
        $region25: #{tpu_custom_call.1} parent=11 // pred_check
          %p454 = pneg %p208
        $region26: #{tpu_custom_call.1} parent=11 // pred_check_branch
          %456 = sbr.rel (%p454) target = $region28
        $region27: #{tpu_custom_call.1} parent=11 // pred_region
          _
        $region28: #{tpu_custom_call.1} parent=11 // pred_fallthru
          _
        // Predicated region
        $region29: #{tpu_custom_call.1} parent=11 // pred_check
          %p457 = pneg %p229
        $region30: #{tpu_custom_call.1} parent=11 // pred_check_branch
          %459 = sbr.rel (%p457) target = $region32
        $region31: #{tpu_custom_call.1} parent=11 // pred_region
          _
        $region32: #{tpu_custom_call.1} parent=11 // pred_fallthru
          _
        // Predicated region
        $region33: #{tpu_custom_call.1} parent=11 // pred_check
          %p460 = pneg %p250
        $region34: #{tpu_custom_call.1} parent=11 // pred_check_branch
          %462 = sbr.rel (%p460) target = $region36
        $region35: #{tpu_custom_call.1} parent=11 // pred_region
          _
        $region36: #{tpu_custom_call.1} parent=11 // pred_fallthru
          _
        // Predicated region
        $region37: #{tpu_custom_call.1} parent=11 // pred_check
          %p463 = pneg %p271
        $region38: #{tpu_custom_call.1} parent=11 // pred_check_branch
          %465 = sbr.rel (%p463) target = $region40
        $region39: #{tpu_custom_call.1} parent=11 // pred_region
          _
        $region40: #{tpu_custom_call.1} parent=11 // pred_fallthru
          _
        // Predicated region
        $region41: #{tpu_custom_call.1} parent=11 // pred_check
          %p466 = pneg %p292
        $region42: #{tpu_custom_call.1} parent=11 // pred_check_branch
          %468 = sbr.rel (%p466) target = $region44
        $region43: #{tpu_custom_call.1} parent=11 // pred_region
          _
        $region44: #{tpu_custom_call.1} parent=11 // pred_fallthru
          _
        // Predicated region
        $region45: #{tpu_custom_call.1} parent=11 // pred_check
          %p469 = pneg %p313
        $region46: #{tpu_custom_call.1} parent=11 // pred_check_branch
          %471 = sbr.rel (%p469) target = $region48
        $region47: #{tpu_custom_call.1} parent=11 // pred_region
          _
        $region48: #{tpu_custom_call.1} parent=11 // pred_fallthru
          _
        // Predicated region
        $region49: #{tpu_custom_call.1} parent=11 // pred_check
          %p472 = pneg %p334
        $region50: #{tpu_custom_call.1} parent=11 // pred_check_branch
          %474 = sbr.rel (%p472) target = $region52
        $region51: #{tpu_custom_call.1} parent=11 // pred_region
          _
        $region52: #{tpu_custom_call.1} parent=11 // pred_fallthru
          _
        // Predicated region
        $region53: #{tpu_custom_call.1} parent=11 // pred_check
          %p475 = pneg %p355
        $region54: #{tpu_custom_call.1} parent=11 // pred_check_branch
          %477 = sbr.rel (%p475) target = $region56
        $region55: #{tpu_custom_call.1} parent=11 // pred_region
          _
        $region56: #{tpu_custom_call.1} parent=11 // pred_fallthru
          _
        // Predicated region
        $region57: #{tpu_custom_call.1} parent=11 // pred_check
          %p478 = pneg %p376
        $region58: #{tpu_custom_call.1} parent=11 // pred_check_branch
          %480 = sbr.rel (%p478) target = $region60
        $region59: #{tpu_custom_call.1} parent=11 // pred_region
          _
        $region60: #{tpu_custom_call.1} parent=11 // pred_fallthru
          _
      $region12: #{tpu_custom_call.1} parent=5 // pred_fallthru
        _
      %p481 = scmp.lt.s32.totalorder %s32, 4
      // Predicated region
      $region61: #{tpu_custom_call.1} parent=5 // pred_check
        %p482 = pneg %p481
      $region62: #{tpu_custom_call.1} parent=5 // pred_check_branch
        %484 = sbr.rel (%p482) target = $region64
      $region63: #{tpu_custom_call.1} parent=5 // pred_region
        // Predicated region
        $region65: #{tpu_custom_call.1} parent=63 // pred_check
          %p485 = pneg %p66
        $region66: #{tpu_custom_call.1} parent=63 // pred_check_branch
          %487 = sbr.rel (%p485) target = $region68
        $region67: #{tpu_custom_call.1} parent=63 // pred_region
          %p488 = scmp.lt.s32.totalorder %s39, 1
          %s489 = scalar_select %p488, %s39, 1
          %p490 = scmp.lt.s32.totalorder %s40, 1
          %s491 = scalar_select %p490, %s40, 1
          %s492 = smul.addr %s489, 2
          %s493 = sadd.s32 %s491, %s492
          %s494 = smul.addr %s493, 8
          %s495 = scalar_lea.vmem %s0, %s494
        $region68: #{tpu_custom_call.1} parent=63 // pred_fallthru
          _
        // Predicated region
        $region69: #{tpu_custom_call.1} parent=63 // pred_check
          %p496 = pneg %p92
        $region70: #{tpu_custom_call.1} parent=63 // pred_check_branch
          %498 = sbr.rel (%p496) target = $region72
        $region71: #{tpu_custom_call.1} parent=63 // pred_region
          %p499 = scmp.lt.s32.totalorder %s39, 1
          %s500 = scalar_select %p499, %s39, 1
          %s501 = smul.addr %s500, 16
          %s502 = smul.addr %s501, 8
          %s503 = scalar_lea.vmem %s1, %s502
        $region72: #{tpu_custom_call.1} parent=63 // pred_fallthru
          _
        // Predicated region
        $region73: #{tpu_custom_call.1} parent=63 // pred_check
          %p504 = pneg %p118
        $region74: #{tpu_custom_call.1} parent=63 // pred_check_branch
          %506 = sbr.rel (%p504) target = $region76
        $region75: #{tpu_custom_call.1} parent=63 // pred_region
          %p507 = scmp.lt.s32.totalorder %s39, 1
          %s508 = scalar_select %p507, %s39, 1
          %s509 = scalar_lea.vmem %s2, %s508
        $region76: #{tpu_custom_call.1} parent=63 // pred_fallthru
          _
      $region64: #{tpu_custom_call.1} parent=5 // pred_fallthru
        _
      %p510 = scmp.le.s32.totalorder 1, %s32
      %p511 = scmp.lt.s32.totalorder %s32, 5
      %p512 = pnand %p510, %p511
      %p513 = pneg %p512
      // Predicated region
      $region77: #{tpu_custom_call.1} parent=5 // pred_check
        _
      $region78: #{tpu_custom_call.1} parent=5 // pred_check_branch
        %515 = sbr.rel (%p512) target = $region80
      $region79: #{tpu_custom_call.1} parent=5 // pred_region
        %s516 = ssub.s32 %s32, 1
        %p517 = scmp.lt.s32.totalorder %s41, 1
        %s518 = scalar_select %p517, %s41, 1
        %p519 = scmp.lt.s32.totalorder %s42, 1
        %s520 = scalar_select %p519, %s42, 1
        %s521 = smul.addr %s518, 2
        %s522 = sadd.s32 %s520, %s521
        %s523 = smul.addr %s522, 8
        %s524 = scalar_lea.vmem %s0, %s523
        %p525 = pneg %p72
        %p526 = pneg %p69
        %p527 = scmp.lt.s32.totalorder %s41, 1
        %s528 = scalar_select %p527, %s41, 1
        %s529 = smul.addr %s528, 16
        %s530 = smul.addr %s529, 8
        %s531 = scalar_lea.vmem %s1, %s530
        %p532 = pneg %p98
        %p533 = pneg %p95
        %p534 = scmp.lt.s32.totalorder %s41, 1
        %s535 = scalar_select %p534, %s41, 1
        %s536 = scalar_lea.vmem %s2, %s535
        %p537 = pneg %p124
        %p538 = pneg %p121
        %p539 = pneg %p145
        %p540 = pneg %p142
        %p541 = pneg %p166
        %p542 = pneg %p163
        %p543 = pneg %p187
        %p544 = pneg %p184
        %p545 = pneg %p208
        %p546 = pneg %p205
        %p547 = pneg %p229
        %p548 = pneg %p226
        %p549 = pneg %p250
        %p550 = pneg %p247
        %p551 = pneg %p271
        %p552 = pneg %p268
        %p553 = pneg %p292
        %p554 = pneg %p289
        %p555 = pneg %p313
        %p556 = pneg %p310
        %p557 = pneg %p334
        %p558 = pneg %p331
        %p559 = pneg %p355
        %p560 = pneg %p352
        %p561 = pneg %p376
        %p562 = pneg %p373
        %p563 = pneg %p404
        %p564 = pneg %p401
        %s565 = sand.u32 %s391, 1
        %s566 = scalar_lea.sflag [#allocation18], %s565
        %s567 = sand.u32 %s391, 1
        %s568 = smul.addr %s567, 8
        %s569 = scalar_lea.vmem [#allocation17], %s568
        %p570 = pneg %p430
        %p571 = pneg %p427
        %p572 = scmp.lt.s32.totalorder %s41, 1
        %s573 = scalar_select %p572, %s41, 1
        %s574 = smul.addr %s573, 16
        %s575 = smul.addr %s574, 8
        %s576 = scalar_lea.vmem %s22, %s575
        %p577 = scmp.lt.s32.totalorder %s41, 1
        %s578 = scalar_select %p577, %s41, 1
        %p579 = scmp.lt.s32.totalorder %s42, 1
        %s580 = scalar_select %p579, %s42, 1
        %s581 = smul.addr %s578, 2
        %s582 = sadd.s32 %s580, %s581
        %s583 = smul.addr %s582, 8
        %s584 = scalar_lea.vmem %s0, %s583
        %p585 = scmp.lt.s32.totalorder %s41, 1
        %s586 = scalar_select %p585, %s41, 1
        %s587 = smul.addr %s586, 16
        %s588 = smul.addr %s587, 8
        %s589 = scalar_lea.vmem %s1, %s588
        %p590 = scmp.lt.s32.totalorder %s41, 1
        %s591 = scalar_select %p590, %s41, 1
        %s592 = scalar_lea.vmem %s2, %s591
        %p593 = scmp.lt.s32.totalorder %s41, 1
        %s594 = scalar_select %p593, %s41, 1
        %s595 = smul.addr %s594, 16
        %s596 = smul.addr %s595, 8
        %s597 = scalar_lea.vmem %s22, %s596
        %p599 = scmp.eq.s32.totalorder %s42, 0
        // Predicated region
        $region81: #{tpu_custom_call.1} parent=79 // pred_check
          %p600 = pneg %p599
        $region82: #{tpu_custom_call.1} parent=79 // pred_check_branch
          %602 = sbr.rel (%p600) target = $region84
        $region83: #{tpu_custom_call.1} parent=79 // pred_region
          %p604 = scmp.lt.u32.totalorder 64, 8
          %p605 = pneg %p604
          // Predicated region
          $region85: #{tpu_custom_call.1} parent=83 // pred_check
            _
          $region86: #{tpu_custom_call.1} parent=83 // pred_check_branch
            %607 = sbr.rel (%p604) target = $region88
          $region87: #{tpu_custom_call.1} parent=83 // pred_region
            %s622 = sand.u32 64, 7
            %p623 = scmp.eq.s32.totalorder %s622, 0
            // Predicated region
            $region100: #{tpu_custom_call.1} parent=87 // pred_check
              %p624 = pneg %p623
            $region101: #{tpu_custom_call.1} parent=87 // pred_check_branch
              %626 = sbr.rel (%p624) target = $region103
            $region102: #{tpu_custom_call.1} parent=87 // pred_region
              loop: start=0, step=1, limit=1
              $region104: #{tpu_custom_call.1} parent=102 // loop_pre_header
                _
              $region105: #{tpu_custom_call.1} parent=102 // loop_header
                %s628 = sphi 0, %s632
                %p629 = scmp.ge.s32.totalorder %s628, 1
                %s633 = sphi %s15, %s15
                %s634 = sphi [#allocation2], [#allocation2]
              $region106: #{tpu_custom_call.1} parent=102 // loop_header_branch
                %631 = sbr.rel (%p629) target = $region110
              $region107: #{tpu_custom_call.1} parent=102 // loop_body
                %v635 = vld [vmem:[%s633] sm:$0xff]
                %636 = vst [vmem:[%s634] sm:$0xff] %v635
                %v637 = vld [vmem:[%s633 + $0x8] sm:$0xff]
                %638 = vst [vmem:[%s634 + $0x8] sm:$0xff] %v637
                %v639 = vld [vmem:[%s633 + $0x10] sm:$0xff]
                %640 = vst [vmem:[%s634 + $0x10] sm:$0xff] %v639
                %v641 = vld [vmem:[%s633 + $0x18] sm:$0xff]
                %642 = vst [vmem:[%s634 + $0x18] sm:$0xff] %v641
                %v643 = vld [vmem:[%s633 + $0x20] sm:$0xff]
                %644 = vst [vmem:[%s634 + $0x20] sm:$0xff] %v643
                %v645 = vld [vmem:[%s633 + $0x28] sm:$0xff]
                %646 = vst [vmem:[%s634 + $0x28] sm:$0xff] %v645
                %v647 = vld [vmem:[%s633 + $0x30] sm:$0xff]
                %648 = vst [vmem:[%s634 + $0x30] sm:$0xff] %v647
                %v649 = vld [vmem:[%s633 + $0x38] sm:$0xff]
                %650 = vst [vmem:[%s634 + $0x38] sm:$0xff] %v649
              $region108: #{tpu_custom_call.1} parent=102 // loop_footer
                %s632 = sadd.s32 1, %s628
              $region109: #{tpu_custom_call.1} parent=102 // loop_footer_branch
                %627 = sbr.rel target = $region105
              $region110: #{tpu_custom_call.1} parent=102 // loop_exit
                _
            $region103: #{tpu_custom_call.1} parent=87 // pred_fallthru
              _
            %p651 = pneg %p623
            // Predicated region
            $region111: #{tpu_custom_call.1} parent=87 // pred_check
              _
            $region112: #{tpu_custom_call.1} parent=87 // pred_check_branch
              %653 = sbr.rel (%p623) target = $region114
            $region113: #{tpu_custom_call.1} parent=87 // pred_region
              %s654 = sand.u32 64, 7
            $region114: #{tpu_custom_call.1} parent=87 // pred_fallthru
              _
          $region88: #{tpu_custom_call.1} parent=83 // pred_fallthru
            _
          // Predicated region
          $region89: #{tpu_custom_call.1} parent=83 // pred_check
            %p608 = pneg %p604
          $region90: #{tpu_custom_call.1} parent=83 // pred_check_branch
            %610 = sbr.rel (%p608) target = $region92
          $region91: #{tpu_custom_call.1} parent=83 // pred_region
            %s611 = sshllo.u32 0, 64
            loop: start=0, step=1, limit=1
            $region93: #{tpu_custom_call.1} parent=91 // loop_pre_header
              _
            $region94: #{tpu_custom_call.1} parent=91 // loop_header
              %s613 = sphi 0, %s617
              %p614 = scmp.ge.s32.totalorder %s613, 1
              %s618 = sphi %s15, %s15
              %s619 = sphi [#allocation2], [#allocation2]
            $region95: #{tpu_custom_call.1} parent=91 // loop_header_branch
              %616 = sbr.rel (%p614) target = $region99
            $region96: #{tpu_custom_call.1} parent=91 // loop_body
              %v620 = vld [vmem:[%s618] sm:%s611]
              %621 = vst [vmem:[%s619] sm:%s611] %v620
            $region97: #{tpu_custom_call.1} parent=91 // loop_footer
              %s617 = sadd.s32 1, %s613
            $region98: #{tpu_custom_call.1} parent=91 // loop_footer_branch
              %612 = sbr.rel target = $region94
            $region99: #{tpu_custom_call.1} parent=91 // loop_exit
              _
          $region92: #{tpu_custom_call.1} parent=83 // pred_fallthru
            _
          // Predicated region
          $region115: #{tpu_custom_call.1} parent=83 // pred_check
            _
          $region116: #{tpu_custom_call.1} parent=83 // pred_check_branch
            %657 = sbr.rel (0) target = $region118
          $region117: #{tpu_custom_call.1} parent=83 // pred_region
            %658 = vsyncadd [#allocation8], 1024
          $region118: #{tpu_custom_call.1} parent=83 // pred_fallthru
            _
          %s659 = scalar_lea.sflag [#allocation8], 1
          %p661 = scmp.lt.u32.totalorder 64, 8
          %p662 = pneg %p661
          // Predicated region
          $region119: #{tpu_custom_call.1} parent=83 // pred_check
            _
          $region120: #{tpu_custom_call.1} parent=83 // pred_check_branch
            %664 = sbr.rel (%p661) target = $region122
          $region121: #{tpu_custom_call.1} parent=83 // pred_region
            %s679 = sand.u32 64, 7
            %p680 = scmp.eq.s32.totalorder %s679, 0
            // Predicated region
            $region134: #{tpu_custom_call.1} parent=121 // pred_check
              %p681 = pneg %p680
            $region135: #{tpu_custom_call.1} parent=121 // pred_check_branch
              %683 = sbr.rel (%p681) target = $region137
            $region136: #{tpu_custom_call.1} parent=121 // pred_region
              loop: start=0, step=1, limit=1
              $region138: #{tpu_custom_call.1} parent=136 // loop_pre_header
                _
              $region139: #{tpu_custom_call.1} parent=136 // loop_header
                %s685 = sphi 0, %s689
                %p686 = scmp.ge.s32.totalorder %s685, 1
                %s690 = sphi %s16, %s16
                %s691 = sphi [#allocation3], [#allocation3]
              $region140: #{tpu_custom_call.1} parent=136 // loop_header_branch
                %688 = sbr.rel (%p686) target = $region144
              $region141: #{tpu_custom_call.1} parent=136 // loop_body
                %v692 = vld [vmem:[%s690] sm:$0xff]
                %693 = vst [vmem:[%s691] sm:$0xff] %v692
                %v694 = vld [vmem:[%s690 + $0x8] sm:$0xff]
                %695 = vst [vmem:[%s691 + $0x8] sm:$0xff] %v694
                %v696 = vld [vmem:[%s690 + $0x10] sm:$0xff]
                %697 = vst [vmem:[%s691 + $0x10] sm:$0xff] %v696
                %v698 = vld [vmem:[%s690 + $0x18] sm:$0xff]
                %699 = vst [vmem:[%s691 + $0x18] sm:$0xff] %v698
                %v700 = vld [vmem:[%s690 + $0x20] sm:$0xff]
                %701 = vst [vmem:[%s691 + $0x20] sm:$0xff] %v700
                %v702 = vld [vmem:[%s690 + $0x28] sm:$0xff]
                %703 = vst [vmem:[%s691 + $0x28] sm:$0xff] %v702
                %v704 = vld [vmem:[%s690 + $0x30] sm:$0xff]
                %705 = vst [vmem:[%s691 + $0x30] sm:$0xff] %v704
                %v706 = vld [vmem:[%s690 + $0x38] sm:$0xff]
                %707 = vst [vmem:[%s691 + $0x38] sm:$0xff] %v706
              $region142: #{tpu_custom_call.1} parent=136 // loop_footer
                %s689 = sadd.s32 1, %s685
              $region143: #{tpu_custom_call.1} parent=136 // loop_footer_branch
                %684 = sbr.rel target = $region139
              $region144: #{tpu_custom_call.1} parent=136 // loop_exit
                _
            $region137: #{tpu_custom_call.1} parent=121 // pred_fallthru
              _
            %p708 = pneg %p680
            // Predicated region
            $region145: #{tpu_custom_call.1} parent=121 // pred_check
              _
            $region146: #{tpu_custom_call.1} parent=121 // pred_check_branch
              %710 = sbr.rel (%p680) target = $region148
            $region147: #{tpu_custom_call.1} parent=121 // pred_region
              %s711 = sand.u32 64, 7
            $region148: #{tpu_custom_call.1} parent=121 // pred_fallthru
              _
          $region122: #{tpu_custom_call.1} parent=83 // pred_fallthru
            _
          // Predicated region
          $region123: #{tpu_custom_call.1} parent=83 // pred_check
            %p665 = pneg %p661
          $region124: #{tpu_custom_call.1} parent=83 // pred_check_branch
            %667 = sbr.rel (%p665) target = $region126
          $region125: #{tpu_custom_call.1} parent=83 // pred_region
            %s668 = sshllo.u32 0, 64
            loop: start=0, step=1, limit=1
            $region127: #{tpu_custom_call.1} parent=125 // loop_pre_header
              _
            $region128: #{tpu_custom_call.1} parent=125 // loop_header
              %s670 = sphi 0, %s674
              %p671 = scmp.ge.s32.totalorder %s670, 1
              %s675 = sphi %s16, %s16
              %s676 = sphi [#allocation3], [#allocation3]
            $region129: #{tpu_custom_call.1} parent=125 // loop_header_branch
              %673 = sbr.rel (%p671) target = $region133
            $region130: #{tpu_custom_call.1} parent=125 // loop_body
              %v677 = vld [vmem:[%s675] sm:%s668]
              %678 = vst [vmem:[%s676] sm:%s668] %v677
            $region131: #{tpu_custom_call.1} parent=125 // loop_footer
              %s674 = sadd.s32 1, %s670
            $region132: #{tpu_custom_call.1} parent=125 // loop_footer_branch
              %669 = sbr.rel target = $region128
            $region133: #{tpu_custom_call.1} parent=125 // loop_exit
              _
          $region126: #{tpu_custom_call.1} parent=83 // pred_fallthru
            _
          // Predicated region
          $region149: #{tpu_custom_call.1} parent=83 // pred_check
            _
          $region150: #{tpu_custom_call.1} parent=83 // pred_check_branch
            %714 = sbr.rel (0) target = $region152
          $region151: #{tpu_custom_call.1} parent=83 // pred_region
            %715 = vsyncadd %s659, 1024
          $region152: #{tpu_custom_call.1} parent=83 // pred_fallthru
            _
          %s716 = scalar_lea.sflag [#allocation8], 2
          %p718 = scmp.lt.u32.totalorder 64, 8
          %p719 = pneg %p718
          // Predicated region
          $region153: #{tpu_custom_call.1} parent=83 // pred_check
            _
          $region154: #{tpu_custom_call.1} parent=83 // pred_check_branch
            %721 = sbr.rel (%p718) target = $region156
          $region155: #{tpu_custom_call.1} parent=83 // pred_region
            %s736 = sand.u32 64, 7
            %p737 = scmp.eq.s32.totalorder %s736, 0
            // Predicated region
            $region168: #{tpu_custom_call.1} parent=155 // pred_check
              %p738 = pneg %p737
            $region169: #{tpu_custom_call.1} parent=155 // pred_check_branch
              %740 = sbr.rel (%p738) target = $region171
            $region170: #{tpu_custom_call.1} parent=155 // pred_region
              loop: start=0, step=1, limit=1
              $region172: #{tpu_custom_call.1} parent=170 // loop_pre_header
                _
              $region173: #{tpu_custom_call.1} parent=170 // loop_header
                %s742 = sphi 0, %s746
                %p743 = scmp.ge.s32.totalorder %s742, 1
                %s747 = sphi %s17, %s17
                %s748 = sphi [#allocation4], [#allocation4]
              $region174: #{tpu_custom_call.1} parent=170 // loop_header_branch
                %745 = sbr.rel (%p743) target = $region178
              $region175: #{tpu_custom_call.1} parent=170 // loop_body
                %v749 = vld [vmem:[%s747] sm:$0xff]
                %750 = vst [vmem:[%s748] sm:$0xff] %v749
                %v751 = vld [vmem:[%s747 + $0x8] sm:$0xff]
                %752 = vst [vmem:[%s748 + $0x8] sm:$0xff] %v751
                %v753 = vld [vmem:[%s747 + $0x10] sm:$0xff]
                %754 = vst [vmem:[%s748 + $0x10] sm:$0xff] %v753
                %v755 = vld [vmem:[%s747 + $0x18] sm:$0xff]
                %756 = vst [vmem:[%s748 + $0x18] sm:$0xff] %v755
                %v757 = vld [vmem:[%s747 + $0x20] sm:$0xff]
                %758 = vst [vmem:[%s748 + $0x20] sm:$0xff] %v757
                %v759 = vld [vmem:[%s747 + $0x28] sm:$0xff]
                %760 = vst [vmem:[%s748 + $0x28] sm:$0xff] %v759
                %v761 = vld [vmem:[%s747 + $0x30] sm:$0xff]
                %762 = vst [vmem:[%s748 + $0x30] sm:$0xff] %v761
                %v763 = vld [vmem:[%s747 + $0x38] sm:$0xff]
                %764 = vst [vmem:[%s748 + $0x38] sm:$0xff] %v763
              $region176: #{tpu_custom_call.1} parent=170 // loop_footer
                %s746 = sadd.s32 1, %s742
              $region177: #{tpu_custom_call.1} parent=170 // loop_footer_branch
                %741 = sbr.rel target = $region173
              $region178: #{tpu_custom_call.1} parent=170 // loop_exit
                _
            $region171: #{tpu_custom_call.1} parent=155 // pred_fallthru
              _
            %p765 = pneg %p737
            // Predicated region
            $region179: #{tpu_custom_call.1} parent=155 // pred_check
              _
            $region180: #{tpu_custom_call.1} parent=155 // pred_check_branch
              %767 = sbr.rel (%p737) target = $region182
            $region181: #{tpu_custom_call.1} parent=155 // pred_region
              %s768 = sand.u32 64, 7
            $region182: #{tpu_custom_call.1} parent=155 // pred_fallthru
              _
          $region156: #{tpu_custom_call.1} parent=83 // pred_fallthru
            _
          // Predicated region
          $region157: #{tpu_custom_call.1} parent=83 // pred_check
            %p722 = pneg %p718
          $region158: #{tpu_custom_call.1} parent=83 // pred_check_branch
            %724 = sbr.rel (%p722) target = $region160
          $region159: #{tpu_custom_call.1} parent=83 // pred_region
            %s725 = sshllo.u32 0, 64
            loop: start=0, step=1, limit=1
            $region161: #{tpu_custom_call.1} parent=159 // loop_pre_header
              _
            $region162: #{tpu_custom_call.1} parent=159 // loop_header
              %s727 = sphi 0, %s731
              %p728 = scmp.ge.s32.totalorder %s727, 1
              %s732 = sphi %s17, %s17
              %s733 = sphi [#allocation4], [#allocation4]
            $region163: #{tpu_custom_call.1} parent=159 // loop_header_branch
              %730 = sbr.rel (%p728) target = $region167
            $region164: #{tpu_custom_call.1} parent=159 // loop_body
              %v734 = vld [vmem:[%s732] sm:%s725]
              %735 = vst [vmem:[%s733] sm:%s725] %v734
            $region165: #{tpu_custom_call.1} parent=159 // loop_footer
              %s731 = sadd.s32 1, %s727
            $region166: #{tpu_custom_call.1} parent=159 // loop_footer_branch
              %726 = sbr.rel target = $region162
            $region167: #{tpu_custom_call.1} parent=159 // loop_exit
              _
          $region160: #{tpu_custom_call.1} parent=83 // pred_fallthru
            _
          // Predicated region
          $region183: #{tpu_custom_call.1} parent=83 // pred_check
            _
          $region184: #{tpu_custom_call.1} parent=83 // pred_check_branch
            %771 = sbr.rel (0) target = $region186
          $region185: #{tpu_custom_call.1} parent=83 // pred_region
            %772 = vsyncadd %s716, 1024
          $region186: #{tpu_custom_call.1} parent=83 // pred_fallthru
            _
          %s773 = scalar_lea.sflag [#allocation8], 3
          %p775 = scmp.lt.u32.totalorder 64, 8
          %p776 = pneg %p775
          // Predicated region
          $region187: #{tpu_custom_call.1} parent=83 // pred_check
            _
          $region188: #{tpu_custom_call.1} parent=83 // pred_check_branch
            %778 = sbr.rel (%p775) target = $region190
          $region189: #{tpu_custom_call.1} parent=83 // pred_region
            %s793 = sand.u32 64, 7
            %p794 = scmp.eq.s32.totalorder %s793, 0
            // Predicated region
            $region202: #{tpu_custom_call.1} parent=189 // pred_check
              %p795 = pneg %p794
            $region203: #{tpu_custom_call.1} parent=189 // pred_check_branch
              %797 = sbr.rel (%p795) target = $region205
            $region204: #{tpu_custom_call.1} parent=189 // pred_region
              loop: start=0, step=1, limit=1
              $region206: #{tpu_custom_call.1} parent=204 // loop_pre_header
                _
              $region207: #{tpu_custom_call.1} parent=204 // loop_header
                %s799 = sphi 0, %s803
                %p800 = scmp.ge.s32.totalorder %s799, 1
                %s804 = sphi %s18, %s18
                %s805 = sphi [#allocation5], [#allocation5]
              $region208: #{tpu_custom_call.1} parent=204 // loop_header_branch
                %802 = sbr.rel (%p800) target = $region212
              $region209: #{tpu_custom_call.1} parent=204 // loop_body
                %v806 = vld [vmem:[%s804] sm:$0xff]
                %807 = vst [vmem:[%s805] sm:$0xff] %v806
                %v808 = vld [vmem:[%s804 + $0x8] sm:$0xff]
                %809 = vst [vmem:[%s805 + $0x8] sm:$0xff] %v808
                %v810 = vld [vmem:[%s804 + $0x10] sm:$0xff]
                %811 = vst [vmem:[%s805 + $0x10] sm:$0xff] %v810
                %v812 = vld [vmem:[%s804 + $0x18] sm:$0xff]
                %813 = vst [vmem:[%s805 + $0x18] sm:$0xff] %v812
                %v814 = vld [vmem:[%s804 + $0x20] sm:$0xff]
                %815 = vst [vmem:[%s805 + $0x20] sm:$0xff] %v814
                %v816 = vld [vmem:[%s804 + $0x28] sm:$0xff]
                %817 = vst [vmem:[%s805 + $0x28] sm:$0xff] %v816
                %v818 = vld [vmem:[%s804 + $0x30] sm:$0xff]
                %819 = vst [vmem:[%s805 + $0x30] sm:$0xff] %v818
                %v820 = vld [vmem:[%s804 + $0x38] sm:$0xff]
                %821 = vst [vmem:[%s805 + $0x38] sm:$0xff] %v820
              $region210: #{tpu_custom_call.1} parent=204 // loop_footer
                %s803 = sadd.s32 1, %s799
              $region211: #{tpu_custom_call.1} parent=204 // loop_footer_branch
                %798 = sbr.rel target = $region207
              $region212: #{tpu_custom_call.1} parent=204 // loop_exit
                _
            $region205: #{tpu_custom_call.1} parent=189 // pred_fallthru
              _
            %p822 = pneg %p794
            // Predicated region
            $region213: #{tpu_custom_call.1} parent=189 // pred_check
              _
            $region214: #{tpu_custom_call.1} parent=189 // pred_check_branch
              %824 = sbr.rel (%p794) target = $region216
            $region215: #{tpu_custom_call.1} parent=189 // pred_region
              %s825 = sand.u32 64, 7
            $region216: #{tpu_custom_call.1} parent=189 // pred_fallthru
              _
          $region190: #{tpu_custom_call.1} parent=83 // pred_fallthru
            _
          // Predicated region
          $region191: #{tpu_custom_call.1} parent=83 // pred_check
            %p779 = pneg %p775
          $region192: #{tpu_custom_call.1} parent=83 // pred_check_branch
            %781 = sbr.rel (%p779) target = $region194
          $region193: #{tpu_custom_call.1} parent=83 // pred_region
            %s782 = sshllo.u32 0, 64
            loop: start=0, step=1, limit=1
            $region195: #{tpu_custom_call.1} parent=193 // loop_pre_header
              _
            $region196: #{tpu_custom_call.1} parent=193 // loop_header
              %s784 = sphi 0, %s788
              %p785 = scmp.ge.s32.totalorder %s784, 1
              %s789 = sphi %s18, %s18
              %s790 = sphi [#allocation5], [#allocation5]
            $region197: #{tpu_custom_call.1} parent=193 // loop_header_branch
              %787 = sbr.rel (%p785) target = $region201
            $region198: #{tpu_custom_call.1} parent=193 // loop_body
              %v791 = vld [vmem:[%s789] sm:%s782]
              %792 = vst [vmem:[%s790] sm:%s782] %v791
            $region199: #{tpu_custom_call.1} parent=193 // loop_footer
              %s788 = sadd.s32 1, %s784
            $region200: #{tpu_custom_call.1} parent=193 // loop_footer_branch
              %783 = sbr.rel target = $region196
            $region201: #{tpu_custom_call.1} parent=193 // loop_exit
              _
          $region194: #{tpu_custom_call.1} parent=83 // pred_fallthru
            _
          // Predicated region
          $region217: #{tpu_custom_call.1} parent=83 // pred_check
            _
          $region218: #{tpu_custom_call.1} parent=83 // pred_check_branch
            %828 = sbr.rel (0) target = $region220
          $region219: #{tpu_custom_call.1} parent=83 // pred_region
            %829 = vsyncadd %s773, 1024
          $region220: #{tpu_custom_call.1} parent=83 // pred_fallthru
            _
          %s830 = scalar_lea.sflag [#allocation8], 4
          %p832 = scmp.lt.u32.totalorder 16, 8
          %p833 = pneg %p832
          // Predicated region
          $region221: #{tpu_custom_call.1} parent=83 // pred_check
            _
          $region222: #{tpu_custom_call.1} parent=83 // pred_check_branch
            %835 = sbr.rel (%p832) target = $region224
          $region223: #{tpu_custom_call.1} parent=83 // pred_region
            %s850 = sand.u32 16, 7
            %p851 = scmp.eq.s32.totalorder %s850, 0
            // Predicated region
            $region236: #{tpu_custom_call.1} parent=223 // pred_check
              %p852 = pneg %p851
            $region237: #{tpu_custom_call.1} parent=223 // pred_check_branch
              %854 = sbr.rel (%p852) target = $region239
            $region238: #{tpu_custom_call.1} parent=223 // pred_region
              loop: start=0, step=1, limit=1
              $region240: #{tpu_custom_call.1} parent=238 // loop_pre_header
                _
              $region241: #{tpu_custom_call.1} parent=238 // loop_header
                %s856 = sphi 0, %s860
                %p857 = scmp.ge.s32.totalorder %s856, 1
                %s861 = sphi %s19, %s19
                %s862 = sphi [#allocation6], [#allocation6]
              $region242: #{tpu_custom_call.1} parent=238 // loop_header_branch
                %859 = sbr.rel (%p857) target = $region246
              $region243: #{tpu_custom_call.1} parent=238 // loop_body
                %v863 = vld [vmem:[%s861] sm:$0xff]
                %864 = vst [vmem:[%s862] sm:$0xff] %v863
                %v865 = vld [vmem:[%s861 + $0x8] sm:$0xff]
                %866 = vst [vmem:[%s862 + $0x8] sm:$0xff] %v865
              $region244: #{tpu_custom_call.1} parent=238 // loop_footer
                %s860 = sadd.s32 1, %s856
              $region245: #{tpu_custom_call.1} parent=238 // loop_footer_branch
                %855 = sbr.rel target = $region241
              $region246: #{tpu_custom_call.1} parent=238 // loop_exit
                _
            $region239: #{tpu_custom_call.1} parent=223 // pred_fallthru
              _
            %p867 = pneg %p851
            // Predicated region
            $region247: #{tpu_custom_call.1} parent=223 // pred_check
              _
            $region248: #{tpu_custom_call.1} parent=223 // pred_check_branch
              %869 = sbr.rel (%p851) target = $region250
            $region249: #{tpu_custom_call.1} parent=223 // pred_region
              %s870 = sand.u32 16, 7
            $region250: #{tpu_custom_call.1} parent=223 // pred_fallthru
              _
          $region224: #{tpu_custom_call.1} parent=83 // pred_fallthru
            _
          // Predicated region
          $region225: #{tpu_custom_call.1} parent=83 // pred_check
            %p836 = pneg %p832
          $region226: #{tpu_custom_call.1} parent=83 // pred_check_branch
            %838 = sbr.rel (%p836) target = $region228
          $region227: #{tpu_custom_call.1} parent=83 // pred_region
            %s839 = sshllo.u32 0, 16
            loop: start=0, step=1, limit=1
            $region229: #{tpu_custom_call.1} parent=227 // loop_pre_header
              _
            $region230: #{tpu_custom_call.1} parent=227 // loop_header
              %s841 = sphi 0, %s845
              %p842 = scmp.ge.s32.totalorder %s841, 1
              %s846 = sphi %s19, %s19
              %s847 = sphi [#allocation6], [#allocation6]
            $region231: #{tpu_custom_call.1} parent=227 // loop_header_branch
              %844 = sbr.rel (%p842) target = $region235
            $region232: #{tpu_custom_call.1} parent=227 // loop_body
              %v848 = vld [vmem:[%s846] sm:%s839]
              %849 = vst [vmem:[%s847] sm:%s839] %v848
            $region233: #{tpu_custom_call.1} parent=227 // loop_footer
              %s845 = sadd.s32 1, %s841
            $region234: #{tpu_custom_call.1} parent=227 // loop_footer_branch
              %840 = sbr.rel target = $region230
            $region235: #{tpu_custom_call.1} parent=227 // loop_exit
              _
          $region228: #{tpu_custom_call.1} parent=83 // pred_fallthru
            _
          // Predicated region
          $region251: #{tpu_custom_call.1} parent=83 // pred_check
            _
          $region252: #{tpu_custom_call.1} parent=83 // pred_check_branch
            %873 = sbr.rel (0) target = $region254
          $region253: #{tpu_custom_call.1} parent=83 // pred_region
            %874 = vsyncadd %s830, 256
          $region254: #{tpu_custom_call.1} parent=83 // pred_fallthru
            _
          %s875 = scalar_lea.sflag [#allocation8], 5
          %p877 = scmp.lt.u32.totalorder 16, 8
          %p878 = pneg %p877
          // Predicated region
          $region255: #{tpu_custom_call.1} parent=83 // pred_check
            _
          $region256: #{tpu_custom_call.1} parent=83 // pred_check_branch
            %880 = sbr.rel (%p877) target = $region258
          $region257: #{tpu_custom_call.1} parent=83 // pred_region
            %s895 = sand.u32 16, 7
            %p896 = scmp.eq.s32.totalorder %s895, 0
            // Predicated region
            $region270: #{tpu_custom_call.1} parent=257 // pred_check
              %p897 = pneg %p896
            $region271: #{tpu_custom_call.1} parent=257 // pred_check_branch
              %899 = sbr.rel (%p897) target = $region273
            $region272: #{tpu_custom_call.1} parent=257 // pred_region
              loop: start=0, step=1, limit=1
              $region274: #{tpu_custom_call.1} parent=272 // loop_pre_header
                _
              $region275: #{tpu_custom_call.1} parent=272 // loop_header
                %s901 = sphi 0, %s905
                %p902 = scmp.ge.s32.totalorder %s901, 1
                %s906 = sphi %s20, %s20
                %s907 = sphi [#allocation7], [#allocation7]
              $region276: #{tpu_custom_call.1} parent=272 // loop_header_branch
                %904 = sbr.rel (%p902) target = $region280
              $region277: #{tpu_custom_call.1} parent=272 // loop_body
                %v908 = vld [vmem:[%s906] sm:$0xff]
                %909 = vst [vmem:[%s907] sm:$0xff] %v908
                %v910 = vld [vmem:[%s906 + $0x8] sm:$0xff]
                %911 = vst [vmem:[%s907 + $0x8] sm:$0xff] %v910
              $region278: #{tpu_custom_call.1} parent=272 // loop_footer
                %s905 = sadd.s32 1, %s901
              $region279: #{tpu_custom_call.1} parent=272 // loop_footer_branch
                %900 = sbr.rel target = $region275
              $region280: #{tpu_custom_call.1} parent=272 // loop_exit
                _
            $region273: #{tpu_custom_call.1} parent=257 // pred_fallthru
              _
            %p912 = pneg %p896
            // Predicated region
            $region281: #{tpu_custom_call.1} parent=257 // pred_check
              _
            $region282: #{tpu_custom_call.1} parent=257 // pred_check_branch
              %914 = sbr.rel (%p896) target = $region284
            $region283: #{tpu_custom_call.1} parent=257 // pred_region
              %s915 = sand.u32 16, 7
            $region284: #{tpu_custom_call.1} parent=257 // pred_fallthru
              _
          $region258: #{tpu_custom_call.1} parent=83 // pred_fallthru
            _
          // Predicated region
          $region259: #{tpu_custom_call.1} parent=83 // pred_check
            %p881 = pneg %p877
          $region260: #{tpu_custom_call.1} parent=83 // pred_check_branch
            %883 = sbr.rel (%p881) target = $region262
          $region261: #{tpu_custom_call.1} parent=83 // pred_region
            %s884 = sshllo.u32 0, 16
            loop: start=0, step=1, limit=1
            $region263: #{tpu_custom_call.1} parent=261 // loop_pre_header
              _
            $region264: #{tpu_custom_call.1} parent=261 // loop_header
              %s886 = sphi 0, %s890
              %p887 = scmp.ge.s32.totalorder %s886, 1
              %s891 = sphi %s20, %s20
              %s892 = sphi [#allocation7], [#allocation7]
            $region265: #{tpu_custom_call.1} parent=261 // loop_header_branch
              %889 = sbr.rel (%p887) target = $region269
            $region266: #{tpu_custom_call.1} parent=261 // loop_body
              %v893 = vld [vmem:[%s891] sm:%s884]
              %894 = vst [vmem:[%s892] sm:%s884] %v893
            $region267: #{tpu_custom_call.1} parent=261 // loop_footer
              %s890 = sadd.s32 1, %s886
            $region268: #{tpu_custom_call.1} parent=261 // loop_footer_branch
              %885 = sbr.rel target = $region264
            $region269: #{tpu_custom_call.1} parent=261 // loop_exit
              _
          $region262: #{tpu_custom_call.1} parent=83 // pred_fallthru
            _
          // Predicated region
          $region285: #{tpu_custom_call.1} parent=83 // pred_check
            _
          $region286: #{tpu_custom_call.1} parent=83 // pred_check_branch
            %918 = sbr.rel (0) target = $region288
          $region287: #{tpu_custom_call.1} parent=83 // pred_region
            %919 = vsyncadd %s875, 256
          $region288: #{tpu_custom_call.1} parent=83 // pred_fallthru
            _
          %s920 = smul.u32 4, 4
          %s921 = smul.u32 %s920, 4
          %s922 = smul.u32 %s921, 1
          %s923 = sshll.u32 %s922, 4
          %924 = dma.done [#allocation8], %s923
          %s925 = sshll.u32 %s922, 4
          %926 = dma.done %s659, %s925
          %s927 = sshll.u32 %s922, 4
          %928 = dma.done %s716, %s927
          %s929 = sshll.u32 %s922, 4
          %930 = dma.done %s773, %s929
          %s931 = smul.u32 %s920, 1
          %s932 = smul.u32 %s931, 1
          %s933 = sshll.u32 %s932, 4
          %934 = dma.done %s830, %s933
          %s935 = sshll.u32 %s932, 4
          %936 = dma.done %s875, %s935
          %v937 = vld [vmem:[%s589] sm:$0xff]
          %v938 = vld [vmem:[%s589 + $0x8] sm:$0xff]
          %v939 = vld [vmem:[%s589 + $0x10] sm:$0xff]
          %v940 = vld [vmem:[%s589 + $0x18] sm:$0xff]
          %v941 = vld [vmem:[%s589 + $0x20] sm:$0xff]
          %v942 = vld [vmem:[%s589 + $0x28] sm:$0xff]
          %v943 = vld [vmem:[%s589 + $0x30] sm:$0xff]
          %v944 = vld [vmem:[%s589 + $0x38] sm:$0xff]
          %v945 = vld [vmem:[%s589 + $0x40] sm:$0xff]
          %v946 = vld [vmem:[%s589 + $0x48] sm:$0xff]
          %v947 = vld [vmem:[%s589 + $0x50] sm:$0xff]
          %v948 = vld [vmem:[%s589 + $0x58] sm:$0xff]
          %v949 = vld [vmem:[%s589 + $0x60] sm:$0xff]
          %v950 = vld [vmem:[%s589 + $0x68] sm:$0xff]
          %v951 = vld [vmem:[%s589 + $0x70] sm:$0xff]
          %v952 = vld [vmem:[%s589 + $0x78] sm:$0xff]
          %v953 = vld [vmem:[%s5] sm:$0x1]
          %v954 = vld [vmem:[%s6] sm:$0x1]
          %vm955 = vcmask 261120
          %v956 = vsel %vm955, %v937, 0.0
          %957 = vadd.xlane.f32.xlu0 %v956
          %v958 = vpop.xlane.xlu0 %957
          %v959 = vsel %vm955, %v938, 0.0
          %960 = vadd.xlane.f32.xlu0 %v959
          %v961 = vpop.xlane.xlu0 %960
          %v962 = vsel %vm955, %v939, 0.0
          %963 = vadd.xlane.f32.xlu0 %v962
          %v964 = vpop.xlane.xlu0 %963
          %v965 = vsel %vm955, %v940, 0.0
          %966 = vadd.xlane.f32.xlu0 %v965
          %v967 = vpop.xlane.xlu0 %966
          %v968 = vsel %vm955, %v941, 0.0
          %969 = vadd.xlane.f32.xlu0 %v968
          %v970 = vpop.xlane.xlu0 %969
          %v971 = vsel %vm955, %v942, 0.0
          %972 = vadd.xlane.f32.xlu0 %v971
          %v973 = vpop.xlane.xlu0 %972
          %v974 = vsel %vm955, %v943, 0.0
          %975 = vadd.xlane.f32.xlu0 %v974
          %v976 = vpop.xlane.xlu0 %975
          %v977 = vsel %vm955, %v944, 0.0
          %978 = vadd.xlane.f32.xlu0 %v977
          %v979 = vpop.xlane.xlu0 %978
          %v980 = vsel %vm955, %v945, 0.0
          %981 = vadd.xlane.f32.xlu0 %v980
          %v982 = vpop.xlane.xlu0 %981
          %v983 = vsel %vm955, %v946, 0.0
          %984 = vadd.xlane.f32.xlu0 %v983
          %v985 = vpop.xlane.xlu0 %984
          %v986 = vsel %vm955, %v947, 0.0
          %987 = vadd.xlane.f32.xlu0 %v986
          %v988 = vpop.xlane.xlu0 %987
          %v989 = vsel %vm955, %v948, 0.0
          %990 = vadd.xlane.f32.xlu0 %v989
          %v991 = vpop.xlane.xlu0 %990
          %v992 = vsel %vm955, %v949, 0.0
          %993 = vadd.xlane.f32.xlu0 %v992
          %v994 = vpop.xlane.xlu0 %993
          %v995 = vsel %vm955, %v950, 0.0
          %996 = vadd.xlane.f32.xlu0 %v995
          %v997 = vpop.xlane.xlu0 %996
          %v998 = vsel %vm955, %v951, 0.0
          %999 = vadd.xlane.f32.xlu0 %v998
          %v1000 = vpop.xlane.xlu0 %999
          %v1001 = vsel %vm955, %v952, 0.0
          %1002 = vadd.xlane.f32.xlu0 %v1001
          %v1003 = vpop.xlane.xlu0 %1002
          %v1004 = vrcp.pop 32.0
          %v1005 = vmul.f32 %v958, %v1004
          %v1006 = vmul.f32 %v961, %v1004
          %v1007 = vmul.f32 %v964, %v1004
          %v1008 = vmul.f32 %v967, %v1004
          %v1009 = vmul.f32 %v970, %v1004
          %v1010 = vmul.f32 %v973, %v1004
          %v1011 = vmul.f32 %v976, %v1004
          %v1012 = vmul.f32 %v979, %v1004
          %v1013 = vmul.f32 %v982, %v1004
          %v1014 = vmul.f32 %v985, %v1004
          %v1015 = vmul.f32 %v988, %v1004
          %v1016 = vmul.f32 %v991, %v1004
          %v1017 = vmul.f32 %v994, %v1004
          %v1018 = vmul.f32 %v997, %v1004
          %v1019 = vmul.f32 %v1000, %v1004
          %v1020 = vmul.f32 %v1003, %v1004
          %v1021 = vsub.f32 %v937, %v1005
          %v1022 = vsub.f32 %v938, %v1006
          %v1023 = vsub.f32 %v939, %v1007
          %v1024 = vsub.f32 %v940, %v1008
          %v1025 = vsub.f32 %v941, %v1009
          %v1026 = vsub.f32 %v942, %v1010
          %v1027 = vsub.f32 %v943, %v1011
          %v1028 = vsub.f32 %v944, %v1012
          %v1029 = vsub.f32 %v945, %v1013
          %v1030 = vsub.f32 %v946, %v1014
          %v1031 = vsub.f32 %v947, %v1015
          %v1032 = vsub.f32 %v948, %v1016
          %v1033 = vsub.f32 %v949, %v1017
          %v1034 = vsub.f32 %v950, %v1018
          %v1035 = vsub.f32 %v951, %v1019
          %v1036 = vsub.f32 %v952, %v1020
          %v1037 = vmul.f32 %v1021, %v1021
          %v1038 = vmul.f32 %v1022, %v1022
          %v1039 = vmul.f32 %v1023, %v1023
          %v1040 = vmul.f32 %v1024, %v1024
          %v1041 = vmul.f32 %v1025, %v1025
          %v1042 = vmul.f32 %v1026, %v1026
          %v1043 = vmul.f32 %v1027, %v1027
          %v1044 = vmul.f32 %v1028, %v1028
          %v1045 = vmul.f32 %v1029, %v1029
          %v1046 = vmul.f32 %v1030, %v1030
          %v1047 = vmul.f32 %v1031, %v1031
          %v1048 = vmul.f32 %v1032, %v1032
          %v1049 = vmul.f32 %v1033, %v1033
          %v1050 = vmul.f32 %v1034, %v1034
          %v1051 = vmul.f32 %v1035, %v1035
          %v1052 = vmul.f32 %v1036, %v1036
          %v1053 = vsel %vm955, %v1037, 0.0
          %1054 = vadd.xlane.f32.xlu0 %v1053
          %v1055 = vpop.xlane.xlu0 %1054
          %v1056 = vsel %vm955, %v1038, 0.0
          %1057 = vadd.xlane.f32.xlu0 %v1056
          %v1058 = vpop.xlane.xlu0 %1057
          %v1059 = vsel %vm955, %v1039, 0.0
          %1060 = vadd.xlane.f32.xlu0 %v1059
          %v1061 = vpop.xlane.xlu0 %1060
          %v1062 = vsel %vm955, %v1040, 0.0
          %1063 = vadd.xlane.f32.xlu0 %v1062
          %v1064 = vpop.xlane.xlu0 %1063
          %v1065 = vsel %vm955, %v1041, 0.0
          %1066 = vadd.xlane.f32.xlu0 %v1065
          %v1067 = vpop.xlane.xlu0 %1066
          %v1068 = vsel %vm955, %v1042, 0.0
          %1069 = vadd.xlane.f32.xlu0 %v1068
          %v1070 = vpop.xlane.xlu0 %1069
          %v1071 = vsel %vm955, %v1043, 0.0
          %1072 = vadd.xlane.f32.xlu0 %v1071
          %v1073 = vpop.xlane.xlu0 %1072
          %v1074 = vsel %vm955, %v1044, 0.0
          %1075 = vadd.xlane.f32.xlu0 %v1074
          %v1076 = vpop.xlane.xlu0 %1075
          %v1077 = vsel %vm955, %v1045, 0.0
          %1078 = vadd.xlane.f32.xlu0 %v1077
          %v1079 = vpop.xlane.xlu0 %1078
          %v1080 = vsel %vm955, %v1046, 0.0
          %1081 = vadd.xlane.f32.xlu0 %v1080
          %v1082 = vpop.xlane.xlu0 %1081
          %v1083 = vsel %vm955, %v1047, 0.0
          %1084 = vadd.xlane.f32.xlu0 %v1083
          %v1085 = vpop.xlane.xlu0 %1084
          %v1086 = vsel %vm955, %v1048, 0.0
          %1087 = vadd.xlane.f32.xlu0 %v1086
          %v1088 = vpop.xlane.xlu0 %1087
          %v1089 = vsel %vm955, %v1049, 0.0
          %1090 = vadd.xlane.f32.xlu0 %v1089
          %v1091 = vpop.xlane.xlu0 %1090
          %v1092 = vsel %vm955, %v1050, 0.0
          %1093 = vadd.xlane.f32.xlu0 %v1092
          %v1094 = vpop.xlane.xlu0 %1093
          %v1095 = vsel %vm955, %v1051, 0.0
          %1096 = vadd.xlane.f32.xlu0 %v1095
          %v1097 = vpop.xlane.xlu0 %1096
          %v1098 = vsel %vm955, %v1052, 0.0
          %1099 = vadd.xlane.f32.xlu0 %v1098
          %v1100 = vpop.xlane.xlu0 %1099
          %v1101 = vmul.f32 %v1055, %v1004
          %v1102 = vmul.f32 %v1058, %v1004
          %v1103 = vmul.f32 %v1061, %v1004
          %v1104 = vmul.f32 %v1064, %v1004
          %v1105 = vmul.f32 %v1067, %v1004
          %v1106 = vmul.f32 %v1070, %v1004
          %v1107 = vmul.f32 %v1073, %v1004
          %v1108 = vmul.f32 %v1076, %v1004
          %v1109 = vmul.f32 %v1079, %v1004
          %v1110 = vmul.f32 %v1082, %v1004
          %v1111 = vmul.f32 %v1085, %v1004
          %v1112 = vmul.f32 %v1088, %v1004
          %v1113 = vmul.f32 %v1091, %v1004
          %v1114 = vmul.f32 %v1094, %v1004
          %v1115 = vmul.f32 %v1097, %v1004
          %v1116 = vmul.f32 %v1100, %v1004
          %v1117 = vadd.f32 %v1101, 1e-05
          %v1118 = vadd.f32 %v1102, 1e-05
          %v1119 = vadd.f32 %v1103, 1e-05
          %v1120 = vadd.f32 %v1104, 1e-05
          %v1121 = vadd.f32 %v1105, 1e-05
          %v1122 = vadd.f32 %v1106, 1e-05
          %v1123 = vadd.f32 %v1107, 1e-05
          %v1124 = vadd.f32 %v1108, 1e-05
          %v1125 = vadd.f32 %v1109, 1e-05
          %v1126 = vadd.f32 %v1110, 1e-05
          %v1127 = vadd.f32 %v1111, 1e-05
          %v1128 = vadd.f32 %v1112, 1e-05
          %v1129 = vadd.f32 %v1113, 1e-05
          %v1130 = vadd.f32 %v1114, 1e-05
          %v1131 = vadd.f32 %v1115, 1e-05
          %v1132 = vadd.f32 %v1116, 1e-05
          %v1133 = vrsqrt.pop %v1117
          %v1134 = vrsqrt.pop %v1118
          %v1135 = vrsqrt.pop %v1119
          %v1136 = vrsqrt.pop %v1120
          %v1137 = vrsqrt.pop %v1121
          %v1138 = vrsqrt.pop %v1122
          %v1139 = vrsqrt.pop %v1123
          %v1140 = vrsqrt.pop %v1124
          %v1141 = vrsqrt.pop %v1125
          %v1142 = vrsqrt.pop %v1126
          %v1143 = vrsqrt.pop %v1127
          %v1144 = vrsqrt.pop %v1128
          %v1145 = vrsqrt.pop %v1129
          %v1146 = vrsqrt.pop %v1130
          %v1147 = vrsqrt.pop %v1131
          %v1148 = vrsqrt.pop %v1132
          %v1149 = vmul.f32 %v1021, %v1133
          %v1150 = vmul.f32 %v1022, %v1134
          %v1151 = vmul.f32 %v1023, %v1135
          %v1152 = vmul.f32 %v1024, %v1136
          %v1153 = vmul.f32 %v1025, %v1137
          %v1154 = vmul.f32 %v1026, %v1138
          %v1155 = vmul.f32 %v1027, %v1139
          %v1156 = vmul.f32 %v1028, %v1140
          %v1157 = vmul.f32 %v1029, %v1141
          %v1158 = vmul.f32 %v1030, %v1142
          %v1159 = vmul.f32 %v1031, %v1143
          %v1160 = vmul.f32 %v1032, %v1144
          %v1161 = vmul.f32 %v1033, %v1145
          %v1162 = vmul.f32 %v1034, %v1146
          %v1163 = vmul.f32 %v1035, %v1147
          %v1164 = vmul.f32 %v1036, %v1148
          %v1166 = vlaneseq
          %v1167 = vshrl.u32 %v1166, 7
          %v1168 = vsub.s32 0, %v1167
          %v1169 = vrot.slane %v953, %v1168
          %v1171 = vmul.f32 %v1149, %v1169
          %v1172 = vmul.f32 %v1150, %v1169
          %v1173 = vmul.f32 %v1151, %v1169
          %v1174 = vmul.f32 %v1152, %v1169
          %v1175 = vmul.f32 %v1153, %v1169
          %v1176 = vmul.f32 %v1154, %v1169
          %v1177 = vmul.f32 %v1155, %v1169
          %v1178 = vmul.f32 %v1156, %v1169
          %v1179 = vmul.f32 %v1157, %v1169
          %v1180 = vmul.f32 %v1158, %v1169
          %v1181 = vmul.f32 %v1159, %v1169
          %v1182 = vmul.f32 %v1160, %v1169
          %v1183 = vmul.f32 %v1161, %v1169
          %v1184 = vmul.f32 %v1162, %v1169
          %v1185 = vmul.f32 %v1163, %v1169
          %v1186 = vmul.f32 %v1164, %v1169
          %v1188 = vlaneseq
          %v1189 = vshrl.u32 %v1188, 7
          %v1190 = vsub.s32 0, %v1189
          %v1191 = vrot.slane %v954, %v1190
          %v1193 = vadd.f32 %v1171, %v1191
          %v1194 = vadd.f32 %v1172, %v1191
          %v1195 = vadd.f32 %v1173, %v1191
          %v1196 = vadd.f32 %v1174, %v1191
          %v1197 = vadd.f32 %v1175, %v1191
          %v1198 = vadd.f32 %v1176, %v1191
          %v1199 = vadd.f32 %v1177, %v1191
          %v1200 = vadd.f32 %v1178, %v1191
          %v1201 = vadd.f32 %v1179, %v1191
          %v1202 = vadd.f32 %v1180, %v1191
          %v1203 = vadd.f32 %v1181, %v1191
          %v1204 = vadd.f32 %v1182, %v1191
          %v1205 = vadd.f32 %v1183, %v1191
          %v1206 = vadd.f32 %v1184, %v1191
          %v1207 = vadd.f32 %v1185, %v1191
          %v1208 = vadd.f32 %v1186, %v1191
          %1209 = vst.msk [vmem:[#allocation9] sm:$0xff] %vm955, %v1193
          %1210 = vst.msk [vmem:[#allocation9 + $0x8] sm:$0xff] %vm955, %v1194
          %1211 = vst.msk [vmem:[#allocation9 + $0x10] sm:$0xff] %vm955, %v1195
          %1212 = vst.msk [vmem:[#allocation9 + $0x18] sm:$0xff] %vm955, %v1196
          %1213 = vst.msk [vmem:[#allocation9 + $0x20] sm:$0xff] %vm955, %v1197
          %1214 = vst.msk [vmem:[#allocation9 + $0x28] sm:$0xff] %vm955, %v1198
          %1215 = vst.msk [vmem:[#allocation9 + $0x30] sm:$0xff] %vm955, %v1199
          %1216 = vst.msk [vmem:[#allocation9 + $0x38] sm:$0xff] %vm955, %v1200
          %1217 = vst.msk [vmem:[#allocation9 + $0x40] sm:$0xff] %vm955, %v1201
          %1218 = vst.msk [vmem:[#allocation9 + $0x48] sm:$0xff] %vm955, %v1202
          %1219 = vst.msk [vmem:[#allocation9 + $0x50] sm:$0xff] %vm955, %v1203
          %1220 = vst.msk [vmem:[#allocation9 + $0x58] sm:$0xff] %vm955, %v1204
          %1221 = vst.msk [vmem:[#allocation9 + $0x60] sm:$0xff] %vm955, %v1205
          %1222 = vst.msk [vmem:[#allocation9 + $0x68] sm:$0xff] %vm955, %v1206
          %1223 = vst.msk [vmem:[#allocation9 + $0x70] sm:$0xff] %vm955, %v1207
          %1224 = vst.msk [vmem:[#allocation9 + $0x78] sm:$0xff] %vm955, %v1208
          %v1225 = vpack.c.bf16 %v1194, %v1193
          %v1226 = vpack.c.bf16 %v1196, %v1195
          %v1227 = vpack.c.bf16 %v1198, %v1197
          %v1228 = vpack.c.bf16 %v1200, %v1199
          %v1229 = vpack.c.bf16 %v1202, %v1201
          %v1230 = vpack.c.bf16 %v1204, %v1203
          %v1231 = vpack.c.bf16 %v1206, %v1205
          %v1232 = vpack.c.bf16 %v1208, %v1207
          loop: start=0, step=1, limit=4
          $region289: #{tpu_custom_call.1} parent=83 // loop_pre_header
            _
          $region290: #{tpu_custom_call.1} parent=83 // loop_header
            %s1234 = sphi 0, %s1238
            %p1235 = scmp.ge.s32.totalorder %s1234, 4
          $region291: #{tpu_custom_call.1} parent=83 // loop_header_branch
            %1237 = sbr.rel (%p1235) target = $region295
          $region292: #{tpu_custom_call.1} parent=83 // loop_body
            %s1239 = smul.u32 %s1234, 2
            %s1240 = smul.addr %s1239, 8
            %s1241 = scalar_lea.vmem [#allocation3], %s1240
            %v1242 = vld [vmem:[%s1241] sm:$0xff]
            %v1243 = vld [vmem:[%s1241 + $0x8] sm:$0xff]
            %s1244 = scalar_lea.vmem %s8, %s1234
            %v1245 = vld [vmem:[%s1244] sm:$0x1]
            %v1247 = vlaneseq
            %v1248 = vshrl.u32 %v1247, 7
            %v1249 = vsub.s32 0, %v1248
            %v1250 = vrot.slane %v1245, %v1249
            %v1253 = vsel %vm955, %v1225, 0
            %v1256 = vsel %vm955, %v1226, 0
            %v1259 = vsel %vm955, %v1227, 0
            %v1262 = vsel %vm955, %v1228, 0
            %v1265 = vsel %vm955, %v1229, 0
            %v1268 = vsel %vm955, %v1230, 0
            %v1271 = vsel %vm955, %v1231, 0
            %v1274 = vsel %vm955, %v1232, 0
            %1276 = vmatprep.subr.bf16.mxu0 0
            %1277 = vmatpush1.bf16.msra.mxu0 %v1242
            %1278 = vmatprep.subr.bf16.mxu0 0
            %1279 = vmatpush1.bf16.msra.mxu0 %v1243
            %1280 = vmatprep.subr.bf16.mxu0 0
            %1281 = vmatpush1.bf16.msra.mxu0 0
            %1282 = vmatprep.subr.bf16.mxu0 0
            %1283 = vmatpush1.bf16.msra.mxu0 0
            %1284 = vmatprep.subr.bf16.mxu0 0
            %1285 = vmatpush1.bf16.msra.mxu0 0
            %1286 = vmatprep.subr.bf16.mxu0 0
            %1287 = vmatpush1.bf16.msra.mxu0 0
            %1288 = vmatprep.subr.bf16.mxu0 0
            %1289 = vmatpush1.bf16.msra.mxu0 0
            %1290 = vmatprep.subr.bf16.mxu0 0
            %1291 = vmatpush1.bf16.msra.mxu0 0
            %1292 = vmatprep.subr.bf16.mxu0 0
            %1293 = vmatpush1.bf16.msra.mxu0 0
            %1294 = vmatprep.subr.bf16.mxu0 0
            %1295 = vmatpush1.bf16.msra.mxu0 0
            %1296 = vmatprep.subr.bf16.mxu0 0
            %1297 = vmatpush1.bf16.msra.mxu0 0
            %1298 = vmatprep.subr.bf16.mxu0 0
            %1299 = vmatpush1.bf16.msra.mxu0 0
            %1300 = vmatprep.subr.bf16.mxu0 0
            %1301 = vmatpush1.bf16.msra.mxu0 0
            %1302 = vmatprep.subr.bf16.mxu0 0
            %1303 = vmatpush1.bf16.msra.mxu0 0
            %1304 = vmatprep.subr.bf16.mxu0 0
            %1305 = vmatpush1.bf16.msra.mxu0 0
            %1306 = vmatprep.subr.bf16.mxu0 0
            %1307 = vmatpush1.bf16.msra.mxu0 0
            %1308 = vmatprep.mubr.bf16.mxu0 0
            %1309 = vmatmul.mubr.bf16.gmra.mrb[0].mxu0 %v1253
            %v1310 = vpop.f32.mrb[0].mxu0
            %v1311 = vadd.f32 %v1250, %v1310
            %v1312 = vpop.f32.mrb[0].mxu0
            %v1313 = vpop.f32.mrb[0].mxu0
            %v1314 = vadd.f32 %v1250, %v1313
            %v1315 = vpop.f32.mrb[0].mxu0
            %1316 = vmatprep.mubr.bf16.mxu0 0
            %1317 = vmatmul.mubr.bf16.gmra.mrb[0].mxu0 %v1256
            %v1318 = vpop.f32.mrb[0].mxu0
            %v1319 = vadd.f32 %v1250, %v1318
            %v1320 = vpop.f32.mrb[0].mxu0
            %v1321 = vpop.f32.mrb[0].mxu0
            %v1322 = vadd.f32 %v1250, %v1321
            %v1323 = vpop.f32.mrb[0].mxu0
            %1324 = vmatprep.mubr.bf16.mxu0 0
            %1325 = vmatmul.mubr.bf16.gmra.mrb[0].mxu0 %v1259
            %v1326 = vpop.f32.mrb[0].mxu0
            %v1327 = vadd.f32 %v1250, %v1326
            %v1328 = vpop.f32.mrb[0].mxu0
            %v1329 = vpop.f32.mrb[0].mxu0
            %v1330 = vadd.f32 %v1250, %v1329
            %v1331 = vpop.f32.mrb[0].mxu0
            %1332 = vmatprep.mubr.bf16.mxu0 0
            %1333 = vmatmul.mubr.bf16.gmra.mrb[0].mxu0 %v1262
            %v1334 = vpop.f32.mrb[0].mxu0
            %v1335 = vadd.f32 %v1250, %v1334
            %v1336 = vpop.f32.mrb[0].mxu0
            %v1337 = vpop.f32.mrb[0].mxu0
            %v1338 = vadd.f32 %v1250, %v1337
            %v1339 = vpop.f32.mrb[0].mxu0
            %1340 = vmatprep.mubr.bf16.mxu0 0
            %1341 = vmatmul.mubr.bf16.gmra.mrb[0].mxu0 %v1265
            %v1342 = vpop.f32.mrb[0].mxu0
            %v1343 = vadd.f32 %v1250, %v1342
            %v1344 = vpop.f32.mrb[0].mxu0
            %v1345 = vpop.f32.mrb[0].mxu0
            %v1346 = vadd.f32 %v1250, %v1345
            %v1347 = vpop.f32.mrb[0].mxu0
            %1348 = vmatprep.mubr.bf16.mxu0 0
            %1349 = vmatmul.mubr.bf16.gmra.mrb[0].mxu0 %v1268
            %v1350 = vpop.f32.mrb[0].mxu0
            %v1351 = vadd.f32 %v1250, %v1350
            %v1352 = vpop.f32.mrb[0].mxu0
            %v1353 = vpop.f32.mrb[0].mxu0
            %v1354 = vadd.f32 %v1250, %v1353
            %v1355 = vpop.f32.mrb[0].mxu0
            %1356 = vmatprep.mubr.bf16.mxu0 0
            %1357 = vmatmul.mubr.bf16.gmra.mrb[0].mxu0 %v1271
            %v1358 = vpop.f32.mrb[0].mxu0
            %v1359 = vadd.f32 %v1250, %v1358
            %v1360 = vpop.f32.mrb[0].mxu0
            %v1361 = vpop.f32.mrb[0].mxu0
            %v1362 = vadd.f32 %v1250, %v1361
            %v1363 = vpop.f32.mrb[0].mxu0
            %1364 = vmatprep.mubr.bf16.mxu0 0
            %1365 = vmatmul.mubr.bf16.gmra.mrb[0].mxu0 %v1274
            %v1366 = vpop.f32.mrb[0].mxu0
            %v1367 = vadd.f32 %v1250, %v1366
            %v1368 = vpop.f32.mrb[0].mxu0
            %v1369 = vpop.f32.mrb[0].mxu0
            %v1370 = vadd.f32 %v1250, %v1369
            %v1371 = vpop.f32.mrb[0].mxu0
            %1372 = vdwg.mxu0
            %s1373 = smul.addr %s1239, 8
            %s1374 = scalar_lea.vmem [#allocation5], %s1373
            %v1375 = vld [vmem:[%s1374] sm:$0xff]
            %v1376 = vld [vmem:[%s1374 + $0x8] sm:$0xff]
            %s1377 = scalar_lea.vmem %s10, %s1234
            %v1378 = vld [vmem:[%s1377] sm:$0x1]
            %v1380 = vlaneseq
            %v1381 = vshrl.u32 %v1380, 7
            %v1382 = vsub.s32 0, %v1381
            %v1383 = vrot.slane %v1378, %v1382
            %1385 = vmatprep.subr.bf16.mxu0 0
            %1386 = vmatpush1.bf16.msra.mxu0 %v1375
            %1387 = vmatprep.subr.bf16.mxu0 0
            %1388 = vmatpush1.bf16.msra.mxu0 %v1376
            %1389 = vmatprep.subr.bf16.mxu0 0
            %1390 = vmatpush1.bf16.msra.mxu0 0
            %1391 = vmatprep.subr.bf16.mxu0 0
            %1392 = vmatpush1.bf16.msra.mxu0 0
            %1393 = vmatprep.subr.bf16.mxu0 0
            %1394 = vmatpush1.bf16.msra.mxu0 0
            %1395 = vmatprep.subr.bf16.mxu0 0
            %1396 = vmatpush1.bf16.msra.mxu0 0
            %1397 = vmatprep.subr.bf16.mxu0 0
            %1398 = vmatpush1.bf16.msra.mxu0 0
            %1399 = vmatprep.subr.bf16.mxu0 0
            %1400 = vmatpush1.bf16.msra.mxu0 0
            %1401 = vmatprep.subr.bf16.mxu0 0
            %1402 = vmatpush1.bf16.msra.mxu0 0
            %1403 = vmatprep.subr.bf16.mxu0 0
            %1404 = vmatpush1.bf16.msra.mxu0 0
            %1405 = vmatprep.subr.bf16.mxu0 0
            %1406 = vmatpush1.bf16.msra.mxu0 0
            %1407 = vmatprep.subr.bf16.mxu0 0
            %1408 = vmatpush1.bf16.msra.mxu0 0
            %1409 = vmatprep.subr.bf16.mxu0 0
            %1410 = vmatpush1.bf16.msra.mxu0 0
            %1411 = vmatprep.subr.bf16.mxu0 0
            %1412 = vmatpush1.bf16.msra.mxu0 0
            %1413 = vmatprep.subr.bf16.mxu0 0
            %1414 = vmatpush1.bf16.msra.mxu0 0
            %1415 = vmatprep.subr.bf16.mxu0 0
            %1416 = vmatpush1.bf16.msra.mxu0 0
            %1417 = vmatprep.mubr.bf16.mxu0 0
            %1418 = vmatmul.mubr.bf16.gmra.mrb[0].mxu0 %v1253
            %v1419 = vpop.f32.mrb[0].mxu0
            %v1420 = vadd.f32 %v1383, %v1419
            %v1421 = vpop.f32.mrb[0].mxu0
            %v1422 = vpop.f32.mrb[0].mxu0
            %v1423 = vadd.f32 %v1383, %v1422
            %v1424 = vpop.f32.mrb[0].mxu0
            %1425 = vmatprep.mubr.bf16.mxu0 0
            %1426 = vmatmul.mubr.bf16.gmra.mrb[0].mxu0 %v1256
            %v1427 = vpop.f32.mrb[0].mxu0
            %v1428 = vadd.f32 %v1383, %v1427
            %v1429 = vpop.f32.mrb[0].mxu0
            %v1430 = vpop.f32.mrb[0].mxu0
            %v1431 = vadd.f32 %v1383, %v1430
            %v1432 = vpop.f32.mrb[0].mxu0
            %1433 = vmatprep.mubr.bf16.mxu0 0
            %1434 = vmatmul.mubr.bf16.gmra.mrb[0].mxu0 %v1259
            %v1435 = vpop.f32.mrb[0].mxu0
            %v1436 = vadd.f32 %v1383, %v1435
            %v1437 = vpop.f32.mrb[0].mxu0
            %v1438 = vpop.f32.mrb[0].mxu0
            %v1439 = vadd.f32 %v1383, %v1438
            %v1440 = vpop.f32.mrb[0].mxu0
            %1441 = vmatprep.mubr.bf16.mxu0 0
            %1442 = vmatmul.mubr.bf16.gmra.mrb[0].mxu0 %v1262
            %v1443 = vpop.f32.mrb[0].mxu0
            %v1444 = vadd.f32 %v1383, %v1443
            %v1445 = vpop.f32.mrb[0].mxu0
            %v1446 = vpop.f32.mrb[0].mxu0
            %v1447 = vadd.f32 %v1383, %v1446
            %v1448 = vpop.f32.mrb[0].mxu0
            %1449 = vmatprep.mubr.bf16.mxu0 0
            %1450 = vmatmul.mubr.bf16.gmra.mrb[0].mxu0 %v1265
            %v1451 = vpop.f32.mrb[0].mxu0
            %v1452 = vadd.f32 %v1383, %v1451
            %v1453 = vpop.f32.mrb[0].mxu0
            %v1454 = vpop.f32.mrb[0].mxu0
            %v1455 = vadd.f32 %v1383, %v1454
            %v1456 = vpop.f32.mrb[0].mxu0
            %1457 = vmatprep.mubr.bf16.mxu0 0
            %1458 = vmatmul.mubr.bf16.gmra.mrb[0].mxu0 %v1268
            %v1459 = vpop.f32.mrb[0].mxu0
            %v1460 = vadd.f32 %v1383, %v1459
            %v1461 = vpop.f32.mrb[0].mxu0
            %v1462 = vpop.f32.mrb[0].mxu0
            %v1463 = vadd.f32 %v1383, %v1462
            %v1464 = vpop.f32.mrb[0].mxu0
            %1465 = vmatprep.mubr.bf16.mxu0 0
            %1466 = vmatmul.mubr.bf16.gmra.mrb[0].mxu0 %v1271
            %v1467 = vpop.f32.mrb[0].mxu0
            %v1468 = vadd.f32 %v1383, %v1467
            %v1469 = vpop.f32.mrb[0].mxu0
            %v1470 = vpop.f32.mrb[0].mxu0
            %v1471 = vadd.f32 %v1383, %v1470
            %v1472 = vpop.f32.mrb[0].mxu0
            %1473 = vmatprep.mubr.bf16.mxu0 0
            %1474 = vmatmul.mubr.bf16.gmra.mrb[0].mxu0 %v1274
            %v1475 = vpop.f32.mrb[0].mxu0
            %v1476 = vadd.f32 %v1383, %v1475
            %v1477 = vpop.f32.mrb[0].mxu0
            %v1478 = vpop.f32.mrb[0].mxu0
            %v1479 = vadd.f32 %v1383, %v1478
            %v1480 = vpop.f32.mrb[0].mxu0
            %1481 = vdwg.mxu0
            %v1482 = vpack.c.bf16 %v1314, %v1311
            %v1483 = vpack.c.bf16 %v1322, %v1319
            %v1484 = vpack.c.bf16 %v1330, %v1327
            %v1485 = vpack.c.bf16 %v1338, %v1335
            %v1486 = vpack.c.bf16 %v1346, %v1343
            %v1487 = vpack.c.bf16 %v1354, %v1351
            %v1488 = vpack.c.bf16 %v1362, %v1359
            %v1489 = vpack.c.bf16 %v1370, %v1367
            %s1490 = smul.u32 %s1234, 8
            %s1491 = smul.addr %s1490, 8
            %s1492 = scalar_lea.vmem [#allocation10], %s1491
            %vm1493 = vcmask 64512
            %1494 = vst.msk [vmem:[%s1492] sm:$0xff] %vm1493, %v1482
            %1495 = vst.msk [vmem:[%s1492 + $0x8] sm:$0xff] %vm1493, %v1483
            %1496 = vst.msk [vmem:[%s1492 + $0x10] sm:$0xff] %vm1493, %v1484
            %1497 = vst.msk [vmem:[%s1492 + $0x18] sm:$0xff] %vm1493, %v1485
            %1498 = vst.msk [vmem:[%s1492 + $0x20] sm:$0xff] %vm1493, %v1486
            %1499 = vst.msk [vmem:[%s1492 + $0x28] sm:$0xff] %vm1493, %v1487
            %1500 = vst.msk [vmem:[%s1492 + $0x30] sm:$0xff] %vm1493, %v1488
            %1501 = vst.msk [vmem:[%s1492 + $0x38] sm:$0xff] %vm1493, %v1489
            %v1502 = vpack.c.bf16 %v1423, %v1420
            %v1503 = vpack.c.bf16 %v1431, %v1428
            %v1504 = vpack.c.bf16 %v1439, %v1436
            %v1505 = vpack.c.bf16 %v1447, %v1444
            %v1506 = vpack.c.bf16 %v1455, %v1452
            %v1507 = vpack.c.bf16 %v1463, %v1460
            %v1508 = vpack.c.bf16 %v1471, %v1468
            %v1509 = vpack.c.bf16 %v1479, %v1476
            %s1510 = smul.addr %s1490, 8
            %s1511 = scalar_lea.vmem [#allocation11], %s1510
            %1512 = vst.msk [vmem:[%s1511] sm:$0xff] %vm1493, %v1502
            %1513 = vst.msk [vmem:[%s1511 + $0x8] sm:$0xff] %vm1493, %v1503
            %1514 = vst.msk [vmem:[%s1511 + $0x10] sm:$0xff] %vm1493, %v1504
            %1515 = vst.msk [vmem:[%s1511 + $0x18] sm:$0xff] %vm1493, %v1505
            %1516 = vst.msk [vmem:[%s1511 + $0x20] sm:$0xff] %vm1493, %v1506
            %1517 = vst.msk [vmem:[%s1511 + $0x28] sm:$0xff] %vm1493, %v1507
            %1518 = vst.msk [vmem:[%s1511 + $0x30] sm:$0xff] %vm1493, %v1508
            %1519 = vst.msk [vmem:[%s1511 + $0x38] sm:$0xff] %vm1493, %v1509
          $region293: #{tpu_custom_call.1} parent=83 // loop_footer
            %s1238 = sadd.s32 1, %s1234
          $region294: #{tpu_custom_call.1} parent=83 // loop_footer_branch
            %1233 = sbr.rel target = $region290
          $region295: #{tpu_custom_call.1} parent=83 // loop_exit
            _
          %1520 = vst [vmem:[#allocation12] sm:$0x1] -1e+30
          %1521 = vst [vmem:[#allocation12 + $0x1] sm:$0x1] -1e+30
          %1522 = vst [vmem:[#allocation12 + $0x2] sm:$0x1] -1e+30
          %1523 = vst [vmem:[#allocation12 + $0x3] sm:$0x1] -1e+30
          %1524 = vst [vmem:[#allocation13] sm:$0x1] 0.0
          %1525 = vst [vmem:[#allocation13 + $0x1] sm:$0x1] 0.0
          %1526 = vst [vmem:[#allocation13 + $0x2] sm:$0x1] 0.0
          %1527 = vst [vmem:[#allocation13 + $0x3] sm:$0x1] 0.0
          %1528 = vst [vmem:[#allocation14] sm:$0xff] 0.0
          %1529 = vst [vmem:[#allocation14 + $0x8] sm:$0xff] 0.0
          %1530 = vst [vmem:[#allocation14 + $0x10] sm:$0xff] 0.0
          %1531 = vst [vmem:[#allocation14 + $0x18] sm:$0xff] 0.0
        $region84: #{tpu_custom_call.1} parent=79 // pred_fallthru
          _
        %v1532 = vld [vmem:[%s584] sm:$0xff]
        %v1533 = vld [vmem:[%s3] sm:$0x1]
        %v1534 = vld [vmem:[%s4] sm:$0x1]
        %vm1535 = vcmask 261120
        %v1536 = vsel %vm1535, %v1532, 0.0
        %1537 = vadd.xlane.f32.xlu0 %v1536
        %v1538 = vpop.xlane.xlu0 %1537
        %v1539 = vrcp.pop 32.0
        %v1540 = vmul.f32 %v1538, %v1539
        %v1541 = vsub.f32 %v1532, %v1540
        %v1542 = vmul.f32 %v1541, %v1541
        %v1543 = vsel %vm1535, %v1542, 0.0
        %1544 = vadd.xlane.f32.xlu0 %v1543
        %v1545 = vpop.xlane.xlu0 %1544
        %v1546 = vmul.f32 %v1545, %v1539
        %v1547 = vadd.f32 %v1546, 1e-05
        %v1548 = vrsqrt.pop %v1547
        %v1549 = vmul.f32 %v1541, %v1548
        %v1551 = vlaneseq
        %v1552 = vshrl.u32 %v1551, 7
        %v1553 = vsub.s32 0, %v1552
        %v1554 = vrot.slane %v1533, %v1553
        %v1556 = vmul.f32 %v1549, %v1554
        %v1558 = vlaneseq
        %v1559 = vshrl.u32 %v1558, 7
        %v1560 = vsub.s32 0, %v1559
        %v1561 = vrot.slane %v1534, %v1560
        %v1563 = vadd.f32 %v1556, %v1561
        %v1564 = vpack.c.bf16 %v1563, %v1563
        %v1565 = vld [vmem:[%s592] sm:$0x1]
        %vm1566 = vcmp.eq.f32.partialorder %v1565, 0.0
        %v1567 = vsel %vm1566, -9e+15, %v1565
        %v1568 = vlaneseq
        %v1569 = vshrl.u32 %v1568, 7
        %s1570 = smul.u32 %s42, 8
        %v1571 = vstv %s1570
        %v1572 = vadd.s32 %v1571, %v1569
        %vm1573 = vcmp.lt.s32.totalorder %v1572, 12
        %1574 = vst.msk [vmem:[#allocation15] sm:$0xff] %vm1535, 0.0
        loop: start=0, step=1, limit=4
        $region296: #{tpu_custom_call.1} parent=79 // loop_pre_header
          _
        $region297: #{tpu_custom_call.1} parent=79 // loop_header
          %s1576 = sphi 0, %s1580
          %p1577 = scmp.ge.s32.totalorder %s1576, 4
        $region298: #{tpu_custom_call.1} parent=79 // loop_header_branch
          %1579 = sbr.rel (%p1577) target = $region302
        $region299: #{tpu_custom_call.1} parent=79 // loop_body
          %s1581 = smul.u32 %s1576, 2
          %s1582 = smul.addr %s1581, 8
          %s1583 = scalar_lea.vmem [#allocation2], %s1582
          %v1584 = vld [vmem:[%s1583] sm:$0xff]
          %v1585 = vld [vmem:[%s1583 + $0x8] sm:$0xff]
          %s1586 = scalar_lea.vmem %s7, %s1576
          %v1587 = vld [vmem:[%s1586] sm:$0x1]
          %v1589 = vlaneseq
          %v1590 = vshrl.u32 %v1589, 7
          %v1591 = vsub.s32 0, %v1590
          %v1592 = vrot.slane %v1587, %v1591
          %v1595 = vsel %vm1535, %v1564, 0
          %1597 = vmatprep.subr.bf16.mxu0 0
          %1598 = vmatpush1.bf16.msra.mxu0 %v1584
          %1599 = vmatprep.subr.bf16.mxu0 0
          %1600 = vmatpush1.bf16.msra.mxu0 %v1585
          %1601 = vmatprep.subr.bf16.mxu0 0
          %1602 = vmatpush1.bf16.msra.mxu0 0
          %1603 = vmatprep.subr.bf16.mxu0 0
          %1604 = vmatpush1.bf16.msra.mxu0 0
          %1605 = vmatprep.subr.bf16.mxu0 0
          %1606 = vmatpush1.bf16.msra.mxu0 0
          %1607 = vmatprep.subr.bf16.mxu0 0
          %1608 = vmatpush1.bf16.msra.mxu0 0
          %1609 = vmatprep.subr.bf16.mxu0 0
          %1610 = vmatpush1.bf16.msra.mxu0 0
          %1611 = vmatprep.subr.bf16.mxu0 0
          %1612 = vmatpush1.bf16.msra.mxu0 0
          %1613 = vmatprep.subr.bf16.mxu0 0
          %1614 = vmatpush1.bf16.msra.mxu0 0
          %1615 = vmatprep.subr.bf16.mxu0 0
          %1616 = vmatpush1.bf16.msra.mxu0 0
          %1617 = vmatprep.subr.bf16.mxu0 0
          %1618 = vmatpush1.bf16.msra.mxu0 0
          %1619 = vmatprep.subr.bf16.mxu0 0
          %1620 = vmatpush1.bf16.msra.mxu0 0
          %1621 = vmatprep.subr.bf16.mxu0 0
          %1622 = vmatpush1.bf16.msra.mxu0 0
          %1623 = vmatprep.subr.bf16.mxu0 0
          %1624 = vmatpush1.bf16.msra.mxu0 0
          %1625 = vmatprep.subr.bf16.mxu0 0
          %1626 = vmatpush1.bf16.msra.mxu0 0
          %1627 = vmatprep.subr.bf16.mxu0 0
          %1628 = vmatpush1.bf16.msra.mxu0 0
          %1629 = vmatprep.mubr.bf16.mxu0 0
          %1630 = vmatmul.mubr.bf16.gmra.mrb[0].mxu0 %v1595
          %v1631 = vpop.f32.mrb[0].mxu0
          %v1632 = vadd.f32 %v1592, %v1631
          %v1633 = vpop.f32.mrb[0].mxu0
          %v1634 = vpop.f32.mrb[0].mxu0
          %v1635 = vpop.f32.mrb[0].mxu0
          %1636 = vdwg.mxu0
          %v1637 = vpack.c.bf16 %v1632, %v1632
          %s1638 = smul.addr %s1581, 8
          %s1639 = scalar_lea.vmem [#allocation4], %s1638
          %v1640 = vld [vmem:[%s1639] sm:$0xff]
          %v1641 = vld [vmem:[%s1639 + $0x8] sm:$0xff]
          %s1642 = scalar_lea.vmem %s9, %s1576
          %v1643 = vld [vmem:[%s1642] sm:$0x1]
          %v1645 = vlaneseq
          %v1646 = vshrl.u32 %v1645, 7
          %v1647 = vsub.s32 0, %v1646
          %v1648 = vrot.slane %v1643, %v1647
          %1650 = vmatprep.subr.bf16.mxu0 0
          %1651 = vmatpush1.bf16.msra.mxu0 %v1640
          %1652 = vmatprep.subr.bf16.mxu0 0
          %1653 = vmatpush1.bf16.msra.mxu0 %v1641
          %1654 = vmatprep.subr.bf16.mxu0 0
          %1655 = vmatpush1.bf16.msra.mxu0 0
          %1656 = vmatprep.subr.bf16.mxu0 0
          %1657 = vmatpush1.bf16.msra.mxu0 0
          %1658 = vmatprep.subr.bf16.mxu0 0
          %1659 = vmatpush1.bf16.msra.mxu0 0
          %1660 = vmatprep.subr.bf16.mxu0 0
          %1661 = vmatpush1.bf16.msra.mxu0 0
          %1662 = vmatprep.subr.bf16.mxu0 0
          %1663 = vmatpush1.bf16.msra.mxu0 0
          %1664 = vmatprep.subr.bf16.mxu0 0
          %1665 = vmatpush1.bf16.msra.mxu0 0
          %1666 = vmatprep.subr.bf16.mxu0 0
          %1667 = vmatpush1.bf16.msra.mxu0 0
          %1668 = vmatprep.subr.bf16.mxu0 0
          %1669 = vmatpush1.bf16.msra.mxu0 0
          %1670 = vmatprep.subr.bf16.mxu0 0
          %1671 = vmatpush1.bf16.msra.mxu0 0
          %1672 = vmatprep.subr.bf16.mxu0 0
          %1673 = vmatpush1.bf16.msra.mxu0 0
          %1674 = vmatprep.subr.bf16.mxu0 0
          %1675 = vmatpush1.bf16.msra.mxu0 0
          %1676 = vmatprep.subr.bf16.mxu0 0
          %1677 = vmatpush1.bf16.msra.mxu0 0
          %1678 = vmatprep.subr.bf16.mxu0 0
          %1679 = vmatpush1.bf16.msra.mxu0 0
          %1680 = vmatprep.subr.bf16.mxu0 0
          %1681 = vmatpush1.bf16.msra.mxu0 0
          %1682 = vmatprep.mubr.bf16.mxu0 0
          %1683 = vmatmul.mubr.bf16.gmra.mrb[0].mxu0 %v1595
          %v1684 = vpop.f32.mrb[0].mxu0
          %v1685 = vadd.f32 %v1648, %v1684
          %v1686 = vpop.f32.mrb[0].mxu0
          %v1687 = vpop.f32.mrb[0].mxu0
          %v1688 = vpop.f32.mrb[0].mxu0
          %1689 = vdwg.mxu0
          %v1690 = vpack.c.bf16 %v1685, %v1685
          %s1691 = smul.u32 %s1576, 8
          %s1692 = smul.addr %s1691, 8
          %s1693 = scalar_lea.vmem [#allocation10], %s1692
          %v1694 = vld [vmem:[%s1693] sm:$0xff]
          %v1695 = vld [vmem:[%s1693 + $0x8] sm:$0xff]
          %v1696 = vld [vmem:[%s1693 + $0x10] sm:$0xff]
          %v1697 = vld [vmem:[%s1693 + $0x18] sm:$0xff]
          %v1698 = vld [vmem:[%s1693 + $0x20] sm:$0xff]
          %v1699 = vld [vmem:[%s1693 + $0x28] sm:$0xff]
          %v1700 = vld [vmem:[%s1693 + $0x30] sm:$0xff]
          %v1701 = vld [vmem:[%s1693 + $0x38] sm:$0xff]
          %vm1702 = vcmask 64512
          %v1704 = vsel %vm1702, %v1637, 0
          %v1707 = vsel %vm1702, %v1694, 0
          %v1710 = vsel %vm1702, %v1695, 0
          %v1713 = vsel %vm1702, %v1696, 0
          %v1716 = vsel %vm1702, %v1697, 0
          %v1719 = vsel %vm1702, %v1698, 0
          %v1722 = vsel %vm1702, %v1699, 0
          %v1725 = vsel %vm1702, %v1700, 0
          %v1728 = vsel %vm1702, %v1701, 0
          %1730 = vmatprep.subr.bf16.mxu0 0
          %1731 = vmatpush1.bf16.xpose.msra.mxu0 %v1707
          %1732 = vmatprep.subr.bf16.mxu0 0
          %1733 = vmatpush1.bf16.xpose.msra.mxu0 %v1710
          %1734 = vmatprep.subr.bf16.mxu0 0
          %1735 = vmatpush1.bf16.xpose.msra.mxu0 %v1713
          %1736 = vmatprep.subr.bf16.mxu0 0
          %1737 = vmatpush1.bf16.xpose.msra.mxu0 %v1716
          %1738 = vmatprep.subr.bf16.mxu0 0
          %1739 = vmatpush1.bf16.xpose.msra.mxu0 %v1719
          %1740 = vmatprep.subr.bf16.mxu0 0
          %1741 = vmatpush1.bf16.xpose.msra.mxu0 %v1722
          %1742 = vmatprep.subr.bf16.mxu0 0
          %1743 = vmatpush1.bf16.xpose.msra.mxu0 %v1725
          %1744 = vmatprep.subr.bf16.mxu0 0
          %1745 = vmatpush1.bf16.xpose.msra.mxu0 %v1728
          %1746 = vmatprep.subr.bf16.mxu0 0
          %1747 = vmatpush1.bf16.xpose.msra.mxu0 0
          %1748 = vmatprep.subr.bf16.mxu0 0
          %1749 = vmatpush1.bf16.xpose.msra.mxu0 0
          %1750 = vmatprep.subr.bf16.mxu0 0
          %1751 = vmatpush1.bf16.xpose.msra.mxu0 0
          %1752 = vmatprep.subr.bf16.mxu0 0
          %1753 = vmatpush1.bf16.xpose.msra.mxu0 0
          %1754 = vmatprep.subr.bf16.mxu0 0
          %1755 = vmatpush1.bf16.xpose.msra.mxu0 0
          %1756 = vmatprep.subr.bf16.mxu0 0
          %1757 = vmatpush1.bf16.xpose.msra.mxu0 0
          %1758 = vmatprep.subr.bf16.mxu0 0
          %1759 = vmatpush1.bf16.xpose.msra.mxu0 0
          %1760 = vmatprep.subr.bf16.mxu0 0
          %1761 = vmatpush1.bf16.xpose.msra.mxu0 0
          %1762 = vmatprep.mubr.bf16.mxu0 0
          %1763 = vmatmul.mubr.bf16.gmra.mrb[0].mxu0 %v1704
          %v1764 = vpop.f32.mrb[0].mxu0
          %v1765 = vadd.f32 0.0, %v1764
          %v1766 = vpop.f32.mrb[0].mxu0
          %v1767 = vpop.f32.mrb[0].mxu0
          %v1768 = vpop.f32.mrb[0].mxu0
          %1769 = vdwg.mxu0
          %v1770 = vmax.f32 %v1765, -50000.0
          %v1771 = vmin.f32 %v1770, 50000.0
          %v1773 = vlaneseq
          %v1774 = vshrl.u32 %v1773, 7
          %v1775 = vsub.s32 0, %v1774
          %v1776 = vrot.slane %v1567, %v1775
          %v1778 = vadd.f32 %v1771, %v1776
          %1779 = vmax.xlane.f32.xlu0 %v1778
          %v1780 = vpop.xlane.xlu0 %1779
          %v1781 = vsub.f32 %v1778, %v1780
          %v1782 = vmul.f32 %v1781, 1.442695
          %v1783 = vpow.pop %v1782
          %1784 = vadd.xlane.f32.xlu0 %v1783
          %v1785 = vpop.xlane.xlu0 %1784
          %v1786 = vpack.c.bf16 %v1783, %v1783
          %s1787 = smul.addr %s1691, 8
          %s1788 = scalar_lea.vmem [#allocation11], %s1787
          %v1789 = vld [vmem:[%s1788] sm:$0xff]
          %v1790 = vld [vmem:[%s1788 + $0x8] sm:$0xff]
          %v1791 = vld [vmem:[%s1788 + $0x10] sm:$0xff]
          %v1792 = vld [vmem:[%s1788 + $0x18] sm:$0xff]
          %v1793 = vld [vmem:[%s1788 + $0x20] sm:$0xff]
          %v1794 = vld [vmem:[%s1788 + $0x28] sm:$0xff]
          %v1795 = vld [vmem:[%s1788 + $0x30] sm:$0xff]
          %v1796 = vld [vmem:[%s1788 + $0x38] sm:$0xff]
          %1797 = vmatprep.subr.bf16.mxu0 0
          %1798 = vmatpush1.bf16.msra.mxu0 %v1789
          %1799 = vmatprep.subr.bf16.mxu0 0
          %1800 = vmatpush1.bf16.msra.mxu0 %v1790
          %1801 = vmatprep.subr.bf16.mxu0 0
          %1802 = vmatpush1.bf16.msra.mxu0 %v1791
          %1803 = vmatprep.subr.bf16.mxu0 0
          %1804 = vmatpush1.bf16.msra.mxu0 %v1792
          %1805 = vmatprep.subr.bf16.mxu0 0
          %1806 = vmatpush1.bf16.msra.mxu0 %v1793
          %1807 = vmatprep.subr.bf16.mxu0 0
          %1808 = vmatpush1.bf16.msra.mxu0 %v1794
          %1809 = vmatprep.subr.bf16.mxu0 0
          %1810 = vmatpush1.bf16.msra.mxu0 %v1795
          %1811 = vmatprep.subr.bf16.mxu0 0
          %1812 = vmatpush1.bf16.msra.mxu0 %v1796
          %1813 = vmatprep.subr.bf16.mxu0 0
          %1814 = vmatpush1.bf16.msra.mxu0 0
          %1815 = vmatprep.subr.bf16.mxu0 0
          %1816 = vmatpush1.bf16.msra.mxu0 0
          %1817 = vmatprep.subr.bf16.mxu0 0
          %1818 = vmatpush1.bf16.msra.mxu0 0
          %1819 = vmatprep.subr.bf16.mxu0 0
          %1820 = vmatpush1.bf16.msra.mxu0 0
          %1821 = vmatprep.subr.bf16.mxu0 0
          %1822 = vmatpush1.bf16.msra.mxu0 0
          %1823 = vmatprep.subr.bf16.mxu0 0
          %1824 = vmatpush1.bf16.msra.mxu0 0
          %1825 = vmatprep.subr.bf16.mxu0 0
          %1826 = vmatpush1.bf16.msra.mxu0 0
          %1827 = vmatprep.subr.bf16.mxu0 0
          %1828 = vmatpush1.bf16.msra.mxu0 0
          %1829 = vmatprep.mubr.bf16.mxu0 0
          %1830 = vmatmul.mubr.bf16.gmra.mrb[0].mxu0 %v1786
          %v1831 = vpop.f32.mrb[0].mxu0
          %v1832 = vadd.f32 0.0, %v1831
          %v1833 = vpop.f32.mrb[0].mxu0
          %v1834 = vpop.f32.mrb[0].mxu0
          %v1835 = vpop.f32.mrb[0].mxu0
          %1836 = vdwg.mxu0
          %v1837 = vrcp.pop %v1785
          %v1838 = vmul.f32 %v1832, %v1837
          %v1839 = vld [vmem:[#allocation15] sm:$0xff]
          %v1840 = vpack.c.bf16 %v1838, %v1838
          %s1841 = smul.addr %s1576, 4
          %s1842 = scalar_lea.vmem [#allocation6], %s1841
          %v1843 = vld [vmem:[%s1842] sm:$0xf]
          %v1845 = vsel %vm1702, %v1840, 0
          %vm1847 = vcmask 1043456
          %v1849 = vsel %vm1847, %v1843, 0
          %1851 = vmatprep.subr.bf16.mxu0 0
          %1852 = vmatpush1.bf16.msra.mxu0 %v1849
          %1853 = vmatprep.subr.bf16.mxu0 0
          %1854 = vmatpush1.bf16.msra.mxu0 0
          %1855 = vmatprep.subr.bf16.mxu0 0
          %1856 = vmatpush1.bf16.msra.mxu0 0
          %1857 = vmatprep.subr.bf16.mxu0 0
          %1858 = vmatpush1.bf16.msra.mxu0 0
          %1859 = vmatprep.subr.bf16.mxu0 0
          %1860 = vmatpush1.bf16.msra.mxu0 0
          %1861 = vmatprep.subr.bf16.mxu0 0
          %1862 = vmatpush1.bf16.msra.mxu0 0
          %1863 = vmatprep.subr.bf16.mxu0 0
          %1864 = vmatpush1.bf16.msra.mxu0 0
          %1865 = vmatprep.subr.bf16.mxu0 0
          %1866 = vmatpush1.bf16.msra.mxu0 0
          %1867 = vmatprep.subr.bf16.mxu0 0
          %1868 = vmatpush1.bf16.msra.mxu0 0
          %1869 = vmatprep.subr.bf16.mxu0 0
          %1870 = vmatpush1.bf16.msra.mxu0 0
          %1871 = vmatprep.subr.bf16.mxu0 0
          %1872 = vmatpush1.bf16.msra.mxu0 0
          %1873 = vmatprep.subr.bf16.mxu0 0
          %1874 = vmatpush1.bf16.msra.mxu0 0
          %1875 = vmatprep.subr.bf16.mxu0 0
          %1876 = vmatpush1.bf16.msra.mxu0 0
          %1877 = vmatprep.subr.bf16.mxu0 0
          %1878 = vmatpush1.bf16.msra.mxu0 0
          %1879 = vmatprep.subr.bf16.mxu0 0
          %1880 = vmatpush1.bf16.msra.mxu0 0
          %1881 = vmatprep.subr.bf16.mxu0 0
          %1882 = vmatpush1.bf16.msra.mxu0 0
          %1883 = vmatprep.mubr.bf16.mxu0 0
          %1884 = vmatmul.mubr.bf16.gmra.mrb[0].mxu0 %v1845
          %v1885 = vpop.f32.mrb[0].mxu0
          %v1886 = vadd.f32 0.0, %v1885
          %v1887 = vpop.f32.mrb[0].mxu0
          %v1888 = vpop.f32.mrb[0].mxu0
          %v1889 = vpop.f32.mrb[0].mxu0
          %1890 = vdwg.mxu0
          %v1891 = vadd.f32 %v1839, %v1886
          %1892 = vst.msk [vmem:[#allocation15] sm:$0xff] %vm1535, %v1891
          %v1893 = vsel %vm1573, 1, 0
          %vm1894 = vcmp.eq.s32.totalorder %v1893, 1
          %v1895 = vsel %vm1894, %v1771, -1e+30
          %v1896 = vrot.slane %v1895, 4
          %v1897 = vmax.f32 %v1895, %v1896
          %v1898 = vrot.slane %v1897, 2
          %v1899 = vmax.f32 %v1897, %v1898
          %v1900 = vrot.slane %v1899, 1
          %v1901 = vmax.f32 %v1899, %v1900
          %s1902 = scalar_lea.vmem [#allocation12], %s1576
          %v1903 = vld [vmem:[%s1902] sm:$0x1]
          %v1904 = vmax.f32 %v1903, %v1901
          %v1905 = vsub.f32 %v1903, %v1904
          %v1906 = vmul.f32 %v1905, 1.442695
          %v1907 = vpow.pop %v1906
          %v1909 = vlaneseq
          %v1910 = vshrl.u32 %v1909, 7
          %v1911 = vsub.s32 0, %v1910
          %v1912 = vrot.slane %v1904, %v1911
          %v1914 = vsub.f32 %v1895, %v1912
          %v1915 = vmul.f32 %v1914, 1.442695
          %v1916 = vpow.pop %v1915
          %s1917 = scalar_lea.vmem [#allocation13], %s1576
          %v1918 = vld [vmem:[%s1917] sm:$0x1]
          %v1919 = vmul.f32 %v1907, %v1918
          %v1920 = vrot.slane %v1916, 4
          %v1921 = vadd.f32 %v1916, %v1920
          %v1922 = vrot.slane %v1921, 2
          %v1923 = vadd.f32 %v1921, %v1922
          %v1924 = vrot.slane %v1923, 1
          %v1925 = vadd.f32 %v1923, %v1924
          %v1926 = vadd.f32 %v1919, %v1925
          %1927 = vst [vmem:[%s1917] sm:$0x1] %v1926
          %v1928 = vpack.c.bf16 %v1916, %v1916
          %1929 = vxpose.xlu0.c.b16.start [1/8] %v1690, 128
          %1930 = vxpose.xlu0.c.b16.cont [2/8] 0, 128
          %1931 = vxpose.xlu0.c.b16.cont [3/8] 0, 128
          %1932 = vxpose.xlu0.c.b16.cont [4/8] 0, 128
          %1933 = vxpose.xlu0.c.b16.cont [5/8] 0, 128
          %1934 = vxpose.xlu0.c.b16.cont [6/8] 0, 128
          %1935 = vxpose.xlu0.c.b16.cont [7/8] 0, 128
          %1936 = vxpose.xlu0.c.b16.end [8/8] 0, 128
          %v1937 = vpop.trf.xlu0
          %v1938 = vpop.trf.xlu0
          %v1939 = vpop.trf.xlu0
          %v1940 = vpop.trf.xlu0
          %v1941 = vpop.trf.xlu0
          %v1942 = vpop.trf.xlu0
          %v1943 = vpop.trf.xlu0
          %v1944 = vpop.trf.xlu0
          %v1946 = vsel %vm1702, %v1937, 0
          %v1949 = vsel %vm1847, %v1928, 0
          %1951 = vmatprep.subr.bf16.mxu0 0
          %1952 = vmatpush1.bf16.msra.mxu0 %v1949
          %1953 = vmatprep.subr.bf16.mxu0 0
          %1954 = vmatpush1.bf16.msra.mxu0 0
          %1955 = vmatprep.subr.bf16.mxu0 0
          %1956 = vmatpush1.bf16.msra.mxu0 0
          %1957 = vmatprep.subr.bf16.mxu0 0
          %1958 = vmatpush1.bf16.msra.mxu0 0
          %1959 = vmatprep.subr.bf16.mxu0 0
          %1960 = vmatpush1.bf16.msra.mxu0 0
          %1961 = vmatprep.subr.bf16.mxu0 0
          %1962 = vmatpush1.bf16.msra.mxu0 0
          %1963 = vmatprep.subr.bf16.mxu0 0
          %1964 = vmatpush1.bf16.msra.mxu0 0
          %1965 = vmatprep.subr.bf16.mxu0 0
          %1966 = vmatpush1.bf16.msra.mxu0 0
          %1967 = vmatprep.subr.bf16.mxu0 0
          %1968 = vmatpush1.bf16.msra.mxu0 0
          %1969 = vmatprep.subr.bf16.mxu0 0
          %1970 = vmatpush1.bf16.msra.mxu0 0
          %1971 = vmatprep.subr.bf16.mxu0 0
          %1972 = vmatpush1.bf16.msra.mxu0 0
          %1973 = vmatprep.subr.bf16.mxu0 0
          %1974 = vmatpush1.bf16.msra.mxu0 0
          %1975 = vmatprep.subr.bf16.mxu0 0
          %1976 = vmatpush1.bf16.msra.mxu0 0
          %1977 = vmatprep.subr.bf16.mxu0 0
          %1978 = vmatpush1.bf16.msra.mxu0 0
          %1979 = vmatprep.subr.bf16.mxu0 0
          %1980 = vmatpush1.bf16.msra.mxu0 0
          %1981 = vmatprep.subr.bf16.mxu0 0
          %1982 = vmatpush1.bf16.msra.mxu0 0
          %1983 = vmatprep.mubr.bf16.mxu0 0
          %1984 = vmatmul.mubr.bf16.gmra.mrb[0].mxu0 %v1946
          %v1985 = vpop.f32.mrb[0].mxu0
          %v1986 = vadd.f32 0.0, %v1985
          %v1987 = vpop.f32.mrb[0].mxu0
          %v1988 = vpop.f32.mrb[0].mxu0
          %v1989 = vpop.f32.mrb[0].mxu0
          %1990 = vdwg.mxu0
          %s1991 = scalar_lea.vmem [#allocation14], %s1691
          %v1992 = vld [vmem:[%s1991] sm:$0xff]
          %v1994 = vlaneseq
          %v1995 = vshrl.u32 %v1994, 7
          %v1996 = vsub.s32 0, %v1995
          %v1997 = vrot.slane %v1907, %v1996
          %v1999 = vmul.f32 %v1997, %v1992
          %v2000 = vadd.f32 %v1999, %v1986
          %2001 = vst [vmem:[%s1991] sm:$0xff] %v2000
          %2002 = vst [vmem:[%s1902] sm:$0x1] %v1904
        $region300: #{tpu_custom_call.1} parent=79 // loop_footer
          %s1580 = sadd.s32 1, %s1576
        $region301: #{tpu_custom_call.1} parent=79 // loop_footer_branch
          %1575 = sbr.rel target = $region297
        $region302: #{tpu_custom_call.1} parent=79 // loop_exit
          _
        %v2003 = vld [vmem:[#allocation15] sm:$0xff]
        %v2004 = vld [vmem:[%s11] sm:$0x1]
        %v2006 = vlaneseq
        %v2007 = vshrl.u32 %v2006, 7
        %v2008 = vsub.s32 0, %v2007
        %v2009 = vrot.slane %v2004, %v2008
        %v2011 = vadd.f32 %v2003, %v2009
        %v2012 = vld [vmem:[%s13] sm:$0x1]
        %v2014 = vlaneseq
        %v2015 = vshrl.u32 %v2014, 7
        %v2016 = vsub.s32 0, %v2015
        %v2017 = vrot.slane %v2012, %v2016
        %v2019 = vmul.f32 %v2017, %v2011
        %v2020 = vadd.f32 %v1563, %v2019
        %2021 = vst.msk [vmem:[%s569] sm:$0xff] %vm1535, %v2020
        %p2022 = scmp.eq.s32.totalorder %s42, 1
        // Predicated region
        $region303: #{tpu_custom_call.1} parent=79 // pred_check
          %p2023 = pneg %p2022
        $region304: #{tpu_custom_call.1} parent=79 // pred_check_branch
          %2025 = sbr.rel (%p2023) target = $region306
        $region305: #{tpu_custom_call.1} parent=79 // pred_region
          %2026 = vst.msk [vmem:[#allocation16] sm:$0xff] %vm1535, 0.0
          %2027 = vst.msk [vmem:[#allocation16 + $0x8] sm:$0xff] %vm1535, 0.0
          %2028 = vst.msk [vmem:[#allocation16 + $0x10] sm:$0xff] %vm1535, 0.0
          %2029 = vst.msk [vmem:[#allocation16 + $0x18] sm:$0xff] %vm1535, 0.0
          %2030 = vst.msk [vmem:[#allocation16 + $0x20] sm:$0xff] %vm1535, 0.0
          %2031 = vst.msk [vmem:[#allocation16 + $0x28] sm:$0xff] %vm1535, 0.0
          %2032 = vst.msk [vmem:[#allocation16 + $0x30] sm:$0xff] %vm1535, 0.0
          %2033 = vst.msk [vmem:[#allocation16 + $0x38] sm:$0xff] %vm1535, 0.0
          %2034 = vst.msk [vmem:[#allocation16 + $0x40] sm:$0xff] %vm1535, 0.0
          %2035 = vst.msk [vmem:[#allocation16 + $0x48] sm:$0xff] %vm1535, 0.0
          %2036 = vst.msk [vmem:[#allocation16 + $0x50] sm:$0xff] %vm1535, 0.0
          %2037 = vst.msk [vmem:[#allocation16 + $0x58] sm:$0xff] %vm1535, 0.0
          %2038 = vst.msk [vmem:[#allocation16 + $0x60] sm:$0xff] %vm1535, 0.0
          %2039 = vst.msk [vmem:[#allocation16 + $0x68] sm:$0xff] %vm1535, 0.0
          %2040 = vst.msk [vmem:[#allocation16 + $0x70] sm:$0xff] %vm1535, 0.0
          %2041 = vst.msk [vmem:[#allocation16 + $0x78] sm:$0xff] %vm1535, 0.0
          loop: start=0, step=1, limit=4
          $region307: #{tpu_custom_call.1} parent=305 // loop_pre_header
            _
          $region308: #{tpu_custom_call.1} parent=305 // loop_header
            %s2043 = sphi 0, %s2047
            %p2044 = scmp.ge.s32.totalorder %s2043, 4
          $region309: #{tpu_custom_call.1} parent=305 // loop_header_branch
            %2046 = sbr.rel (%p2044) target = $region313
          $region310: #{tpu_custom_call.1} parent=305 // loop_body
            %s2048 = scalar_lea.vmem [#allocation13], %s2043
            %v2049 = vld [vmem:[%s2048] sm:$0x1]
            %v2050 = vrcp.pop %v2049
            %s2051 = smul.u32 %s2043, 8
            %s2052 = scalar_lea.vmem [#allocation14], %s2051
            %v2053 = vld [vmem:[%s2052] sm:$0xff]
            %v2055 = vlaneseq
            %v2056 = vshrl.u32 %v2055, 7
            %v2057 = vsub.s32 0, %v2056
            %v2058 = vrot.slane %v2050, %v2057
            %v2060 = vmul.f32 %v2053, %v2058
            %v2061 = vpack.c.bf16 %v2060, %v2060
            %v2062 = vld [vmem:[#allocation16] sm:$0xff]
            %v2063 = vld [vmem:[#allocation16 + $0x8] sm:$0xff]
            %v2064 = vld [vmem:[#allocation16 + $0x10] sm:$0xff]
            %v2065 = vld [vmem:[#allocation16 + $0x18] sm:$0xff]
            %v2066 = vld [vmem:[#allocation16 + $0x20] sm:$0xff]
            %v2067 = vld [vmem:[#allocation16 + $0x28] sm:$0xff]
            %v2068 = vld [vmem:[#allocation16 + $0x30] sm:$0xff]
            %v2069 = vld [vmem:[#allocation16 + $0x38] sm:$0xff]
            %v2070 = vld [vmem:[#allocation16 + $0x40] sm:$0xff]
            %v2071 = vld [vmem:[#allocation16 + $0x48] sm:$0xff]
            %v2072 = vld [vmem:[#allocation16 + $0x50] sm:$0xff]
            %v2073 = vld [vmem:[#allocation16 + $0x58] sm:$0xff]
            %v2074 = vld [vmem:[#allocation16 + $0x60] sm:$0xff]
            %v2075 = vld [vmem:[#allocation16 + $0x68] sm:$0xff]
            %v2076 = vld [vmem:[#allocation16 + $0x70] sm:$0xff]
            %v2077 = vld [vmem:[#allocation16 + $0x78] sm:$0xff]
            %s2078 = smul.addr %s2043, 4
            %s2079 = scalar_lea.vmem [#allocation7], %s2078
            %v2080 = vld [vmem:[%s2079] sm:$0xf]
            %2081 = vxpose.xlu0.c.b16.start [1/8] %v2061, 128
            %2082 = vxpose.xlu0.c.b16.cont [2/8] 0, 128
            %2083 = vxpose.xlu0.c.b16.cont [3/8] 0, 128
            %2084 = vxpose.xlu0.c.b16.cont [4/8] 0, 128
            %2085 = vxpose.xlu0.c.b16.cont [5/8] 0, 128
            %2086 = vxpose.xlu0.c.b16.cont [6/8] 0, 128
            %2087 = vxpose.xlu0.c.b16.cont [7/8] 0, 128
            %2088 = vxpose.xlu0.c.b16.end [8/8] 0, 128
            %v2089 = vpop.trf.xlu0
            %v2090 = vpop.trf.xlu0
            %v2091 = vpop.trf.xlu0
            %v2092 = vpop.trf.xlu0
            %v2093 = vpop.trf.xlu0
            %v2094 = vpop.trf.xlu0
            %v2095 = vpop.trf.xlu0
            %v2096 = vpop.trf.xlu0
            %vm2097 = vcmask 64512
            %v2099 = vsel %vm2097, %v2089, 0
            %v2102 = vsel %vm2097, %v2090, 0
            %v2105 = vsel %vm2097, %v2091, 0
            %v2108 = vsel %vm2097, %v2092, 0
            %v2111 = vsel %vm2097, %v2093, 0
            %v2114 = vsel %vm2097, %v2094, 0
            %v2117 = vsel %vm2097, %v2095, 0
            %v2120 = vsel %vm2097, %v2096, 0
            %vm2122 = vcmask 1043456
            %v2124 = vsel %vm2122, %v2080, 0
            %2126 = vmatprep.subr.bf16.mxu0 0
            %2127 = vmatpush1.bf16.msra.mxu0 %v2124
            %2128 = vmatprep.subr.bf16.mxu0 0
            %2129 = vmatpush1.bf16.msra.mxu0 0
            %2130 = vmatprep.subr.bf16.mxu0 0
            %2131 = vmatpush1.bf16.msra.mxu0 0
            %2132 = vmatprep.subr.bf16.mxu0 0
            %2133 = vmatpush1.bf16.msra.mxu0 0
            %2134 = vmatprep.subr.bf16.mxu0 0
            %2135 = vmatpush1.bf16.msra.mxu0 0
            %2136 = vmatprep.subr.bf16.mxu0 0
            %2137 = vmatpush1.bf16.msra.mxu0 0
            %2138 = vmatprep.subr.bf16.mxu0 0
            %2139 = vmatpush1.bf16.msra.mxu0 0
            %2140 = vmatprep.subr.bf16.mxu0 0
            %2141 = vmatpush1.bf16.msra.mxu0 0
            %2142 = vmatprep.subr.bf16.mxu0 0
            %2143 = vmatpush1.bf16.msra.mxu0 0
            %2144 = vmatprep.subr.bf16.mxu0 0
            %2145 = vmatpush1.bf16.msra.mxu0 0
            %2146 = vmatprep.subr.bf16.mxu0 0
            %2147 = vmatpush1.bf16.msra.mxu0 0
            %2148 = vmatprep.subr.bf16.mxu0 0
            %2149 = vmatpush1.bf16.msra.mxu0 0
            %2150 = vmatprep.subr.bf16.mxu0 0
            %2151 = vmatpush1.bf16.msra.mxu0 0
            %2152 = vmatprep.subr.bf16.mxu0 0
            %2153 = vmatpush1.bf16.msra.mxu0 0
            %2154 = vmatprep.subr.bf16.mxu0 0
            %2155 = vmatpush1.bf16.msra.mxu0 0
            %2156 = vmatprep.subr.bf16.mxu0 0
            %2157 = vmatpush1.bf16.msra.mxu0 0
            %2158 = vmatprep.mubr.bf16.mxu0 0
            %2159 = vmatmul.mubr.bf16.gmra.mrb[0].mxu0 %v2099
            %v2160 = vpop.f32.mrb[0].mxu0
            %v2161 = vadd.f32 0.0, %v2160
            %v2162 = vpop.f32.mrb[0].mxu0
            %v2163 = vpop.f32.mrb[0].mxu0
            %v2164 = vadd.f32 0.0, %v2163
            %v2165 = vpop.f32.mrb[0].mxu0
            %2166 = vmatprep.mubr.bf16.mxu0 0
            %2167 = vmatmul.mubr.bf16.gmra.mrb[0].mxu0 %v2102
            %v2168 = vpop.f32.mrb[0].mxu0
            %v2169 = vadd.f32 0.0, %v2168
            %v2170 = vpop.f32.mrb[0].mxu0
            %v2171 = vpop.f32.mrb[0].mxu0
            %v2172 = vadd.f32 0.0, %v2171
            %v2173 = vpop.f32.mrb[0].mxu0
            %2174 = vmatprep.mubr.bf16.mxu0 0
            %2175 = vmatmul.mubr.bf16.gmra.mrb[0].mxu0 %v2105
            %v2176 = vpop.f32.mrb[0].mxu0
            %v2177 = vadd.f32 0.0, %v2176
            %v2178 = vpop.f32.mrb[0].mxu0
            %v2179 = vpop.f32.mrb[0].mxu0
            %v2180 = vadd.f32 0.0, %v2179
            %v2181 = vpop.f32.mrb[0].mxu0
            %2182 = vmatprep.mubr.bf16.mxu0 0
            %2183 = vmatmul.mubr.bf16.gmra.mrb[0].mxu0 %v2108
            %v2184 = vpop.f32.mrb[0].mxu0
            %v2185 = vadd.f32 0.0, %v2184
            %v2186 = vpop.f32.mrb[0].mxu0
            %v2187 = vpop.f32.mrb[0].mxu0
            %v2188 = vadd.f32 0.0, %v2187
            %v2189 = vpop.f32.mrb[0].mxu0
            %2190 = vmatprep.mubr.bf16.mxu0 0
            %2191 = vmatmul.mubr.bf16.gmra.mrb[0].mxu0 %v2111
            %v2192 = vpop.f32.mrb[0].mxu0
            %v2193 = vadd.f32 0.0, %v2192
            %v2194 = vpop.f32.mrb[0].mxu0
            %v2195 = vpop.f32.mrb[0].mxu0
            %v2196 = vadd.f32 0.0, %v2195
            %v2197 = vpop.f32.mrb[0].mxu0
            %2198 = vmatprep.mubr.bf16.mxu0 0
            %2199 = vmatmul.mubr.bf16.gmra.mrb[0].mxu0 %v2114
            %v2200 = vpop.f32.mrb[0].mxu0
            %v2201 = vadd.f32 0.0, %v2200
            %v2202 = vpop.f32.mrb[0].mxu0
            %v2203 = vpop.f32.mrb[0].mxu0
            %v2204 = vadd.f32 0.0, %v2203
            %v2205 = vpop.f32.mrb[0].mxu0
            %2206 = vmatprep.mubr.bf16.mxu0 0
            %2207 = vmatmul.mubr.bf16.gmra.mrb[0].mxu0 %v2117
            %v2208 = vpop.f32.mrb[0].mxu0
            %v2209 = vadd.f32 0.0, %v2208
            %v2210 = vpop.f32.mrb[0].mxu0
            %v2211 = vpop.f32.mrb[0].mxu0
            %v2212 = vadd.f32 0.0, %v2211
            %v2213 = vpop.f32.mrb[0].mxu0
            %2214 = vmatprep.mubr.bf16.mxu0 0
            %2215 = vmatmul.mubr.bf16.gmra.mrb[0].mxu0 %v2120
            %v2216 = vpop.f32.mrb[0].mxu0
            %v2217 = vadd.f32 0.0, %v2216
            %v2218 = vpop.f32.mrb[0].mxu0
            %v2219 = vpop.f32.mrb[0].mxu0
            %v2220 = vadd.f32 0.0, %v2219
            %v2221 = vpop.f32.mrb[0].mxu0
            %2222 = vdwg.mxu0
            %v2223 = vadd.f32 %v2062, %v2161
            %v2224 = vadd.f32 %v2063, %v2164
            %v2225 = vadd.f32 %v2064, %v2169
            %v2226 = vadd.f32 %v2065, %v2172
            %v2227 = vadd.f32 %v2066, %v2177
            %v2228 = vadd.f32 %v2067, %v2180
            %v2229 = vadd.f32 %v2068, %v2185
            %v2230 = vadd.f32 %v2069, %v2188
            %v2231 = vadd.f32 %v2070, %v2193
            %v2232 = vadd.f32 %v2071, %v2196
            %v2233 = vadd.f32 %v2072, %v2201
            %v2234 = vadd.f32 %v2073, %v2204
            %v2235 = vadd.f32 %v2074, %v2209
            %v2236 = vadd.f32 %v2075, %v2212
            %v2237 = vadd.f32 %v2076, %v2217
            %v2238 = vadd.f32 %v2077, %v2220
            %2239 = vst.msk [vmem:[#allocation16] sm:$0xff] %vm1535, %v2223
            %2240 = vst.msk [vmem:[#allocation16 + $0x8] sm:$0xff] %vm1535, %v2224
            %2241 = vst.msk [vmem:[#allocation16 + $0x10] sm:$0xff] %vm1535, %v2225
            %2242 = vst.msk [vmem:[#allocation16 + $0x18] sm:$0xff] %vm1535, %v2226
            %2243 = vst.msk [vmem:[#allocation16 + $0x20] sm:$0xff] %vm1535, %v2227
            %2244 = vst.msk [vmem:[#allocation16 + $0x28] sm:$0xff] %vm1535, %v2228
            %2245 = vst.msk [vmem:[#allocation16 + $0x30] sm:$0xff] %vm1535, %v2229
            %2246 = vst.msk [vmem:[#allocation16 + $0x38] sm:$0xff] %vm1535, %v2230
            %2247 = vst.msk [vmem:[#allocation16 + $0x40] sm:$0xff] %vm1535, %v2231
            %2248 = vst.msk [vmem:[#allocation16 + $0x48] sm:$0xff] %vm1535, %v2232
            %2249 = vst.msk [vmem:[#allocation16 + $0x50] sm:$0xff] %vm1535, %v2233
            %2250 = vst.msk [vmem:[#allocation16 + $0x58] sm:$0xff] %vm1535, %v2234
            %2251 = vst.msk [vmem:[#allocation16 + $0x60] sm:$0xff] %vm1535, %v2235
            %2252 = vst.msk [vmem:[#allocation16 + $0x68] sm:$0xff] %vm1535, %v2236
            %2253 = vst.msk [vmem:[#allocation16 + $0x70] sm:$0xff] %vm1535, %v2237
            %2254 = vst.msk [vmem:[#allocation16 + $0x78] sm:$0xff] %vm1535, %v2238
          $region311: #{tpu_custom_call.1} parent=305 // loop_footer
            %s2047 = sadd.s32 1, %s2043
          $region312: #{tpu_custom_call.1} parent=305 // loop_footer_branch
            %2042 = sbr.rel target = $region308
          $region313: #{tpu_custom_call.1} parent=305 // loop_exit
            _
          %v2255 = vld [vmem:[#allocation16] sm:$0xff]
          %v2256 = vld [vmem:[#allocation16 + $0x8] sm:$0xff]
          %v2257 = vld [vmem:[#allocation16 + $0x10] sm:$0xff]
          %v2258 = vld [vmem:[#allocation16 + $0x18] sm:$0xff]
          %v2259 = vld [vmem:[#allocation16 + $0x20] sm:$0xff]
          %v2260 = vld [vmem:[#allocation16 + $0x28] sm:$0xff]
          %v2261 = vld [vmem:[#allocation16 + $0x30] sm:$0xff]
          %v2262 = vld [vmem:[#allocation16 + $0x38] sm:$0xff]
          %v2263 = vld [vmem:[#allocation16 + $0x40] sm:$0xff]
          %v2264 = vld [vmem:[#allocation16 + $0x48] sm:$0xff]
          %v2265 = vld [vmem:[#allocation16 + $0x50] sm:$0xff]
          %v2266 = vld [vmem:[#allocation16 + $0x58] sm:$0xff]
          %v2267 = vld [vmem:[#allocation16 + $0x60] sm:$0xff]
          %v2268 = vld [vmem:[#allocation16 + $0x68] sm:$0xff]
          %v2269 = vld [vmem:[#allocation16 + $0x70] sm:$0xff]
          %v2270 = vld [vmem:[#allocation16 + $0x78] sm:$0xff]
          %v2271 = vld [vmem:[%s12] sm:$0x1]
          %v2273 = vlaneseq
          %v2274 = vshrl.u32 %v2273, 7
          %v2275 = vsub.s32 0, %v2274
          %v2276 = vrot.slane %v2271, %v2275
          %v2278 = vadd.f32 %v2255, %v2276
          %v2279 = vadd.f32 %v2256, %v2276
          %v2280 = vadd.f32 %v2257, %v2276
          %v2281 = vadd.f32 %v2258, %v2276
          %v2282 = vadd.f32 %v2259, %v2276
          %v2283 = vadd.f32 %v2260, %v2276
          %v2284 = vadd.f32 %v2261, %v2276
          %v2285 = vadd.f32 %v2262, %v2276
          %v2286 = vadd.f32 %v2263, %v2276
          %v2287 = vadd.f32 %v2264, %v2276
          %v2288 = vadd.f32 %v2265, %v2276
          %v2289 = vadd.f32 %v2266, %v2276
          %v2290 = vadd.f32 %v2267, %v2276
          %v2291 = vadd.f32 %v2268, %v2276
          %v2292 = vadd.f32 %v2269, %v2276
          %v2293 = vadd.f32 %v2270, %v2276
          %v2294 = vld [vmem:[#allocation9] sm:$0xff]
          %v2295 = vld [vmem:[#allocation9 + $0x8] sm:$0xff]
          %v2296 = vld [vmem:[#allocation9 + $0x10] sm:$0xff]
          %v2297 = vld [vmem:[#allocation9 + $0x18] sm:$0xff]
          %v2298 = vld [vmem:[#allocation9 + $0x20] sm:$0xff]
          %v2299 = vld [vmem:[#allocation9 + $0x28] sm:$0xff]
          %v2300 = vld [vmem:[#allocation9 + $0x30] sm:$0xff]
          %v2301 = vld [vmem:[#allocation9 + $0x38] sm:$0xff]
          %v2302 = vld [vmem:[#allocation9 + $0x40] sm:$0xff]
          %v2303 = vld [vmem:[#allocation9 + $0x48] sm:$0xff]
          %v2304 = vld [vmem:[#allocation9 + $0x50] sm:$0xff]
          %v2305 = vld [vmem:[#allocation9 + $0x58] sm:$0xff]
          %v2306 = vld [vmem:[#allocation9 + $0x60] sm:$0xff]
          %v2307 = vld [vmem:[#allocation9 + $0x68] sm:$0xff]
          %v2308 = vld [vmem:[#allocation9 + $0x70] sm:$0xff]
          %v2309 = vld [vmem:[#allocation9 + $0x78] sm:$0xff]
          %v2310 = vld [vmem:[%s14] sm:$0x1]
          %v2312 = vlaneseq
          %v2313 = vshrl.u32 %v2312, 7
          %v2314 = vsub.s32 0, %v2313
          %v2315 = vrot.slane %v2310, %v2314
          %v2317 = vmul.f32 %v2315, %v2278
          %v2318 = vmul.f32 %v2315, %v2279
          %v2319 = vmul.f32 %v2315, %v2280
          %v2320 = vmul.f32 %v2315, %v2281
          %v2321 = vmul.f32 %v2315, %v2282
          %v2322 = vmul.f32 %v2315, %v2283
          %v2323 = vmul.f32 %v2315, %v2284
          %v2324 = vmul.f32 %v2315, %v2285
          %v2325 = vmul.f32 %v2315, %v2286
          %v2326 = vmul.f32 %v2315, %v2287
          %v2327 = vmul.f32 %v2315, %v2288
          %v2328 = vmul.f32 %v2315, %v2289
          %v2329 = vmul.f32 %v2315, %v2290
          %v2330 = vmul.f32 %v2315, %v2291
          %v2331 = vmul.f32 %v2315, %v2292
          %v2332 = vmul.f32 %v2315, %v2293
          %v2333 = vadd.f32 %v2294, %v2317
          %v2334 = vadd.f32 %v2295, %v2318
          %v2335 = vadd.f32 %v2296, %v2319
          %v2336 = vadd.f32 %v2297, %v2320
          %v2337 = vadd.f32 %v2298, %v2321
          %v2338 = vadd.f32 %v2299, %v2322
          %v2339 = vadd.f32 %v2300, %v2323
          %v2340 = vadd.f32 %v2301, %v2324
          %v2341 = vadd.f32 %v2302, %v2325
          %v2342 = vadd.f32 %v2303, %v2326
          %v2343 = vadd.f32 %v2304, %v2327
          %v2344 = vadd.f32 %v2305, %v2328
          %v2345 = vadd.f32 %v2306, %v2329
          %v2346 = vadd.f32 %v2307, %v2330
          %v2347 = vadd.f32 %v2308, %v2331
          %v2348 = vadd.f32 %v2309, %v2332
          %2349 = vst.msk [vmem:[%s597] sm:$0xff] %vm1535, %v2333
          %2350 = vst.msk [vmem:[%s597 + $0x8] sm:$0xff] %vm1535, %v2334
          %2351 = vst.msk [vmem:[%s597 + $0x10] sm:$0xff] %vm1535, %v2335
          %2352 = vst.msk [vmem:[%s597 + $0x18] sm:$0xff] %vm1535, %v2336
          %2353 = vst.msk [vmem:[%s597 + $0x20] sm:$0xff] %vm1535, %v2337
          %2354 = vst.msk [vmem:[%s597 + $0x28] sm:$0xff] %vm1535, %v2338
          %2355 = vst.msk [vmem:[%s597 + $0x30] sm:$0xff] %vm1535, %v2339
          %2356 = vst.msk [vmem:[%s597 + $0x38] sm:$0xff] %vm1535, %v2340
          %2357 = vst.msk [vmem:[%s597 + $0x40] sm:$0xff] %vm1535, %v2341
          %2358 = vst.msk [vmem:[%s597 + $0x48] sm:$0xff] %vm1535, %v2342
          %2359 = vst.msk [vmem:[%s597 + $0x50] sm:$0xff] %vm1535, %v2343
          %2360 = vst.msk [vmem:[%s597 + $0x58] sm:$0xff] %vm1535, %v2344
          %2361 = vst.msk [vmem:[%s597 + $0x60] sm:$0xff] %vm1535, %v2345
          %2362 = vst.msk [vmem:[%s597 + $0x68] sm:$0xff] %vm1535, %v2346
          %2363 = vst.msk [vmem:[%s597 + $0x70] sm:$0xff] %vm1535, %v2347
          %2364 = vst.msk [vmem:[%s597 + $0x78] sm:$0xff] %vm1535, %v2348
        $region306: #{tpu_custom_call.1} parent=79 // pred_fallthru
          _
        %s2365 = sand.u32 %s391, 1
        %s2366 = scalar_lea.sflag [#allocation18], %s2365
        %s2367 = sand.u32 %s391, 1
        %s2368 = smul.addr %s2367, 8
        %s2369 = scalar_lea.vmem [#allocation17], %s2368
        %p2370 = scmp.lt.s32.totalorder %s41, 1
        %s2371 = scalar_select %p2370, %s41, 1
        %s2372 = smul.addr %s2371, 16
        %s2373 = smul.addr %s2372, 8
        %s2374 = scalar_lea.vmem %s22, %s2373
        // Predicated region
        $region314: #{tpu_custom_call.1} parent=79 // pred_check
          %p2375 = pneg %p401
        $region315: #{tpu_custom_call.1} parent=79 // pred_check_branch
          %2377 = sbr.rel (%p2375) target = $region317
        $region316: #{tpu_custom_call.1} parent=79 // pred_region
          %s2379 = ssub.s32 128, 128
          %2380 = vsyncadd %s2366, %s2379
          %s2381 = smul.addr %s41, 2
          %s2382 = sadd.s32 %s42, %s2381
          %s2383 = smul.addr %s2382, 128
          %s2384 = scalar_lea.hbm %s21, %s2383
          %s2386 = sshll.u32 %s2369, 4
          %s2387 = int_to_ptr.vmem [resolvable:$true] %s2386
          %2389 = dma.vmem_to_hbm [thread:$0]  %s2387, 128, %s2384, %s2366
        $region317: #{tpu_custom_call.1} parent=79 // pred_fallthru
          _
        // Predicated region
        $region318: #{tpu_custom_call.1} parent=79 // pred_check
          %p2390 = pneg %p427
        $region319: #{tpu_custom_call.1} parent=79 // pred_check_branch
          %2392 = sbr.rel (%p2390) target = $region321
        $region320: #{tpu_custom_call.1} parent=79 // pred_region
          _
        $region321: #{tpu_custom_call.1} parent=79 // pred_fallthru
          _
      $region80: #{tpu_custom_call.1} parent=5 // pred_fallthru
        _
      %p2393 = scmp.le.s32.totalorder 2, %s32
      // Predicated region
      $region322: #{tpu_custom_call.1} parent=5 // pred_check
        %p2394 = pneg %p2393
      $region323: #{tpu_custom_call.1} parent=5 // pred_check_branch
        %2396 = sbr.rel (%p2394) target = $region325
      $region324: #{tpu_custom_call.1} parent=5 // pred_region
        %s2397 = ssub.s32 %s32, 2
        // Predicated region
        $region326: #{tpu_custom_call.1} parent=324 // pred_check
          %p2398 = pneg %p407
        $region327: #{tpu_custom_call.1} parent=324 // pred_check_branch
          %2400 = sbr.rel (%p2398) target = $region329
        $region328: #{tpu_custom_call.1} parent=324 // pred_region
          %s2401 = sand.u32 %s392, 1
          %s2402 = scalar_lea.sflag [#allocation18], %s2401
          %s2403 = sand.u32 %s392, 1
          %s2404 = smul.addr %s2403, 8
          %s2405 = scalar_lea.vmem [#allocation17], %s2404
          %2406 = dma.done %s2402, 128
        $region329: #{tpu_custom_call.1} parent=324 // pred_fallthru
          _
        // Predicated region
        $region330: #{tpu_custom_call.1} parent=324 // pred_check
          %p2407 = pneg %p433
        $region331: #{tpu_custom_call.1} parent=324 // pred_check_branch
          %2409 = sbr.rel (%p2407) target = $region333
        $region332: #{tpu_custom_call.1} parent=324 // pred_region
          %p2410 = scmp.lt.s32.totalorder %s43, 1
          %s2411 = scalar_select %p2410, %s43, 1
          %s2412 = smul.addr %s2411, 16
          %s2413 = smul.addr %s2412, 8
          %s2414 = scalar_lea.vmem %s22, %s2413
        $region333: #{tpu_custom_call.1} parent=324 // pred_fallthru
          _
      $region325: #{tpu_custom_call.1} parent=5 // pred_fallthru
        _
    $region6: #{tpu_custom_call.1} parent=1 // loop_footer
      %s36 = sadd.s32 1, %s32
    $region7: #{tpu_custom_call.1} parent=1 // loop_footer_branch
      %31 = sbr.rel target = $region3
    $region8: #{tpu_custom_call.1} parent=1 // loop_exit
      _
    %2415 = vsyncpa [#allocation18], 1
    %s2416 = scalar_lea.sflag [#allocation18], 1
    %2417 = vsyncpa %s2416, 1
  %2418 = vsyncmov [#allocation8]
  %s2419 = vpop.sfrf %2418
  %p2420 = scmp.eq.s32.totalorder %s2419, 0
  %p2421 = pneg %p2420
  %2423 = shalt.err (%p2421)
  %s2424 = scalar_lea.sflag [#allocation8], 1
  %2425 = vsyncmov %s2424
  %s2426 = vpop.sfrf %2425
  %p2427 = scmp.eq.s32.totalorder %s2426, 0
  %p2428 = pneg %p2427
  %2430 = shalt.err (%p2428)
  %s2431 = scalar_lea.sflag [#allocation8], 2
  %2432 = vsyncmov %s2431
  %s2433 = vpop.sfrf %2432
  %p2434 = scmp.eq.s32.totalorder %s2433, 0
  %p2435 = pneg %p2434
  %2437 = shalt.err (%p2435)
  %s2438 = scalar_lea.sflag [#allocation8], 3
  %2439 = vsyncmov %s2438
  %s2440 = vpop.sfrf %2439
  %p2441 = scmp.eq.s32.totalorder %s2440, 0
  %p2442 = pneg %p2441
  %2444 = shalt.err (%p2442)
  %s2445 = scalar_lea.sflag [#allocation8], 4
  %2446 = vsyncmov %s2445
  %s2447 = vpop.sfrf %2446
  %p2448 = scmp.eq.s32.totalorder %s2447, 0
  %p2449 = pneg %p2448
  %2451 = shalt.err (%p2449)
  %s2452 = scalar_lea.sflag [#allocation8], 5
  %2453 = vsyncmov %s2452
  %s2454 = vpop.sfrf %2453
  %p2455 = scmp.eq.s32.totalorder %s2454, 0
  %p2456 = pneg %p2455
  %2458 = shalt.err (%p2456)

</llo_original>
